<compile_context>
chip_gen: v5e
topology: v5e:2x2
jax: 0.10.0
libtpu: 0.0.40
codegen_flags: <defaults>
</compile_context>

<pallas_src>
from functools import partial

import jax
import jax.numpy as jnp
from jax.experimental import pallas as pl
from jax.experimental.pallas import tpu as pltpu


# ----------------------------------------------------------------------------
# Model constants (synthetic, small)
# ----------------------------------------------------------------------------
ALPHA = 4                          # fast/slow temporal ratio
C_IN = 3
C_IN_PAD = 8                       # stem contraction padded so the MXU sees K=8
C_SLOW = [16, 32, 64, 64, 64]      # stem, s2, s3, s4, s5 slow-path widths
C_FAST = [4, 8, 16, 16, 16]        # fast path (beta_inv = 4 here)
OUT_DIM = C_SLOW[-1] + C_FAST[-1]  # real SlowFast: 2048 + 256 = 2304; here 80
DTYPE = jnp.bfloat16               # activation / weight dtype on the MXU


# ----------------------------------------------------------------------------
# Fused whole-network kernel (one grid step == one batch element)
# ----------------------------------------------------------------------------
def _slowfast_kernel(*refs, stage_rows, n_slow_pool, n_fast_pool, c_slow_out):
    """SlowFast trunk + head for one batch element, fully VMEM-resident.

    Activation row layout: pixel-major / frame-minor, pixels in nested-prefix
    order.  Therefore:
      * spatial stride-2 downsample == contiguous row-prefix slice,
      * fast->slow lateral (temporal ::ALPHA) == the `aligned` fast tensor,
        row-for-row aligned with the slow tensor.
    The fast pathway is carried as two tensors (aligned frames / other frames)
    so no strided or gathered reads are ever needed in-kernel.
    """
    xs_ref, xfa_ref, xfu_ref, ws1, bs1, wf1, bf1 = refs[:7]
    o_ref = refs[-1]
    stage_refs = refs[7:-1]          # 7 weight refs per stage, stages 2..5

    f32 = jnp.float32

    def conv(x, w_ref, b_ref):
        # pointwise conv + bias + ReLU: bf16 x bf16 -> f32 MXU dot, f32 epilogue.
        y = jnp.dot(x.astype(DTYPE), w_ref[...], preferred_element_type=f32)
        return jnp.maximum(y + b_ref[...], 0.0)

    # ---- s1 (stem): MXU dots (K padded to 8) --------------------------------
    hs = conv(xs_ref[...], ws1, bs1)      # slow                (Ts*P0, 16) f32
    hfa = conv(xfa_ref[...], wf1, bf1)    # fast, aligned frames (Ts*P0,  4)
    hfu = conv(xfu_ref[...], wf1, bf1)    # fast, other frames  ((Tf-Ts)*P0, 4)

    # ---- s2..s5: lateral fuse + slow + fast; downsample == row prefix -------
    for si, (rs, rfa, rfu) in enumerate(stage_rows):
        wl, bl, wsa, wsb, bsl, wfc, bfc = stage_refs[7 * si: 7 * si + 7]
        xs_in, xfa_in, xfu_in = hs[:rs], hfa[:rfa], hfu[:rfu]
        # lateral = relu(aligned_fast @ W_fuse + b); rows already line up 1:1
        lat = conv(xfa_in, wl, bl)
        # slow: relu(xs @ W_a + lat @ W_b + b)  (== relu(concat(xs, lat) @ W))
        acc = jnp.dot(xs_in.astype(DTYPE), wsa[...], preferred_element_type=f32)
        acc = acc + jnp.dot(lat.astype(DTYPE), wsb[...],
                            preferred_element_type=f32)
        hs = jnp.maximum(acc + bsl[...], 0.0)
        # fast path (applied to both fast chunks)
        hfa = conv(xfa_in, wfc, bfc)
        hfu = conv(xfu_in, wfc, bfc)

    # ---- head: per-pathway global average pool, slow channels first ---------
    slow_mean = jnp.sum(hs, axis=0, keepdims=True) * (1.0 / n_slow_pool)
    fast_mean = (jnp.sum(hfa, axis=0, keepdims=True)
                 + jnp.sum(hfu, axis=0, keepdims=True)) * (1.0 / n_fast_pool)
    o_ref[:, :c_slow_out] = slow_mean.astype(o_ref.dtype)
    o_ref[:, c_slow_out:] = fast_mean.astype(o_ref.dtype)


# ----------------------------------------------------------------------------
# Input layout plumbing (one-time, tiny, XLA-side)
# ----------------------------------------------------------------------------
def _nested_pixel_order(h, w, levels):
    """Order pixels of an h x w grid so that for every k <= levels the first
    (h>>k)*(w>>k) entries are exactly the pixels surviving k further stride-2
    downsamples (prefix-nesting property)."""
    order, seen = [], set()
    for k in range(levels, -1, -1):
        s = 1 << k
        for i in range(0, h, s):
            for j in range(0, w, s):
                if (i, j) not in seen:
                    seen.add((i, j))
                    order.append((i, j))
    return order


def _prep_rows(x, frame_idx, order_ij):
    """(N, T, H, W, C) -> (N, P*T', C_IN_PAD): select frames `frame_idx`, take
    the stem-resolution pixels (h, w even) in nested-prefix order, lay rows out
    pixel-major / frame-minor, zero-pad channels to C_IN_PAD, cast to bf16."""
    n, _, _, _, c = x.shape
    ih = jnp.asarray([2 * i for i, _ in order_ij], dtype=jnp.int32)
    iw = jnp.asarray([2 * j for _, j in order_ij], dtype=jnp.int32)
    xt = x[:, jnp.asarray(frame_idx, dtype=jnp.int32)]      # (N, T', H, W, C)
    g = xt[:, :, ih, iw, :]                                  # (N, T', P, C)
    g = jnp.swapaxes(g, 1, 2).reshape(n, -1, c)              # (N, P*T', C)
    return jnp.pad(g, ((0, 0), (0, 0), (0, C_IN_PAD - c))).astype(DTYPE)


# ----------------------------------------------------------------------------
# Parameters
# ----------------------------------------------------------------------------
def _init_linear(key, cin, cout):
    kw, kb = jax.random.split(key)
    w = (jax.random.normal(kw, (cin, cout), jnp.float32)
         * (1.0 / jnp.sqrt(cin))).astype(DTYPE)
    b = (jax.random.normal(kb, (cout,), jnp.float32) * 0.01).reshape(1, cout)
    return w, b


def init_params(key):
    params = {}
    slow_in, fast_in = C_IN, C_IN
    for stage in range(1, 6):
        key, ks, kf, kz = jax.random.split(key, 4)
        if stage == 1:
            ws, bs = _init_linear(ks, C_IN, C_SLOW[0])
            wf, bf = _init_linear(kf, C_IN, C_FAST[0])
            pad = ((0, C_IN_PAD - C_IN), (0, 0))
            params["s1_slow"] = (jnp.pad(ws, pad), bs)   # zero rows -> identical math
            params["s1_fast"] = (jnp.pad(wf, pad), bf)
        else:
            # slow conv consumes [prev_slow ; lateral] channels; store split so
            # the kernel accumulates two dots instead of a lane-dim concat.
            c_lat = 2 * C_FAST[stage - 2]
            w_full, b_s = _init_linear(ks, slow_in + c_lat, C_SLOW[stage - 1])
            params[f"s{stage}_slow_a"] = (w_full[:slow_in], b_s)
            params[f"s{stage}_slow_b"] = w_full[slow_in:]
            params[f"s{stage}_fast"] = _init_linear(kf, fast_in, C_FAST[stage - 1])
            params[f"fuse{stage - 1}"] = _init_linear(kz, C_FAST[stage - 2], c_lat)
        slow_in = C_SLOW[stage - 1]
        fast_in = C_FAST[stage - 1]
    return params


# ----------------------------------------------------------------------------
# Forward pass: one pallas_call for the whole network
# ----------------------------------------------------------------------------
def slowfast_forward(params, x_slow, x_fast):
    n, ts, h, w, _ = x_slow.shape
    tf = x_fast.shape[1]
    # lateral/slow row alignment relies on the pack_pathway temporal phase:
    assert tf == ts * ALPHA, "fast pathway must hold ALPHA x the slow frames"
    assert h % 16 == 0 and w % 16 == 0, "need four stride-2 spatial downsamples"

    order = _nested_pixel_order(h // 2, w // 2, levels=3)   # downs before s3,s4,s5
    p0 = (h // 2) * (w // 2)

    # One-time input layout transform (layout plumbing, a few XLA ops on a
    # tiny input) -- replaces the previous per-stage _down() / ::ALPHA slices.
    aligned = [t for t in range(tf) if t % ALPHA == 0]
    others = [t for t in range(tf) if t % ALPHA != 0]
    xs = _prep_rows(x_slow, list(range(ts)), order)    # (N, Ts*P0, 8)
    xfa = _prep_rows(x_fast, aligned, order)           # (N, Ts*P0, 8)
    xfu = _prep_rows(x_fast, others, order)            # (N, (Tf-Ts)*P0, 8)

    # rows per pathway at stages 2..5 (s2 at stem resolution, then /4 pixels).
    stage_rows, p = [], p0
    for si in range(4):
        if si > 0:
            p //= 4
        stage_rows.append((ts * p, ts * p, (tf - ts) * p))
    stage_rows = tuple(stage_rows)

    # flat weight list in kernel unpack order
    ws1, bs1 = params["s1_slow"]
    wf1, bf1 = params["s1_fast"]
    w_list = [ws1, bs1, wf1, bf1]
    for st in range(2, 6):
        wl, bl = params[f"fuse{st - 1}"]
        wsa, bsl = params[f"s{st}_slow_a"]
        wsb = params[f"s{st}_slow_b"]
        wfc, bfc = params[f"s{st}_fast"]
        w_list += [wl, bl, wsa, wsb, bsl, wfc, bfc]

    act_specs = [pl.BlockSpec((None,) + a.shape[1:], lambda b: (b, 0, 0))
                 for a in (xs, xfa, xfu)]
    w_specs = [pl.BlockSpec(a.shape, lambda b: (0, 0)) for a in w_list]

    out = pl.pallas_call(
        partial(_slowfast_kernel, stage_rows=stage_rows,
                n_slow_pool=ts * p, n_fast_pool=tf * p,
                c_slow_out=C_SLOW[-1]),
        out_shape=jax.ShapeDtypeStruct((n, 1, OUT_DIM), jnp.float32),
        grid=(n,),
        in_specs=act_specs + w_specs,
        out_specs=pl.BlockSpec((None, 1, OUT_DIM), lambda b: (b, 0, 0)),
        compiler_params=pltpu.CompilerParams(
            dimension_semantics=("parallel",)),   # batch per TensorCore on v7x
    )(xs, xfa, xfu, *w_list)
    return out.reshape(n, OUT_DIM)


# ----------------------------------------------------------------------------
if __name__ == "__main__":
    key = jax.random.PRNGKey(0)
    k_data, k_par = jax.random.split(key)

    N, T_FAST, H, W = 2, 8, 16, 16
    # Fast pathway gets all T_FAST frames; slow pathway temporally subsamples
    # by ALPHA (pack_pathway_output semantics).
    frames = jax.random.normal(k_data, (N, T_FAST, H, W, C_IN), jnp.float32)
    x_fast = frames
    x_slow = frames[:, ::ALPHA]

    params = init_params(k_par)

    fwd = jax.jit(slowfast_forward)
    out = jax.block_until_ready(fwd(params, x_slow, x_fast))

    assert out.shape == (N, OUT_DIM), out.shape
    assert bool(jnp.all(jnp.isfinite(out)))
    print("KERNEL_OK")
</pallas_src>

<mosaic_0001>
module attributes {stable_mosaic.version = 11 : i64} {
  func.func @_slowfast_kernel(%arg0: i32, %arg1: memref<1x128x8xbf16, #tpu.memory_space<vmem>>, %arg2: memref<1x128x8xbf16, #tpu.memory_space<vmem>>, %arg3: memref<1x384x8xbf16, #tpu.memory_space<vmem>>, %arg4: memref<8x16xbf16, #tpu.memory_space<vmem>>, %arg5: memref<1x16xf32, #tpu.memory_space<vmem>>, %arg6: memref<8x4xbf16, #tpu.memory_space<vmem>>, %arg7: memref<1x4xf32, #tpu.memory_space<vmem>>, %arg8: memref<4x8xbf16, #tpu.memory_space<vmem>>, %arg9: memref<1x8xf32, #tpu.memory_space<vmem>>, %arg10: memref<16x32xbf16, #tpu.memory_space<vmem>>, %arg11: memref<8x32xbf16, #tpu.memory_space<vmem>>, %arg12: memref<1x32xf32, #tpu.memory_space<vmem>>, %arg13: memref<4x8xbf16, #tpu.memory_space<vmem>>, %arg14: memref<1x8xf32, #tpu.memory_space<vmem>>, %arg15: memref<8x16xbf16, #tpu.memory_space<vmem>>, %arg16: memref<1x16xf32, #tpu.memory_space<vmem>>, %arg17: memref<32x64xbf16, #tpu.memory_space<vmem>>, %arg18: memref<16x64xbf16, #tpu.memory_space<vmem>>, %arg19: memref<1x64xf32, #tpu.memory_space<vmem>>, %arg20: memref<8x16xbf16, #tpu.memory_space<vmem>>, %arg21: memref<1x16xf32, #tpu.memory_space<vmem>>, %arg22: memref<16x32xbf16, #tpu.memory_space<vmem>>, %arg23: memref<1x32xf32, #tpu.memory_space<vmem>>, %arg24: memref<64x64xbf16, #tpu.memory_space<vmem>>, %arg25: memref<32x64xbf16, #tpu.memory_space<vmem>>, %arg26: memref<1x64xf32, #tpu.memory_space<vmem>>, %arg27: memref<16x16xbf16, #tpu.memory_space<vmem>>, %arg28: memref<1x16xf32, #tpu.memory_space<vmem>>, %arg29: memref<16x32xbf16, #tpu.memory_space<vmem>>, %arg30: memref<1x32xf32, #tpu.memory_space<vmem>>, %arg31: memref<64x64xbf16, #tpu.memory_space<vmem>>, %arg32: memref<32x64xbf16, #tpu.memory_space<vmem>>, %arg33: memref<1x64xf32, #tpu.memory_space<vmem>>, %arg34: memref<16x16xbf16, #tpu.memory_space<vmem>>, %arg35: memref<1x16xf32, #tpu.memory_space<vmem>>, %arg36: memref<1x1x80xf32, #tpu.memory_space<vmem>>) attributes {dimension_semantics = [#tpu.dimension_semantics<parallel>], iteration_bounds = array<i64: 2>, scalar_prefetch = 0 : i64, scratch_operands = 0 : i64, tpu.core_type = #tpu.core_type<tc>, window_params = [{transform_indices = @transform_0, window_bounds = array<i64: 1, 128, 8>}, {transform_indices = @transform_1, window_bounds = array<i64: 1, 128, 8>}, {transform_indices = @transform_2, window_bounds = array<i64: 1, 384, 8>}, {pipeline_mode = #tpu.pipeline_mode<synchronous>, transform_indices = @transform_3, window_bounds = array<i64: 8, 16>}, {pipeline_mode = #tpu.pipeline_mode<synchronous>, transform_indices = @transform_4, window_bounds = array<i64: 1, 16>}, {pipeline_mode = #tpu.pipeline_mode<synchronous>, transform_indices = @transform_5, window_bounds = array<i64: 8, 4>}, {pipeline_mode = #tpu.pipeline_mode<synchronous>, transform_indices = @transform_6, window_bounds = array<i64: 1, 4>}, {pipeline_mode = #tpu.pipeline_mode<synchronous>, transform_indices = @transform_7, window_bounds = array<i64: 4, 8>}, {pipeline_mode = #tpu.pipeline_mode<synchronous>, transform_indices = @transform_8, window_bounds = array<i64: 1, 8>}, {pipeline_mode = #tpu.pipeline_mode<synchronous>, transform_indices = @transform_9, window_bounds = array<i64: 16, 32>}, {pipeline_mode = #tpu.pipeline_mode<synchronous>, transform_indices = @transform_10, window_bounds = array<i64: 8, 32>}, {pipeline_mode = #tpu.pipeline_mode<synchronous>, transform_indices = @transform_11, window_bounds = array<i64: 1, 32>}, {pipeline_mode = #tpu.pipeline_mode<synchronous>, transform_indices = @transform_12, window_bounds = array<i64: 4, 8>}, {pipeline_mode = #tpu.pipeline_mode<synchronous>, transform_indices = @transform_13, window_bounds = array<i64: 1, 8>}, {pipeline_mode = #tpu.pipeline_mode<synchronous>, transform_indices = @transform_14, window_bounds = array<i64: 8, 16>}, {pipeline_mode = #tpu.pipeline_mode<synchronous>, transform_indices = @transform_15, window_bounds = array<i64: 1, 16>}, {pipeline_mode = #tpu.pipeline_mode<synchronous>, transform_indices = @transform_16, window_bounds = array<i64: 32, 64>}, {pipeline_mode = #tpu.pipeline_mode<synchronous>, transform_indices = @transform_17, window_bounds = array<i64: 16, 64>}, {pipeline_mode = #tpu.pipeline_mode<synchronous>, transform_indices = @transform_18, window_bounds = array<i64: 1, 64>}, {pipeline_mode = #tpu.pipeline_mode<synchronous>, transform_indices = @transform_19, window_bounds = array<i64: 8, 16>}, {pipeline_mode = #tpu.pipeline_mode<synchronous>, transform_indices = @transform_20, window_bounds = array<i64: 1, 16>}, {pipeline_mode = #tpu.pipeline_mode<synchronous>, transform_indices = @transform_21, window_bounds = array<i64: 16, 32>}, {pipeline_mode = #tpu.pipeline_mode<synchronous>, transform_indices = @transform_22, window_bounds = array<i64: 1, 32>}, {pipeline_mode = #tpu.pipeline_mode<synchronous>, transform_indices = @transform_23, window_bounds = array<i64: 64, 64>}, {pipeline_mode = #tpu.pipeline_mode<synchronous>, transform_indices = @transform_24, window_bounds = array<i64: 32, 64>}, {pipeline_mode = #tpu.pipeline_mode<synchronous>, transform_indices = @transform_25, window_bounds = array<i64: 1, 64>}, {pipeline_mode = #tpu.pipeline_mode<synchronous>, transform_indices = @transform_26, window_bounds = array<i64: 16, 16>}, {pipeline_mode = #tpu.pipeline_mode<synchronous>, transform_indices = @transform_27, window_bounds = array<i64: 1, 16>}, {pipeline_mode = #tpu.pipeline_mode<synchronous>, transform_indices = @transform_28, window_bounds = array<i64: 16, 32>}, {pipeline_mode = #tpu.pipeline_mode<synchronous>, transform_indices = @transform_29, window_bounds = array<i64: 1, 32>}, {pipeline_mode = #tpu.pipeline_mode<synchronous>, transform_indices = @transform_30, window_bounds = array<i64: 64, 64>}, {pipeline_mode = #tpu.pipeline_mode<synchronous>, transform_indices = @transform_31, window_bounds = array<i64: 32, 64>}, {pipeline_mode = #tpu.pipeline_mode<synchronous>, transform_indices = @transform_32, window_bounds = array<i64: 1, 64>}, {pipeline_mode = #tpu.pipeline_mode<synchronous>, transform_indices = @transform_33, window_bounds = array<i64: 16, 16>}, {pipeline_mode = #tpu.pipeline_mode<synchronous>, transform_indices = @transform_34, window_bounds = array<i64: 1, 16>}, {transform_indices = @transform_35, window_bounds = array<i64: 1, 1, 80>}]} {
    %c0 = arith.constant 0 : index
    %c0_0 = arith.constant 0 : index
    %c0_1 = arith.constant 0 : index
    %0 = vector.load %arg1[%c0, %c0_0, %c0_1] : memref<1x128x8xbf16, #tpu.memory_space<vmem>>, vector<1x128x8xbf16>
    %1 = vector.shape_cast %0 : vector<1x128x8xbf16> to vector<128x8xbf16>
    %c0_2 = arith.constant 0 : index
    %c0_3 = arith.constant 0 : index
    %2 = vector.load %arg4[%c0_2, %c0_3] : memref<8x16xbf16, #tpu.memory_space<vmem>>, vector<8x16xbf16>
    %cst = arith.constant dense<0.000000e+00> : vector<128x16xf32>
    %3 = tpu.matmul %1, %2, %cst {dimension_numbers = #tpu.dot_dimension_numbers<[1], [0], [0], [1], [0, 0, 1, 1], [], []>} : vector<128x8xbf16>, vector<8x16xbf16>, vector<128x16xf32> -> vector<128x16xf32>
    %c0_4 = arith.constant 0 : index
    %c0_5 = arith.constant 0 : index
    %4 = vector.load %arg5[%c0_4, %c0_5] : memref<1x16xf32, #tpu.memory_space<vmem>>, vector<1x16xf32>
    %5 = vector.broadcast %4 : vector<1x16xf32> to vector<128x16xf32>
    %6 = arith.addf %3, %5 : vector<128x16xf32>
    %cst_6 = arith.constant 0.000000e+00 : f32
    %7 = vector.broadcast %cst_6 : f32 to vector<128x16xf32>
    %8 = arith.maximumf %6, %7 : vector<128x16xf32>
    %c0_7 = arith.constant 0 : index
    %c0_8 = arith.constant 0 : index
    %c0_9 = arith.constant 0 : index
    %9 = vector.load %arg2[%c0_7, %c0_8, %c0_9] : memref<1x128x8xbf16, #tpu.memory_space<vmem>>, vector<1x128x8xbf16>
    %10 = vector.shape_cast %9 : vector<1x128x8xbf16> to vector<128x8xbf16>
    %c0_10 = arith.constant 0 : index
    %c0_11 = arith.constant 0 : index
    %11 = vector.load %arg6[%c0_10, %c0_11] : memref<8x4xbf16, #tpu.memory_space<vmem>>, vector<8x4xbf16>
    %cst_12 = arith.constant dense<0.000000e+00> : vector<128x4xf32>
    %12 = tpu.matmul %10, %11, %cst_12 {dimension_numbers = #tpu.dot_dimension_numbers<[1], [0], [0], [1], [0, 0, 1, 1], [], []>} : vector<128x8xbf16>, vector<8x4xbf16>, vector<128x4xf32> -> vector<128x4xf32>
    %c0_13 = arith.constant 0 : index
    %c0_14 = arith.constant 0 : index
    %13 = vector.load %arg7[%c0_13, %c0_14] : memref<1x4xf32, #tpu.memory_space<vmem>>, vector<1x4xf32>
    %14 = vector.broadcast %13 : vector<1x4xf32> to vector<128x4xf32>
    %15 = arith.addf %12, %14 : vector<128x4xf32>
    %cst_15 = arith.constant 0.000000e+00 : f32
    %16 = vector.broadcast %cst_15 : f32 to vector<128x4xf32>
    %17 = arith.maximumf %15, %16 : vector<128x4xf32>
    %c0_16 = arith.constant 0 : index
    %c0_17 = arith.constant 0 : index
    %c0_18 = arith.constant 0 : index
    %18 = vector.load %arg3[%c0_16, %c0_17, %c0_18] : memref<1x384x8xbf16, #tpu.memory_space<vmem>>, vector<1x384x8xbf16>
    %19 = vector.shape_cast %18 : vector<1x384x8xbf16> to vector<384x8xbf16>
    %c0_19 = arith.constant 0 : index
    %c0_20 = arith.constant 0 : index
    %20 = vector.load %arg6[%c0_19, %c0_20] : memref<8x4xbf16, #tpu.memory_space<vmem>>, vector<8x4xbf16>
    %cst_21 = arith.constant dense<0.000000e+00> : vector<384x4xf32>
    %21 = tpu.matmul %19, %20, %cst_21 {dimension_numbers = #tpu.dot_dimension_numbers<[1], [0], [0], [1], [0, 0, 1, 1], [], []>} : vector<384x8xbf16>, vector<8x4xbf16>, vector<384x4xf32> -> vector<384x4xf32>
    %c0_22 = arith.constant 0 : index
    %c0_23 = arith.constant 0 : index
    %22 = vector.load %arg7[%c0_22, %c0_23] : memref<1x4xf32, #tpu.memory_space<vmem>>, vector<1x4xf32>
    %23 = vector.broadcast %22 : vector<1x4xf32> to vector<384x4xf32>
    %24 = arith.addf %21, %23 : vector<384x4xf32>
    %cst_24 = arith.constant 0.000000e+00 : f32
    %25 = vector.broadcast %cst_24 : f32 to vector<384x4xf32>
    %26 = arith.maximumf %24, %25 : vector<384x4xf32>
    %27 = arith.truncf %17 : vector<128x4xf32> to vector<128x4xbf16>
    %c0_25 = arith.constant 0 : index
    %c0_26 = arith.constant 0 : index
    %28 = vector.load %arg8[%c0_25, %c0_26] : memref<4x8xbf16, #tpu.memory_space<vmem>>, vector<4x8xbf16>
    %cst_27 = arith.constant dense<0.000000e+00> : vector<128x8xf32>
    %29 = tpu.matmul %27, %28, %cst_27 {dimension_numbers = #tpu.dot_dimension_numbers<[1], [0], [0], [1], [0, 0, 1, 1], [], []>} : vector<128x4xbf16>, vector<4x8xbf16>, vector<128x8xf32> -> vector<128x8xf32>
    %c0_28 = arith.constant 0 : index
    %c0_29 = arith.constant 0 : index
    %30 = vector.load %arg9[%c0_28, %c0_29] : memref<1x8xf32, #tpu.memory_space<vmem>>, vector<1x8xf32>
    %31 = vector.broadcast %30 : vector<1x8xf32> to vector<128x8xf32>
    %32 = arith.addf %29, %31 : vector<128x8xf32>
    %cst_30 = arith.constant 0.000000e+00 : f32
    %33 = vector.broadcast %cst_30 : f32 to vector<128x8xf32>
    %34 = arith.maximumf %32, %33 : vector<128x8xf32>
    %35 = arith.truncf %8 : vector<128x16xf32> to vector<128x16xbf16>
    %c0_31 = arith.constant 0 : index
    %c0_32 = arith.constant 0 : index
    %36 = vector.load %arg10[%c0_31, %c0_32] : memref<16x32xbf16, #tpu.memory_space<vmem>>, vector<16x32xbf16>
    %cst_33 = arith.constant dense<0.000000e+00> : vector<128x32xf32>
    %37 = tpu.matmul %35, %36, %cst_33 {dimension_numbers = #tpu.dot_dimension_numbers<[1], [0], [0], [1], [0, 0, 1, 1], [], []>} : vector<128x16xbf16>, vector<16x32xbf16>, vector<128x32xf32> -> vector<128x32xf32>
    %38 = arith.truncf %34 : vector<128x8xf32> to vector<128x8xbf16>
    %c0_34 = arith.constant 0 : index
    %c0_35 = arith.constant 0 : index
    %39 = vector.load %arg11[%c0_34, %c0_35] : memref<8x32xbf16, #tpu.memory_space<vmem>>, vector<8x32xbf16>
    %cst_36 = arith.constant dense<0.000000e+00> : vector<128x32xf32>
    %40 = tpu.matmul %38, %39, %cst_36 {dimension_numbers = #tpu.dot_dimension_numbers<[1], [0], [0], [1], [0, 0, 1, 1], [], []>} : vector<128x8xbf16>, vector<8x32xbf16>, vector<128x32xf32> -> vector<128x32xf32>
    %41 = arith.addf %37, %40 : vector<128x32xf32>
    %c0_37 = arith.constant 0 : index
    %c0_38 = arith.constant 0 : index
    %42 = vector.load %arg12[%c0_37, %c0_38] : memref<1x32xf32, #tpu.memory_space<vmem>>, vector<1x32xf32>
    %43 = vector.broadcast %42 : vector<1x32xf32> to vector<128x32xf32>
    %44 = arith.addf %41, %43 : vector<128x32xf32>
    %cst_39 = arith.constant 0.000000e+00 : f32
    %45 = vector.broadcast %cst_39 : f32 to vector<128x32xf32>
    %46 = arith.maximumf %44, %45 : vector<128x32xf32>
    %47 = arith.truncf %17 : vector<128x4xf32> to vector<128x4xbf16>
    %c0_40 = arith.constant 0 : index
    %c0_41 = arith.constant 0 : index
    %48 = vector.load %arg13[%c0_40, %c0_41] : memref<4x8xbf16, #tpu.memory_space<vmem>>, vector<4x8xbf16>
    %cst_42 = arith.constant dense<0.000000e+00> : vector<128x8xf32>
    %49 = tpu.matmul %47, %48, %cst_42 {dimension_numbers = #tpu.dot_dimension_numbers<[1], [0], [0], [1], [0, 0, 1, 1], [], []>} : vector<128x4xbf16>, vector<4x8xbf16>, vector<128x8xf32> -> vector<128x8xf32>
    %c0_43 = arith.constant 0 : index
    %c0_44 = arith.constant 0 : index
    %50 = vector.load %arg14[%c0_43, %c0_44] : memref<1x8xf32, #tpu.memory_space<vmem>>, vector<1x8xf32>
    %51 = vector.broadcast %50 : vector<1x8xf32> to vector<128x8xf32>
    %52 = arith.addf %49, %51 : vector<128x8xf32>
    %cst_45 = arith.constant 0.000000e+00 : f32
    %53 = vector.broadcast %cst_45 : f32 to vector<128x8xf32>
    %54 = arith.maximumf %52, %53 : vector<128x8xf32>
    %55 = arith.truncf %26 : vector<384x4xf32> to vector<384x4xbf16>
    %c0_46 = arith.constant 0 : index
    %c0_47 = arith.constant 0 : index
    %56 = vector.load %arg13[%c0_46, %c0_47] : memref<4x8xbf16, #tpu.memory_space<vmem>>, vector<4x8xbf16>
    %cst_48 = arith.constant dense<0.000000e+00> : vector<384x8xf32>
    %57 = tpu.matmul %55, %56, %cst_48 {dimension_numbers = #tpu.dot_dimension_numbers<[1], [0], [0], [1], [0, 0, 1, 1], [], []>} : vector<384x4xbf16>, vector<4x8xbf16>, vector<384x8xf32> -> vector<384x8xf32>
    %c0_49 = arith.constant 0 : index
    %c0_50 = arith.constant 0 : index
    %58 = vector.load %arg14[%c0_49, %c0_50] : memref<1x8xf32, #tpu.memory_space<vmem>>, vector<1x8xf32>
    %59 = vector.broadcast %58 : vector<1x8xf32> to vector<384x8xf32>
    %60 = arith.addf %57, %59 : vector<384x8xf32>
    %cst_51 = arith.constant 0.000000e+00 : f32
    %61 = vector.broadcast %cst_51 : f32 to vector<384x8xf32>
    %62 = arith.maximumf %60, %61 : vector<384x8xf32>
    %63 = vector.extract_strided_slice %46 {offsets = [0, 0], sizes = [32, 32], strides = [1, 1]} : vector<128x32xf32> to vector<32x32xf32>
    %64 = vector.extract_strided_slice %54 {offsets = [0, 0], sizes = [32, 8], strides = [1, 1]} : vector<128x8xf32> to vector<32x8xf32>
    %65 = vector.extract_strided_slice %62 {offsets = [0, 0], sizes = [96, 8], strides = [1, 1]} : vector<384x8xf32> to vector<96x8xf32>
    %66 = arith.truncf %64 : vector<32x8xf32> to vector<32x8xbf16>
    %c0_52 = arith.constant 0 : index
    %c0_53 = arith.constant 0 : index
    %67 = vector.load %arg15[%c0_52, %c0_53] : memref<8x16xbf16, #tpu.memory_space<vmem>>, vector<8x16xbf16>
    %cst_54 = arith.constant dense<0.000000e+00> : vector<32x16xf32>
    %68 = tpu.matmul %66, %67, %cst_54 {dimension_numbers = #tpu.dot_dimension_numbers<[1], [0], [0], [1], [0, 0, 1, 1], [], []>} : vector<32x8xbf16>, vector<8x16xbf16>, vector<32x16xf32> -> vector<32x16xf32>
    %c0_55 = arith.constant 0 : index
    %c0_56 = arith.constant 0 : index
    %69 = vector.load %arg16[%c0_55, %c0_56] : memref<1x16xf32, #tpu.memory_space<vmem>>, vector<1x16xf32>
    %70 = vector.broadcast %69 : vector<1x16xf32> to vector<32x16xf32>
    %71 = arith.addf %68, %70 : vector<32x16xf32>
    %cst_57 = arith.constant 0.000000e+00 : f32
    %72 = vector.broadcast %cst_57 : f32 to vector<32x16xf32>
    %73 = arith.maximumf %71, %72 : vector<32x16xf32>
    %74 = arith.truncf %63 : vector<32x32xf32> to vector<32x32xbf16>
    %c0_58 = arith.constant 0 : index
    %c0_59 = arith.constant 0 : index
    %75 = vector.load %arg17[%c0_58, %c0_59] : memref<32x64xbf16, #tpu.memory_space<vmem>>, vector<32x64xbf16>
    %cst_60 = arith.constant dense<0.000000e+00> : vector<32x64xf32>
    %76 = tpu.matmul %74, %75, %cst_60 {dimension_numbers = #tpu.dot_dimension_numbers<[1], [0], [0], [1], [0, 0, 1, 1], [], []>} : vector<32x32xbf16>, vector<32x64xbf16>, vector<32x64xf32> -> vector<32x64xf32>
    %77 = arith.truncf %73 : vector<32x16xf32> to vector<32x16xbf16>
    %c0_61 = arith.constant 0 : index
    %c0_62 = arith.constant 0 : index
    %78 = vector.load %arg18[%c0_61, %c0_62] : memref<16x64xbf16, #tpu.memory_space<vmem>>, vector<16x64xbf16>
    %cst_63 = arith.constant dense<0.000000e+00> : vector<32x64xf32>
    %79 = tpu.matmul %77, %78, %cst_63 {dimension_numbers = #tpu.dot_dimension_numbers<[1], [0], [0], [1], [0, 0, 1, 1], [], []>} : vector<32x16xbf16>, vector<16x64xbf16>, vector<32x64xf32> -> vector<32x64xf32>
    %80 = arith.addf %76, %79 : vector<32x64xf32>
    %c0_64 = arith.constant 0 : index
    %c0_65 = arith.constant 0 : index
    %81 = vector.load %arg19[%c0_64, %c0_65] : memref<1x64xf32, #tpu.memory_space<vmem>>, vector<1x64xf32>
    %82 = vector.broadcast %81 : vector<1x64xf32> to vector<32x64xf32>
    %83 = arith.addf %80, %82 : vector<32x64xf32>
    %cst_66 = arith.constant 0.000000e+00 : f32
    %84 = vector.broadcast %cst_66 : f32 to vector<32x64xf32>
    %85 = arith.maximumf %83, %84 : vector<32x64xf32>
    %86 = arith.truncf %64 : vector<32x8xf32> to vector<32x8xbf16>
    %c0_67 = arith.constant 0 : index
    %c0_68 = arith.constant 0 : index
    %87 = vector.load %arg20[%c0_67, %c0_68] : memref<8x16xbf16, #tpu.memory_space<vmem>>, vector<8x16xbf16>
    %cst_69 = arith.constant dense<0.000000e+00> : vector<32x16xf32>
    %88 = tpu.matmul %86, %87, %cst_69 {dimension_numbers = #tpu.dot_dimension_numbers<[1], [0], [0], [1], [0, 0, 1, 1], [], []>} : vector<32x8xbf16>, vector<8x16xbf16>, vector<32x16xf32> -> vector<32x16xf32>
    %c0_70 = arith.constant 0 : index
    %c0_71 = arith.constant 0 : index
    %89 = vector.load %arg21[%c0_70, %c0_71] : memref<1x16xf32, #tpu.memory_space<vmem>>, vector<1x16xf32>
    %90 = vector.broadcast %89 : vector<1x16xf32> to vector<32x16xf32>
    %91 = arith.addf %88, %90 : vector<32x16xf32>
    %cst_72 = arith.constant 0.000000e+00 : f32
    %92 = vector.broadcast %cst_72 : f32 to vector<32x16xf32>
    %93 = arith.maximumf %91, %92 : vector<32x16xf32>
    %94 = arith.truncf %65 : vector<96x8xf32> to vector<96x8xbf16>
    %c0_73 = arith.constant 0 : index
    %c0_74 = arith.constant 0 : index
    %95 = vector.load %arg20[%c0_73, %c0_74] : memref<8x16xbf16, #tpu.memory_space<vmem>>, vector<8x16xbf16>
    %cst_75 = arith.constant dense<0.000000e+00> : vector<96x16xf32>
    %96 = tpu.matmul %94, %95, %cst_75 {dimension_numbers = #tpu.dot_dimension_numbers<[1], [0], [0], [1], [0, 0, 1, 1], [], []>} : vector<96x8xbf16>, vector<8x16xbf16>, vector<96x16xf32> -> vector<96x16xf32>
    %c0_76 = arith.constant 0 : index
    %c0_77 = arith.constant 0 : index
    %97 = vector.load %arg21[%c0_76, %c0_77] : memref<1x16xf32, #tpu.memory_space<vmem>>, vector<1x16xf32>
    %98 = vector.broadcast %97 : vector<1x16xf32> to vector<96x16xf32>
    %99 = arith.addf %96, %98 : vector<96x16xf32>
    %cst_78 = arith.constant 0.000000e+00 : f32
    %100 = vector.broadcast %cst_78 : f32 to vector<96x16xf32>
    %101 = arith.maximumf %99, %100 : vector<96x16xf32>
    %102 = vector.extract_strided_slice %85 {offsets = [0, 0], sizes = [8, 64], strides = [1, 1]} : vector<32x64xf32> to vector<8x64xf32>
    %103 = vector.extract_strided_slice %93 {offsets = [0, 0], sizes = [8, 16], strides = [1, 1]} : vector<32x16xf32> to vector<8x16xf32>
    %104 = vector.extract_strided_slice %101 {offsets = [0, 0], sizes = [24, 16], strides = [1, 1]} : vector<96x16xf32> to vector<24x16xf32>
    %105 = arith.truncf %103 : vector<8x16xf32> to vector<8x16xbf16>
    %c0_79 = arith.constant 0 : index
    %c0_80 = arith.constant 0 : index
    %106 = vector.load %arg22[%c0_79, %c0_80] : memref<16x32xbf16, #tpu.memory_space<vmem>>, vector<16x32xbf16>
    %cst_81 = arith.constant dense<0.000000e+00> : vector<8x32xf32>
    %107 = tpu.matmul %105, %106, %cst_81 {dimension_numbers = #tpu.dot_dimension_numbers<[1], [0], [0], [1], [0, 0, 1, 1], [], []>} : vector<8x16xbf16>, vector<16x32xbf16>, vector<8x32xf32> -> vector<8x32xf32>
    %c0_82 = arith.constant 0 : index
    %c0_83 = arith.constant 0 : index
    %108 = vector.load %arg23[%c0_82, %c0_83] : memref<1x32xf32, #tpu.memory_space<vmem>>, vector<1x32xf32>
    %109 = vector.broadcast %108 : vector<1x32xf32> to vector<8x32xf32>
    %110 = arith.addf %107, %109 : vector<8x32xf32>
    %cst_84 = arith.constant 0.000000e+00 : f32
    %111 = vector.broadcast %cst_84 : f32 to vector<8x32xf32>
    %112 = arith.maximumf %110, %111 : vector<8x32xf32>
    %113 = arith.truncf %102 : vector<8x64xf32> to vector<8x64xbf16>
    %c0_85 = arith.constant 0 : index
    %c0_86 = arith.constant 0 : index
    %114 = vector.load %arg24[%c0_85, %c0_86] : memref<64x64xbf16, #tpu.memory_space<vmem>>, vector<64x64xbf16>
    %cst_87 = arith.constant dense<0.000000e+00> : vector<8x64xf32>
    %115 = tpu.matmul %113, %114, %cst_87 {dimension_numbers = #tpu.dot_dimension_numbers<[1], [0], [0], [1], [0, 0, 1, 1], [], []>} : vector<8x64xbf16>, vector<64x64xbf16>, vector<8x64xf32> -> vector<8x64xf32>
    %116 = arith.truncf %112 : vector<8x32xf32> to vector<8x32xbf16>
    %c0_88 = arith.constant 0 : index
    %c0_89 = arith.constant 0 : index
    %117 = vector.load %arg25[%c0_88, %c0_89] : memref<32x64xbf16, #tpu.memory_space<vmem>>, vector<32x64xbf16>
    %cst_90 = arith.constant dense<0.000000e+00> : vector<8x64xf32>
    %118 = tpu.matmul %116, %117, %cst_90 {dimension_numbers = #tpu.dot_dimension_numbers<[1], [0], [0], [1], [0, 0, 1, 1], [], []>} : vector<8x32xbf16>, vector<32x64xbf16>, vector<8x64xf32> -> vector<8x64xf32>
    %119 = arith.addf %115, %118 : vector<8x64xf32>
    %c0_91 = arith.constant 0 : index
    %c0_92 = arith.constant 0 : index
    %120 = vector.load %arg26[%c0_91, %c0_92] : memref<1x64xf32, #tpu.memory_space<vmem>>, vector<1x64xf32>
    %121 = vector.broadcast %120 : vector<1x64xf32> to vector<8x64xf32>
    %122 = arith.addf %119, %121 : vector<8x64xf32>
    %cst_93 = arith.constant 0.000000e+00 : f32
    %123 = vector.broadcast %cst_93 : f32 to vector<8x64xf32>
    %124 = arith.maximumf %122, %123 : vector<8x64xf32>
    %125 = arith.truncf %103 : vector<8x16xf32> to vector<8x16xbf16>
    %c0_94 = arith.constant 0 : index
    %c0_95 = arith.constant 0 : index
    %126 = vector.load %arg27[%c0_94, %c0_95] : memref<16x16xbf16, #tpu.memory_space<vmem>>, vector<16x16xbf16>
    %cst_96 = arith.constant dense<0.000000e+00> : vector<8x16xf32>
    %127 = tpu.matmul %125, %126, %cst_96 {dimension_numbers = #tpu.dot_dimension_numbers<[1], [0], [0], [1], [0, 0, 1, 1], [], []>} : vector<8x16xbf16>, vector<16x16xbf16>, vector<8x16xf32> -> vector<8x16xf32>
    %c0_97 = arith.constant 0 : index
    %c0_98 = arith.constant 0 : index
    %128 = vector.load %arg28[%c0_97, %c0_98] : memref<1x16xf32, #tpu.memory_space<vmem>>, vector<1x16xf32>
    %129 = vector.broadcast %128 : vector<1x16xf32> to vector<8x16xf32>
    %130 = arith.addf %127, %129 : vector<8x16xf32>
    %cst_99 = arith.constant 0.000000e+00 : f32
    %131 = vector.broadcast %cst_99 : f32 to vector<8x16xf32>
    %132 = arith.maximumf %130, %131 : vector<8x16xf32>
    %133 = arith.truncf %104 : vector<24x16xf32> to vector<24x16xbf16>
    %c0_100 = arith.constant 0 : index
    %c0_101 = arith.constant 0 : index
    %134 = vector.load %arg27[%c0_100, %c0_101] : memref<16x16xbf16, #tpu.memory_space<vmem>>, vector<16x16xbf16>
    %cst_102 = arith.constant dense<0.000000e+00> : vector<24x16xf32>
    %135 = tpu.matmul %133, %134, %cst_102 {dimension_numbers = #tpu.dot_dimension_numbers<[1], [0], [0], [1], [0, 0, 1, 1], [], []>} : vector<24x16xbf16>, vector<16x16xbf16>, vector<24x16xf32> -> vector<24x16xf32>
    %c0_103 = arith.constant 0 : index
    %c0_104 = arith.constant 0 : index
    %136 = vector.load %arg28[%c0_103, %c0_104] : memref<1x16xf32, #tpu.memory_space<vmem>>, vector<1x16xf32>
    %137 = vector.broadcast %136 : vector<1x16xf32> to vector<24x16xf32>
    %138 = arith.addf %135, %137 : vector<24x16xf32>
    %cst_105 = arith.constant 0.000000e+00 : f32
    %139 = vector.broadcast %cst_105 : f32 to vector<24x16xf32>
    %140 = arith.maximumf %138, %139 : vector<24x16xf32>
    %141 = vector.extract_strided_slice %124 {offsets = [0, 0], sizes = [2, 64], strides = [1, 1]} : vector<8x64xf32> to vector<2x64xf32>
    %142 = vector.extract_strided_slice %132 {offsets = [0, 0], sizes = [2, 16], strides = [1, 1]} : vector<8x16xf32> to vector<2x16xf32>
    %143 = vector.extract_strided_slice %140 {offsets = [0, 0], sizes = [6, 16], strides = [1, 1]} : vector<24x16xf32> to vector<6x16xf32>
    %144 = arith.truncf %142 : vector<2x16xf32> to vector<2x16xbf16>
    %c0_106 = arith.constant 0 : index
    %c0_107 = arith.constant 0 : index
    %145 = vector.load %arg29[%c0_106, %c0_107] : memref<16x32xbf16, #tpu.memory_space<vmem>>, vector<16x32xbf16>
    %cst_108 = arith.constant dense<0.000000e+00> : vector<2x32xf32>
    %146 = tpu.matmul %144, %145, %cst_108 {dimension_numbers = #tpu.dot_dimension_numbers<[1], [0], [0], [1], [0, 0, 1, 1], [], []>} : vector<2x16xbf16>, vector<16x32xbf16>, vector<2x32xf32> -> vector<2x32xf32>
    %c0_109 = arith.constant 0 : index
    %c0_110 = arith.constant 0 : index
    %147 = vector.load %arg30[%c0_109, %c0_110] : memref<1x32xf32, #tpu.memory_space<vmem>>, vector<1x32xf32>
    %148 = vector.broadcast %147 : vector<1x32xf32> to vector<2x32xf32>
    %149 = arith.addf %146, %148 : vector<2x32xf32>
    %cst_111 = arith.constant 0.000000e+00 : f32
    %150 = vector.broadcast %cst_111 : f32 to vector<2x32xf32>
    %151 = arith.maximumf %149, %150 : vector<2x32xf32>
    %152 = arith.truncf %141 : vector<2x64xf32> to vector<2x64xbf16>
    %c0_112 = arith.constant 0 : index
    %c0_113 = arith.constant 0 : index
    %153 = vector.load %arg31[%c0_112, %c0_113] : memref<64x64xbf16, #tpu.memory_space<vmem>>, vector<64x64xbf16>
    %cst_114 = arith.constant dense<0.000000e+00> : vector<2x64xf32>
    %154 = tpu.matmul %152, %153, %cst_114 {dimension_numbers = #tpu.dot_dimension_numbers<[1], [0], [0], [1], [0, 0, 1, 1], [], []>} : vector<2x64xbf16>, vector<64x64xbf16>, vector<2x64xf32> -> vector<2x64xf32>
    %155 = arith.truncf %151 : vector<2x32xf32> to vector<2x32xbf16>
    %c0_115 = arith.constant 0 : index
    %c0_116 = arith.constant 0 : index
    %156 = vector.load %arg32[%c0_115, %c0_116] : memref<32x64xbf16, #tpu.memory_space<vmem>>, vector<32x64xbf16>
    %cst_117 = arith.constant dense<0.000000e+00> : vector<2x64xf32>
    %157 = tpu.matmul %155, %156, %cst_117 {dimension_numbers = #tpu.dot_dimension_numbers<[1], [0], [0], [1], [0, 0, 1, 1], [], []>} : vector<2x32xbf16>, vector<32x64xbf16>, vector<2x64xf32> -> vector<2x64xf32>
    %158 = arith.addf %154, %157 : vector<2x64xf32>
    %c0_118 = arith.constant 0 : index
    %c0_119 = arith.constant 0 : index
    %159 = vector.load %arg33[%c0_118, %c0_119] : memref<1x64xf32, #tpu.memory_space<vmem>>, vector<1x64xf32>
    %160 = vector.broadcast %159 : vector<1x64xf32> to vector<2x64xf32>
    %161 = arith.addf %158, %160 : vector<2x64xf32>
    %cst_120 = arith.constant 0.000000e+00 : f32
    %162 = vector.broadcast %cst_120 : f32 to vector<2x64xf32>
    %163 = arith.maximumf %161, %162 : vector<2x64xf32>
    %164 = arith.truncf %142 : vector<2x16xf32> to vector<2x16xbf16>
    %c0_121 = arith.constant 0 : index
    %c0_122 = arith.constant 0 : index
    %165 = vector.load %arg34[%c0_121, %c0_122] : memref<16x16xbf16, #tpu.memory_space<vmem>>, vector<16x16xbf16>
    %cst_123 = arith.constant dense<0.000000e+00> : vector<2x16xf32>
    %166 = tpu.matmul %164, %165, %cst_123 {dimension_numbers = #tpu.dot_dimension_numbers<[1], [0], [0], [1], [0, 0, 1, 1], [], []>} : vector<2x16xbf16>, vector<16x16xbf16>, vector<2x16xf32> -> vector<2x16xf32>
    %c0_124 = arith.constant 0 : index
    %c0_125 = arith.constant 0 : index
    %167 = vector.load %arg35[%c0_124, %c0_125] : memref<1x16xf32, #tpu.memory_space<vmem>>, vector<1x16xf32>
    %168 = vector.broadcast %167 : vector<1x16xf32> to vector<2x16xf32>
    %169 = arith.addf %166, %168 : vector<2x16xf32>
    %cst_126 = arith.constant 0.000000e+00 : f32
    %170 = vector.broadcast %cst_126 : f32 to vector<2x16xf32>
    %171 = arith.maximumf %169, %170 : vector<2x16xf32>
    %172 = arith.truncf %143 : vector<6x16xf32> to vector<6x16xbf16>
    %c0_127 = arith.constant 0 : index
    %c0_128 = arith.constant 0 : index
    %173 = vector.load %arg34[%c0_127, %c0_128] : memref<16x16xbf16, #tpu.memory_space<vmem>>, vector<16x16xbf16>
    %cst_129 = arith.constant dense<0.000000e+00> : vector<6x16xf32>
    %174 = tpu.matmul %172, %173, %cst_129 {dimension_numbers = #tpu.dot_dimension_numbers<[1], [0], [0], [1], [0, 0, 1, 1], [], []>} : vector<6x16xbf16>, vector<16x16xbf16>, vector<6x16xf32> -> vector<6x16xf32>
    %c0_130 = arith.constant 0 : index
    %c0_131 = arith.constant 0 : index
    %175 = vector.load %arg35[%c0_130, %c0_131] : memref<1x16xf32, #tpu.memory_space<vmem>>, vector<1x16xf32>
    %176 = vector.broadcast %175 : vector<1x16xf32> to vector<6x16xf32>
    %177 = arith.addf %174, %176 : vector<6x16xf32>
    %cst_132 = arith.constant 0.000000e+00 : f32
    %178 = vector.broadcast %cst_132 : f32 to vector<6x16xf32>
    %179 = arith.maximumf %177, %178 : vector<6x16xf32>
    %cst_133 = arith.constant dense<0.000000e+00> : vector<64xf32>
    %180 = vector.multi_reduction <add>, %163, %cst_133 [0] : vector<2x64xf32> to vector<64xf32>
    %181 = vector.shape_cast %180 : vector<64xf32> to vector<1x64xf32>
    %cst_134 = arith.constant 5.000000e-01 : f32
    %182 = vector.broadcast %cst_134 : f32 to vector<1x64xf32>
    %183 = arith.mulf %181, %182 : vector<1x64xf32>
    %cst_135 = arith.constant dense<0.000000e+00> : vector<16xf32>
    %184 = vector.multi_reduction <add>, %171, %cst_135 [0] : vector<2x16xf32> to vector<16xf32>
    %185 = vector.shape_cast %184 : vector<16xf32> to vector<1x16xf32>
    %cst_136 = arith.constant dense<0.000000e+00> : vector<16xf32>
    %186 = vector.multi_reduction <add>, %179, %cst_136 [0] : vector<6x16xf32> to vector<16xf32>
    %187 = vector.shape_cast %186 : vector<16xf32> to vector<1x16xf32>
    %188 = arith.addf %185, %187 : vector<1x16xf32>
    %cst_137 = arith.constant 1.250000e-01 : f32
    %189 = vector.broadcast %cst_137 : f32 to vector<1x16xf32>
    %190 = arith.mulf %188, %189 : vector<1x16xf32>
    %c0_138 = arith.constant 0 : index
    %c0_139 = arith.constant 0 : index
    %c0_140 = arith.constant 0 : index
    %191 = vector.load %arg36[%c0_138, %c0_139, %c0_140] : memref<1x1x80xf32, #tpu.memory_space<vmem>>, vector<1x1x64xf32>
    %192 = vector.shape_cast %191 : vector<1x1x64xf32> to vector<1x64xf32>
    %193 = vector.shape_cast %183 : vector<1x64xf32> to vector<1x1x64xf32>
    tpu.vector_store %arg36[%c0_138, %c0_139, %c0_140], %193 {strides = array<i32>} : memref<1x1x80xf32, #tpu.memory_space<vmem>>, vector<1x1x64xf32>,
    %c0_141 = arith.constant 0 : index
    %c0_142 = arith.constant 0 : index
    %c64 = arith.constant 64 : index
    %194 = vector.load %arg36[%c0_141, %c0_142, %c64] : memref<1x1x80xf32, #tpu.memory_space<vmem>>, vector<1x1x16xf32>
    %195 = vector.shape_cast %194 : vector<1x1x16xf32> to vector<1x16xf32>
    %196 = vector.shape_cast %190 : vector<1x16xf32> to vector<1x1x16xf32>
    tpu.vector_store %arg36[%c0_141, %c0_142, %c64], %196 {strides = array<i32>} : memref<1x1x80xf32, #tpu.memory_space<vmem>>, vector<1x1x16xf32>,
    return
  }
  func.func @transform_0(%arg0: i32) -> (i32, i32, i32) {
    %c0_i32 = arith.constant 0 : i32
    %c0_i32_0 = arith.constant 0 : i32
    %c0_i32_1 = arith.constant 0 : i32
    return %arg0, %c0_i32, %c0_i32_0 : i32, i32, i32
  }
  func.func @transform_1(%arg0: i32) -> (i32, i32, i32) {
    %c0_i32 = arith.constant 0 : i32
    %c0_i32_0 = arith.constant 0 : i32
    %c0_i32_1 = arith.constant 0 : i32
    return %arg0, %c0_i32, %c0_i32_0 : i32, i32, i32
  }
  func.func @transform_2(%arg0: i32) -> (i32, i32, i32) {
    %c0_i32 = arith.constant 0 : i32
    %c0_i32_0 = arith.constant 0 : i32
    %c0_i32_1 = arith.constant 0 : i32
    return %arg0, %c0_i32, %c0_i32_0 : i32, i32, i32
  }
  func.func @transform_3(%arg0: i32) -> (i32, i32) {
    %c0_i32 = arith.constant 0 : i32
    %c0_i32_0 = arith.constant 0 : i32
    %c0_i32_1 = arith.constant 0 : i32
    return %c0_i32, %c0_i32_0 : i32, i32
  }
  func.func @transform_4(%arg0: i32) -> (i32, i32) {
    %c0_i32 = arith.constant 0 : i32
    %c0_i32_0 = arith.constant 0 : i32
    %c0_i32_1 = arith.constant 0 : i32
    return %c0_i32, %c0_i32_0 : i32, i32
  }
  func.func @transform_5(%arg0: i32) -> (i32, i32) {
    %c0_i32 = arith.constant 0 : i32
    %c0_i32_0 = arith.constant 0 : i32
    %c0_i32_1 = arith.constant 0 : i32
    return %c0_i32, %c0_i32_0 : i32, i32
  }
  func.func @transform_6(%arg0: i32) -> (i32, i32) {
    %c0_i32 = arith.constant 0 : i32
    %c0_i32_0 = arith.constant 0 : i32
    %c0_i32_1 = arith.constant 0 : i32
    return %c0_i32, %c0_i32_0 : i32, i32
  }
  func.func @transform_7(%arg0: i32) -> (i32, i32) {
    %c0_i32 = arith.constant 0 : i32
    %c0_i32_0 = arith.constant 0 : i32
    %c0_i32_1 = arith.constant 0 : i32
    return %c0_i32, %c0_i32_0 : i32, i32
  }
  func.func @transform_8(%arg0: i32) -> (i32, i32) {
    %c0_i32 = arith.constant 0 : i32
    %c0_i32_0 = arith.constant 0 : i32
    %c0_i32_1 = arith.constant 0 : i32
    return %c0_i32, %c0_i32_0 : i32, i32
  }
  func.func @transform_9(%arg0: i32) -> (i32, i32) {
    %c0_i32 = arith.constant 0 : i32
    %c0_i32_0 = arith.constant 0 : i32
    %c0_i32_1 = arith.constant 0 : i32
    return %c0_i32, %c0_i32_0 : i32, i32
  }
  func.func @transform_10(%arg0: i32) -> (i32, i32) {
    %c0_i32 = arith.constant 0 : i32
    %c0_i32_0 = arith.constant 0 : i32
    %c0_i32_1 = arith.constant 0 : i32
    return %c0_i32, %c0_i32_0 : i32, i32
  }
  func.func @transform_11(%arg0: i32) -> (i32, i32) {
    %c0_i32 = arith.constant 0 : i32
    %c0_i32_0 = arith.constant 0 : i32
    %c0_i32_1 = arith.constant 0 : i32
    return %c0_i32, %c0_i32_0 : i32, i32
  }
  func.func @transform_12(%arg0: i32) -> (i32, i32) {
    %c0_i32 = arith.constant 0 : i32
    %c0_i32_0 = arith.constant 0 : i32
    %c0_i32_1 = arith.constant 0 : i32
    return %c0_i32, %c0_i32_0 : i32, i32
  }
  func.func @transform_13(%arg0: i32) -> (i32, i32) {
    %c0_i32 = arith.constant 0 : i32
    %c0_i32_0 = arith.constant 0 : i32
    %c0_i32_1 = arith.constant 0 : i32
    return %c0_i32, %c0_i32_0 : i32, i32
  }
  func.func @transform_14(%arg0: i32) -> (i32, i32) {
    %c0_i32 = arith.constant 0 : i32
    %c0_i32_0 = arith.constant 0 : i32
    %c0_i32_1 = arith.constant 0 : i32
    return %c0_i32, %c0_i32_0 : i32, i32
  }
  func.func @transform_15(%arg0: i32) -> (i32, i32) {
    %c0_i32 = arith.constant 0 : i32
    %c0_i32_0 = arith.constant 0 : i32
    %c0_i32_1 = arith.constant 0 : i32
    return %c0_i32, %c0_i32_0 : i32, i32
  }
  func.func @transform_16(%arg0: i32) -> (i32, i32) {
    %c0_i32 = arith.constant 0 : i32
    %c0_i32_0 = arith.constant 0 : i32
    %c0_i32_1 = arith.constant 0 : i32
    return %c0_i32, %c0_i32_0 : i32, i32
  }
  func.func @transform_17(%arg0: i32) -> (i32, i32) {
    %c0_i32 = arith.constant 0 : i32
    %c0_i32_0 = arith.constant 0 : i32
    %c0_i32_1 = arith.constant 0 : i32
    return %c0_i32, %c0_i32_0 : i32, i32
  }
  func.func @transform_18(%arg0: i32) -> (i32, i32) {
    %c0_i32 = arith.constant 0 : i32
    %c0_i32_0 = arith.constant 0 : i32
    %c0_i32_1 = arith.constant 0 : i32
    return %c0_i32, %c0_i32_0 : i32, i32
  }
  func.func @transform_19(%arg0: i32) -> (i32, i32) {
    %c0_i32 = arith.constant 0 : i32
    %c0_i32_0 = arith.constant 0 : i32
    %c0_i32_1 = arith.constant 0 : i32
    return %c0_i32, %c0_i32_0 : i32, i32
  }
  func.func @transform_20(%arg0: i32) -> (i32, i32) {
    %c0_i32 = arith.constant 0 : i32
    %c0_i32_0 = arith.constant 0 : i32
    %c0_i32_1 = arith.constant 0 : i32
    return %c0_i32, %c0_i32_0 : i32, i32
  }
  func.func @transform_21(%arg0: i32) -> (i32, i32) {
    %c0_i32 = arith.constant 0 : i32
    %c0_i32_0 = arith.constant 0 : i32
    %c0_i32_1 = arith.constant 0 : i32
    return %c0_i32, %c0_i32_0 : i32, i32
  }
  func.func @transform_22(%arg0: i32) -> (i32, i32) {
    %c0_i32 = arith.constant 0 : i32
    %c0_i32_0 = arith.constant 0 : i32
    %c0_i32_1 = arith.constant 0 : i32
    return %c0_i32, %c0_i32_0 : i32, i32
  }
  func.func @transform_23(%arg0: i32) -> (i32, i32) {
    %c0_i32 = arith.constant 0 : i32
    %c0_i32_0 = arith.constant 0 : i32
    %c0_i32_1 = arith.constant 0 : i32
    return %c0_i32, %c0_i32_0 : i32, i32
  }
  func.func @transform_24(%arg0: i32) -> (i32, i32) {
    %c0_i32 = arith.constant 0 : i32
    %c0_i32_0 = arith.constant 0 : i32
    %c0_i32_1 = arith.constant 0 : i32
    return %c0_i32, %c0_i32_0 : i32, i32
  }
  func.func @transform_25(%arg0: i32) -> (i32, i32) {
    %c0_i32 = arith.constant 0 : i32
    %c0_i32_0 = arith.constant 0 : i32
    %c0_i32_1 = arith.constant 0 : i32
    return %c0_i32, %c0_i32_0 : i32, i32
  }
  func.func @transform_26(%arg0: i32) -> (i32, i32) {
    %c0_i32 = arith.constant 0 : i32
    %c0_i32_0 = arith.constant 0 : i32
    %c0_i32_1 = arith.constant 0 : i32
    return %c0_i32, %c0_i32_0 : i32, i32
  }
  func.func @transform_27(%arg0: i32) -> (i32, i32) {
    %c0_i32 = arith.constant 0 : i32
    %c0_i32_0 = arith.constant 0 : i32
    %c0_i32_1 = arith.constant 0 : i32
    return %c0_i32, %c0_i32_0 : i32, i32
  }
  func.func @transform_28(%arg0: i32) -> (i32, i32) {
    %c0_i32 = arith.constant 0 : i32
    %c0_i32_0 = arith.constant 0 : i32
    %c0_i32_1 = arith.constant 0 : i32
    return %c0_i32, %c0_i32_0 : i32, i32
  }
  func.func @transform_29(%arg0: i32) -> (i32, i32) {
    %c0_i32 = arith.constant 0 : i32
    %c0_i32_0 = arith.constant 0 : i32
    %c0_i32_1 = arith.constant 0 : i32
    return %c0_i32, %c0_i32_0 : i32, i32
  }
  func.func @transform_30(%arg0: i32) -> (i32, i32) {
    %c0_i32 = arith.constant 0 : i32
    %c0_i32_0 = arith.constant 0 : i32
    %c0_i32_1 = arith.constant 0 : i32
    return %c0_i32, %c0_i32_0 : i32, i32
  }
  func.func @transform_31(%arg0: i32) -> (i32, i32) {
    %c0_i32 = arith.constant 0 : i32
    %c0_i32_0 = arith.constant 0 : i32
    %c0_i32_1 = arith.constant 0 : i32
    return %c0_i32, %c0_i32_0 : i32, i32
  }
  func.func @transform_32(%arg0: i32) -> (i32, i32) {
    %c0_i32 = arith.constant 0 : i32
    %c0_i32_0 = arith.constant 0 : i32
    %c0_i32_1 = arith.constant 0 : i32
    return %c0_i32, %c0_i32_0 : i32, i32
  }
  func.func @transform_33(%arg0: i32) -> (i32, i32) {
    %c0_i32 = arith.constant 0 : i32
    %c0_i32_0 = arith.constant 0 : i32
    %c0_i32_1 = arith.constant 0 : i32
    return %c0_i32, %c0_i32_0 : i32, i32
  }
  func.func @transform_34(%arg0: i32) -> (i32, i32) {
    %c0_i32 = arith.constant 0 : i32
    %c0_i32_0 = arith.constant 0 : i32
    %c0_i32_1 = arith.constant 0 : i32
    return %c0_i32, %c0_i32_0 : i32, i32
  }
  func.func @transform_35(%arg0: i32) -> (i32, i32, i32) {
    %c0_i32 = arith.constant 0 : i32
    %c0_i32_0 = arith.constant 0 : i32
    %c0_i32_1 = arith.constant 0 : i32
    return %arg0, %c0_i32, %c0_i32_0 : i32, i32, i32
  }
}

</mosaic_0001>

<llo_original>
// kernel: slowfast_forward.1
$region0: #{slowfast_forward.1}
  #allocation0 [shape = 'u32[]', space=smem, size = 0x4, offset = 0x4, fixed_abs, tag = 'smem constant byte address 0x4 - core index']
  #allocation1 [shape = 'u32[72,128]{1,0:T(1,128)}', space=vmem, size = 0x9000, scoped, tag = 'internal scratch']
  %s0 = inlined_call_operand.smem [shape: u32[36], index: -1, kind: input, shape index: {}]
  %s1 = sld [smem:[%s0]]
  %s2 = scalar_lea.smem %s0, 1
  %s3 = sld [smem:[%s2]]
  %s4 = scalar_lea.smem %s0, 2
  %s5 = sld [smem:[%s4]]
  %s6 = scalar_lea.smem %s0, 3
  %s7 = sld [smem:[%s6]]
  %s8 = scalar_lea.smem %s0, 4
  %s9 = sld [smem:[%s8]]
  %s10 = scalar_lea.smem %s0, 5
  %s11 = sld [smem:[%s10]]
  %s12 = scalar_lea.smem %s0, 6
  %s13 = sld [smem:[%s12]]
  %s14 = scalar_lea.smem %s0, 7
  %s15 = sld [smem:[%s14]]
  %s16 = scalar_lea.smem %s0, 8
  %s17 = sld [smem:[%s16]]
  %s18 = scalar_lea.smem %s0, 9
  %s19 = sld [smem:[%s18]]
  %s20 = scalar_lea.smem %s0, 10
  %s21 = sld [smem:[%s20]]
  %s22 = scalar_lea.smem %s0, 11
  %s23 = sld [smem:[%s22]]
  %s24 = scalar_lea.smem %s0, 12
  %s25 = sld [smem:[%s24]]
  %s26 = scalar_lea.smem %s0, 13
  %s27 = sld [smem:[%s26]]
  %s28 = scalar_lea.smem %s0, 14
  %s29 = sld [smem:[%s28]]
  %s30 = scalar_lea.smem %s0, 15
  %s31 = sld [smem:[%s30]]
  %s32 = scalar_lea.smem %s0, 16
  %s33 = sld [smem:[%s32]]
  %s34 = scalar_lea.smem %s0, 17
  %s35 = sld [smem:[%s34]]
  %s36 = scalar_lea.smem %s0, 18
  %s37 = sld [smem:[%s36]]
  %s38 = scalar_lea.smem %s0, 19
  %s39 = sld [smem:[%s38]]
  %s40 = scalar_lea.smem %s0, 20
  %s41 = sld [smem:[%s40]]
  %s42 = scalar_lea.smem %s0, 21
  %s43 = sld [smem:[%s42]]
  %s44 = scalar_lea.smem %s0, 22
  %s45 = sld [smem:[%s44]]
  %s46 = scalar_lea.smem %s0, 23
  %s47 = sld [smem:[%s46]]
  %s48 = scalar_lea.smem %s0, 24
  %s49 = sld [smem:[%s48]]
  %s50 = scalar_lea.smem %s0, 25
  %s51 = sld [smem:[%s50]]
  %s52 = scalar_lea.smem %s0, 26
  %s53 = sld [smem:[%s52]]
  %s54 = scalar_lea.smem %s0, 27
  %s55 = sld [smem:[%s54]]
  %s56 = scalar_lea.smem %s0, 28
  %s57 = sld [smem:[%s56]]
  %s58 = scalar_lea.smem %s0, 29
  %s59 = sld [smem:[%s58]]
  %s60 = scalar_lea.smem %s0, 30
  %s61 = sld [smem:[%s60]]
  %s62 = scalar_lea.smem %s0, 31
  %s63 = sld [smem:[%s62]]
  %s64 = scalar_lea.smem %s0, 32
  %s65 = sld [smem:[%s64]]
  %s66 = scalar_lea.smem %s0, 33
  %s67 = sld [smem:[%s66]]
  %s68 = scalar_lea.smem %s0, 34
  %s69 = sld [smem:[%s68]]
  %s70 = scalar_lea.smem %s0, 35
  %s71 = sld [smem:[%s70]]
  %s72 = sld [smem:[#allocation0]]
  $region173: #{slowfast_forward.1} parent=0
    _
  %s74 = ssub.s32 1, %s72
  %s75 = scalar_select 0, %s74, %s72
  $region1: #{slowfast_forward.1} parent=0
    #allocation2 [shape = 'u8[1024]{0}', space=vmem, size = 0x400, scoped, tag = 'output window, operand 0']
    #allocation3 [shape = 's32[2]{0}', space=sflag, size = 0x8, scoped, tag = 'scoped memory for slowfast_forward.1']
    %76 = vsyncpa [#allocation3], 0
    %s77 = scalar_lea.sflag [#allocation3], 1
    %78 = vsyncpa %s77, 0
    loop: start=0, step=1, limit=4
    $region2: #{slowfast_forward.1} parent=1 // loop_pre_header
      _
    $region3: #{slowfast_forward.1} parent=1 // loop_header
      %s80 = sphi 0, %s84
      %p81 = scmp.ge.s32.totalorder %s80, 4
      %s90 = sphi 0, %s92
      %s93 = sphi 0, %s90
      %s94 = sphi 0, %s93
      %s110 = sphi 0, %s94
      %s116 = sphi 0, %s118
      %s119 = sphi 0, %s116
      %s120 = sphi 0, %s119
      %s136 = sphi 0, %s120
      %s142 = sphi 0, %s144
      %s145 = sphi 0, %s142
      %s146 = sphi 0, %s145
      %s162 = sphi 0, %s146
      %s166 = sphi 0, %s166
      %s168 = sphi 0, %s166
      %s169 = sphi 0, %s168
      %s183 = sphi 0, %s169
      %s187 = sphi 0, %s187
      %s189 = sphi 0, %s187
      %s190 = sphi 0, %s189
      %s204 = sphi 0, %s190
      %s208 = sphi 0, %s208
      %s210 = sphi 0, %s208
      %s211 = sphi 0, %s210
      %s225 = sphi 0, %s211
      %s229 = sphi 0, %s229
      %s231 = sphi 0, %s229
      %s232 = sphi 0, %s231
      %s246 = sphi 0, %s232
      %s250 = sphi 0, %s250
      %s252 = sphi 0, %s250
      %s253 = sphi 0, %s252
      %s267 = sphi 0, %s253
      %s271 = sphi 0, %s271
      %s273 = sphi 0, %s271
      %s274 = sphi 0, %s273
      %s288 = sphi 0, %s274
      %s292 = sphi 0, %s292
      %s294 = sphi 0, %s292
      %s295 = sphi 0, %s294
      %s309 = sphi 0, %s295
      %s313 = sphi 0, %s313
      %s315 = sphi 0, %s313
      %s316 = sphi 0, %s315
      %s330 = sphi 0, %s316
      %s334 = sphi 0, %s334
      %s336 = sphi 0, %s334
      %s337 = sphi 0, %s336
      %s351 = sphi 0, %s337
      %s355 = sphi 0, %s355
      %s357 = sphi 0, %s355
      %s358 = sphi 0, %s357
      %s372 = sphi 0, %s358
      %s376 = sphi 0, %s376
      %s378 = sphi 0, %s376
      %s379 = sphi 0, %s378
      %s393 = sphi 0, %s379
      %s397 = sphi 0, %s397
      %s399 = sphi 0, %s397
      %s400 = sphi 0, %s399
      %s414 = sphi 0, %s400
      %s418 = sphi 0, %s418
      %s420 = sphi 0, %s418
      %s421 = sphi 0, %s420
      %s435 = sphi 0, %s421
      %s439 = sphi 0, %s439
      %s441 = sphi 0, %s439
      %s442 = sphi 0, %s441
      %s456 = sphi 0, %s442
      %s460 = sphi 0, %s460
      %s462 = sphi 0, %s460
      %s463 = sphi 0, %s462
      %s477 = sphi 0, %s463
      %s481 = sphi 0, %s481
      %s483 = sphi 0, %s481
      %s484 = sphi 0, %s483
      %s498 = sphi 0, %s484
      %s502 = sphi 0, %s502
      %s504 = sphi 0, %s502
      %s505 = sphi 0, %s504
      %s519 = sphi 0, %s505
      %s523 = sphi 0, %s523
      %s525 = sphi 0, %s523
      %s526 = sphi 0, %s525
      %s540 = sphi 0, %s526
      %s544 = sphi 0, %s544
      %s546 = sphi 0, %s544
      %s547 = sphi 0, %s546
      %s561 = sphi 0, %s547
      %s565 = sphi 0, %s565
      %s567 = sphi 0, %s565
      %s568 = sphi 0, %s567
      %s582 = sphi 0, %s568
      %s586 = sphi 0, %s586
      %s588 = sphi 0, %s586
      %s589 = sphi 0, %s588
      %s603 = sphi 0, %s589
      %s607 = sphi 0, %s607
      %s609 = sphi 0, %s607
      %s610 = sphi 0, %s609
      %s624 = sphi 0, %s610
      %s628 = sphi 0, %s628
      %s630 = sphi 0, %s628
      %s631 = sphi 0, %s630
      %s645 = sphi 0, %s631
      %s649 = sphi 0, %s649
      %s651 = sphi 0, %s649
      %s652 = sphi 0, %s651
      %s666 = sphi 0, %s652
      %s670 = sphi 0, %s670
      %s672 = sphi 0, %s670
      %s673 = sphi 0, %s672
      %s687 = sphi 0, %s673
      %s691 = sphi 0, %s691
      %s693 = sphi 0, %s691
      %s694 = sphi 0, %s693
      %s708 = sphi 0, %s694
      %s712 = sphi 0, %s712
      %s714 = sphi 0, %s712
      %s715 = sphi 0, %s714
      %s729 = sphi 0, %s715
      %s733 = sphi 0, %s733
      %s735 = sphi 0, %s733
      %s736 = sphi 0, %s735
      %s750 = sphi 0, %s736
      %s754 = sphi 0, %s754
      %s756 = sphi 0, %s754
      %s757 = sphi 0, %s756
      %s771 = sphi 0, %s757
      %s775 = sphi 0, %s775
      %s777 = sphi 0, %s775
      %s778 = sphi 0, %s777
      %s792 = sphi 0, %s778
      %s796 = sphi 0, %s796
      %s798 = sphi 0, %s796
      %s799 = sphi 0, %s798
      %s813 = sphi 0, %s799
      %s817 = sphi 0, %s817
      %s819 = sphi 0, %s817
      %s820 = sphi 0, %s819
      %s834 = sphi 0, %s820
      %s840 = sphi 0, %s842
      %s843 = sphi 0, %s840
      %s844 = sphi 0, %s843
      %s860 = sphi 0, %s844
    $region4: #{slowfast_forward.1} parent=1 // loop_header_branch
      %83 = sbr.rel (%p81) target = $region8
    $region5: #{slowfast_forward.1} parent=1 // loop_body
      %s85 = ssub.s32 %s80, 1
      %s86 = ssub.s32 %s80, 2
      %s87 = sadd.s32 %s80, 1
      %s88 = ssub.s32 %s80, %s87
      %p89 = scmp.eq.s32.totalorder %s88, 0
      %s91 = sadd.s32 %s90, 1
      %s92 = scalar_select %p89, %s90, %s91
      %p95 = pneg %p89
      %p96 = scmp.eq.s32.totalorder %s80, 1
      %p97 = por %p95, %p96
      %p98 = scmp.ne.s32.totalorder %s90, %s93
      %p99 = scmp.eq.s32.totalorder %s80, 0
      %p100 = por %p98, %p99
      %p101 = scmp.ne.s32.totalorder %s90, %s93
      %p102 = scmp.eq.s32.totalorder %s85, 1
      %p103 = por %p101, %p102
      %p104 = scmp.ne.s32.totalorder %s93, %s94
      %p105 = scmp.eq.s32.totalorder %s85, 0
      %p106 = por %p104, %p105
      %p107 = scmp.ne.s32.totalorder %s93, %s94
      %p108 = scmp.eq.s32.totalorder %s86, 1
      %p109 = por %p107, %p108
      %p111 = scmp.ne.s32.totalorder %s94, %s110
      %p112 = scmp.eq.s32.totalorder %s86, 0
      %p113 = por %p111, %p112
      %s114 = ssub.s32 %s80, %s87
      %p115 = scmp.eq.s32.totalorder %s114, 0
      %s117 = sadd.s32 %s116, 1
      %s118 = scalar_select %p115, %s116, %s117
      %p121 = pneg %p115
      %p122 = scmp.eq.s32.totalorder %s80, 1
      %p123 = por %p121, %p122
      %p124 = scmp.ne.s32.totalorder %s116, %s119
      %p125 = scmp.eq.s32.totalorder %s80, 0
      %p126 = por %p124, %p125
      %p127 = scmp.ne.s32.totalorder %s116, %s119
      %p128 = scmp.eq.s32.totalorder %s85, 1
      %p129 = por %p127, %p128
      %p130 = scmp.ne.s32.totalorder %s119, %s120
      %p131 = scmp.eq.s32.totalorder %s85, 0
      %p132 = por %p130, %p131
      %p133 = scmp.ne.s32.totalorder %s119, %s120
      %p134 = scmp.eq.s32.totalorder %s86, 1
      %p135 = por %p133, %p134
      %p137 = scmp.ne.s32.totalorder %s120, %s136
      %p138 = scmp.eq.s32.totalorder %s86, 0
      %p139 = por %p137, %p138
      %s140 = ssub.s32 %s80, %s87
      %p141 = scmp.eq.s32.totalorder %s140, 0
      %s143 = sadd.s32 %s142, 1
      %s144 = scalar_select %p141, %s142, %s143
      %p147 = pneg %p141
      %p148 = scmp.eq.s32.totalorder %s80, 1
      %p149 = por %p147, %p148
      %p150 = scmp.ne.s32.totalorder %s142, %s145
      %p151 = scmp.eq.s32.totalorder %s80, 0
      %p152 = por %p150, %p151
      %p153 = scmp.ne.s32.totalorder %s142, %s145
      %p154 = scmp.eq.s32.totalorder %s85, 1
      %p155 = por %p153, %p154
      %p156 = scmp.ne.s32.totalorder %s145, %s146
      %p157 = scmp.eq.s32.totalorder %s85, 0
      %p158 = por %p156, %p157
      %p159 = scmp.ne.s32.totalorder %s145, %s146
      %p160 = scmp.eq.s32.totalorder %s86, 1
      %p161 = por %p159, %p160
      %p163 = scmp.ne.s32.totalorder %s146, %s162
      %p164 = scmp.eq.s32.totalorder %s86, 0
      %p165 = por %p163, %p164
      %s167 = sadd.s32 %s166, 1
      %p170 = scmp.eq.s32.totalorder %s80, 1
      %p171 = scmp.ne.s32.totalorder %s166, %s168
      %p172 = scmp.eq.s32.totalorder %s80, 0
      %p173 = por %p171, %p172
      %p174 = scmp.ne.s32.totalorder %s166, %s168
      %p175 = scmp.eq.s32.totalorder %s85, 1
      %p176 = por %p174, %p175
      %p177 = scmp.ne.s32.totalorder %s168, %s169
      %p178 = scmp.eq.s32.totalorder %s85, 0
      %p179 = por %p177, %p178
      %p180 = scmp.ne.s32.totalorder %s168, %s169
      %p181 = scmp.eq.s32.totalorder %s86, 1
      %p182 = por %p180, %p181
      %p184 = scmp.ne.s32.totalorder %s169, %s183
      %p185 = scmp.eq.s32.totalorder %s86, 0
      %p186 = por %p184, %p185
      %s188 = sadd.s32 %s187, 1
      %p191 = scmp.eq.s32.totalorder %s80, 1
      %p192 = scmp.ne.s32.totalorder %s187, %s189
      %p193 = scmp.eq.s32.totalorder %s80, 0
      %p194 = por %p192, %p193
      %p195 = scmp.ne.s32.totalorder %s187, %s189
      %p196 = scmp.eq.s32.totalorder %s85, 1
      %p197 = por %p195, %p196
      %p198 = scmp.ne.s32.totalorder %s189, %s190
      %p199 = scmp.eq.s32.totalorder %s85, 0
      %p200 = por %p198, %p199
      %p201 = scmp.ne.s32.totalorder %s189, %s190
      %p202 = scmp.eq.s32.totalorder %s86, 1
      %p203 = por %p201, %p202
      %p205 = scmp.ne.s32.totalorder %s190, %s204
      %p206 = scmp.eq.s32.totalorder %s86, 0
      %p207 = por %p205, %p206
      %s209 = sadd.s32 %s208, 1
      %p212 = scmp.eq.s32.totalorder %s80, 1
      %p213 = scmp.ne.s32.totalorder %s208, %s210
      %p214 = scmp.eq.s32.totalorder %s80, 0
      %p215 = por %p213, %p214
      %p216 = scmp.ne.s32.totalorder %s208, %s210
      %p217 = scmp.eq.s32.totalorder %s85, 1
      %p218 = por %p216, %p217
      %p219 = scmp.ne.s32.totalorder %s210, %s211
      %p220 = scmp.eq.s32.totalorder %s85, 0
      %p221 = por %p219, %p220
      %p222 = scmp.ne.s32.totalorder %s210, %s211
      %p223 = scmp.eq.s32.totalorder %s86, 1
      %p224 = por %p222, %p223
      %p226 = scmp.ne.s32.totalorder %s211, %s225
      %p227 = scmp.eq.s32.totalorder %s86, 0
      %p228 = por %p226, %p227
      %s230 = sadd.s32 %s229, 1
      %p233 = scmp.eq.s32.totalorder %s80, 1
      %p234 = scmp.ne.s32.totalorder %s229, %s231
      %p235 = scmp.eq.s32.totalorder %s80, 0
      %p236 = por %p234, %p235
      %p237 = scmp.ne.s32.totalorder %s229, %s231
      %p238 = scmp.eq.s32.totalorder %s85, 1
      %p239 = por %p237, %p238
      %p240 = scmp.ne.s32.totalorder %s231, %s232
      %p241 = scmp.eq.s32.totalorder %s85, 0
      %p242 = por %p240, %p241
      %p243 = scmp.ne.s32.totalorder %s231, %s232
      %p244 = scmp.eq.s32.totalorder %s86, 1
      %p245 = por %p243, %p244
      %p247 = scmp.ne.s32.totalorder %s232, %s246
      %p248 = scmp.eq.s32.totalorder %s86, 0
      %p249 = por %p247, %p248
      %s251 = sadd.s32 %s250, 1
      %p254 = scmp.eq.s32.totalorder %s80, 1
      %p255 = scmp.ne.s32.totalorder %s250, %s252
      %p256 = scmp.eq.s32.totalorder %s80, 0
      %p257 = por %p255, %p256
      %p258 = scmp.ne.s32.totalorder %s250, %s252
      %p259 = scmp.eq.s32.totalorder %s85, 1
      %p260 = por %p258, %p259
      %p261 = scmp.ne.s32.totalorder %s252, %s253
      %p262 = scmp.eq.s32.totalorder %s85, 0
      %p263 = por %p261, %p262
      %p264 = scmp.ne.s32.totalorder %s252, %s253
      %p265 = scmp.eq.s32.totalorder %s86, 1
      %p266 = por %p264, %p265
      %p268 = scmp.ne.s32.totalorder %s253, %s267
      %p269 = scmp.eq.s32.totalorder %s86, 0
      %p270 = por %p268, %p269
      %s272 = sadd.s32 %s271, 1
      %p275 = scmp.eq.s32.totalorder %s80, 1
      %p276 = scmp.ne.s32.totalorder %s271, %s273
      %p277 = scmp.eq.s32.totalorder %s80, 0
      %p278 = por %p276, %p277
      %p279 = scmp.ne.s32.totalorder %s271, %s273
      %p280 = scmp.eq.s32.totalorder %s85, 1
      %p281 = por %p279, %p280
      %p282 = scmp.ne.s32.totalorder %s273, %s274
      %p283 = scmp.eq.s32.totalorder %s85, 0
      %p284 = por %p282, %p283
      %p285 = scmp.ne.s32.totalorder %s273, %s274
      %p286 = scmp.eq.s32.totalorder %s86, 1
      %p287 = por %p285, %p286
      %p289 = scmp.ne.s32.totalorder %s274, %s288
      %p290 = scmp.eq.s32.totalorder %s86, 0
      %p291 = por %p289, %p290
      %s293 = sadd.s32 %s292, 1
      %p296 = scmp.eq.s32.totalorder %s80, 1
      %p297 = scmp.ne.s32.totalorder %s292, %s294
      %p298 = scmp.eq.s32.totalorder %s80, 0
      %p299 = por %p297, %p298
      %p300 = scmp.ne.s32.totalorder %s292, %s294
      %p301 = scmp.eq.s32.totalorder %s85, 1
      %p302 = por %p300, %p301
      %p303 = scmp.ne.s32.totalorder %s294, %s295
      %p304 = scmp.eq.s32.totalorder %s85, 0
      %p305 = por %p303, %p304
      %p306 = scmp.ne.s32.totalorder %s294, %s295
      %p307 = scmp.eq.s32.totalorder %s86, 1
      %p308 = por %p306, %p307
      %p310 = scmp.ne.s32.totalorder %s295, %s309
      %p311 = scmp.eq.s32.totalorder %s86, 0
      %p312 = por %p310, %p311
      %s314 = sadd.s32 %s313, 1
      %p317 = scmp.eq.s32.totalorder %s80, 1
      %p318 = scmp.ne.s32.totalorder %s313, %s315
      %p319 = scmp.eq.s32.totalorder %s80, 0
      %p320 = por %p318, %p319
      %p321 = scmp.ne.s32.totalorder %s313, %s315
      %p322 = scmp.eq.s32.totalorder %s85, 1
      %p323 = por %p321, %p322
      %p324 = scmp.ne.s32.totalorder %s315, %s316
      %p325 = scmp.eq.s32.totalorder %s85, 0
      %p326 = por %p324, %p325
      %p327 = scmp.ne.s32.totalorder %s315, %s316
      %p328 = scmp.eq.s32.totalorder %s86, 1
      %p329 = por %p327, %p328
      %p331 = scmp.ne.s32.totalorder %s316, %s330
      %p332 = scmp.eq.s32.totalorder %s86, 0
      %p333 = por %p331, %p332
      %s335 = sadd.s32 %s334, 1
      %p338 = scmp.eq.s32.totalorder %s80, 1
      %p339 = scmp.ne.s32.totalorder %s334, %s336
      %p340 = scmp.eq.s32.totalorder %s80, 0
      %p341 = por %p339, %p340
      %p342 = scmp.ne.s32.totalorder %s334, %s336
      %p343 = scmp.eq.s32.totalorder %s85, 1
      %p344 = por %p342, %p343
      %p345 = scmp.ne.s32.totalorder %s336, %s337
      %p346 = scmp.eq.s32.totalorder %s85, 0
      %p347 = por %p345, %p346
      %p348 = scmp.ne.s32.totalorder %s336, %s337
      %p349 = scmp.eq.s32.totalorder %s86, 1
      %p350 = por %p348, %p349
      %p352 = scmp.ne.s32.totalorder %s337, %s351
      %p353 = scmp.eq.s32.totalorder %s86, 0
      %p354 = por %p352, %p353
      %s356 = sadd.s32 %s355, 1
      %p359 = scmp.eq.s32.totalorder %s80, 1
      %p360 = scmp.ne.s32.totalorder %s355, %s357
      %p361 = scmp.eq.s32.totalorder %s80, 0
      %p362 = por %p360, %p361
      %p363 = scmp.ne.s32.totalorder %s355, %s357
      %p364 = scmp.eq.s32.totalorder %s85, 1
      %p365 = por %p363, %p364
      %p366 = scmp.ne.s32.totalorder %s357, %s358
      %p367 = scmp.eq.s32.totalorder %s85, 0
      %p368 = por %p366, %p367
      %p369 = scmp.ne.s32.totalorder %s357, %s358
      %p370 = scmp.eq.s32.totalorder %s86, 1
      %p371 = por %p369, %p370
      %p373 = scmp.ne.s32.totalorder %s358, %s372
      %p374 = scmp.eq.s32.totalorder %s86, 0
      %p375 = por %p373, %p374
      %s377 = sadd.s32 %s376, 1
      %p380 = scmp.eq.s32.totalorder %s80, 1
      %p381 = scmp.ne.s32.totalorder %s376, %s378
      %p382 = scmp.eq.s32.totalorder %s80, 0
      %p383 = por %p381, %p382
      %p384 = scmp.ne.s32.totalorder %s376, %s378
      %p385 = scmp.eq.s32.totalorder %s85, 1
      %p386 = por %p384, %p385
      %p387 = scmp.ne.s32.totalorder %s378, %s379
      %p388 = scmp.eq.s32.totalorder %s85, 0
      %p389 = por %p387, %p388
      %p390 = scmp.ne.s32.totalorder %s378, %s379
      %p391 = scmp.eq.s32.totalorder %s86, 1
      %p392 = por %p390, %p391
      %p394 = scmp.ne.s32.totalorder %s379, %s393
      %p395 = scmp.eq.s32.totalorder %s86, 0
      %p396 = por %p394, %p395
      %s398 = sadd.s32 %s397, 1
      %p401 = scmp.eq.s32.totalorder %s80, 1
      %p402 = scmp.ne.s32.totalorder %s397, %s399
      %p403 = scmp.eq.s32.totalorder %s80, 0
      %p404 = por %p402, %p403
      %p405 = scmp.ne.s32.totalorder %s397, %s399
      %p406 = scmp.eq.s32.totalorder %s85, 1
      %p407 = por %p405, %p406
      %p408 = scmp.ne.s32.totalorder %s399, %s400
      %p409 = scmp.eq.s32.totalorder %s85, 0
      %p410 = por %p408, %p409
      %p411 = scmp.ne.s32.totalorder %s399, %s400
      %p412 = scmp.eq.s32.totalorder %s86, 1
      %p413 = por %p411, %p412
      %p415 = scmp.ne.s32.totalorder %s400, %s414
      %p416 = scmp.eq.s32.totalorder %s86, 0
      %p417 = por %p415, %p416
      %s419 = sadd.s32 %s418, 1
      %p422 = scmp.eq.s32.totalorder %s80, 1
      %p423 = scmp.ne.s32.totalorder %s418, %s420
      %p424 = scmp.eq.s32.totalorder %s80, 0
      %p425 = por %p423, %p424
      %p426 = scmp.ne.s32.totalorder %s418, %s420
      %p427 = scmp.eq.s32.totalorder %s85, 1
      %p428 = por %p426, %p427
      %p429 = scmp.ne.s32.totalorder %s420, %s421
      %p430 = scmp.eq.s32.totalorder %s85, 0
      %p431 = por %p429, %p430
      %p432 = scmp.ne.s32.totalorder %s420, %s421
      %p433 = scmp.eq.s32.totalorder %s86, 1
      %p434 = por %p432, %p433
      %p436 = scmp.ne.s32.totalorder %s421, %s435
      %p437 = scmp.eq.s32.totalorder %s86, 0
      %p438 = por %p436, %p437
      %s440 = sadd.s32 %s439, 1
      %p443 = scmp.eq.s32.totalorder %s80, 1
      %p444 = scmp.ne.s32.totalorder %s439, %s441
      %p445 = scmp.eq.s32.totalorder %s80, 0
      %p446 = por %p444, %p445
      %p447 = scmp.ne.s32.totalorder %s439, %s441
      %p448 = scmp.eq.s32.totalorder %s85, 1
      %p449 = por %p447, %p448
      %p450 = scmp.ne.s32.totalorder %s441, %s442
      %p451 = scmp.eq.s32.totalorder %s85, 0
      %p452 = por %p450, %p451
      %p453 = scmp.ne.s32.totalorder %s441, %s442
      %p454 = scmp.eq.s32.totalorder %s86, 1
      %p455 = por %p453, %p454
      %p457 = scmp.ne.s32.totalorder %s442, %s456
      %p458 = scmp.eq.s32.totalorder %s86, 0
      %p459 = por %p457, %p458
      %s461 = sadd.s32 %s460, 1
      %p464 = scmp.eq.s32.totalorder %s80, 1
      %p465 = scmp.ne.s32.totalorder %s460, %s462
      %p466 = scmp.eq.s32.totalorder %s80, 0
      %p467 = por %p465, %p466
      %p468 = scmp.ne.s32.totalorder %s460, %s462
      %p469 = scmp.eq.s32.totalorder %s85, 1
      %p470 = por %p468, %p469
      %p471 = scmp.ne.s32.totalorder %s462, %s463
      %p472 = scmp.eq.s32.totalorder %s85, 0
      %p473 = por %p471, %p472
      %p474 = scmp.ne.s32.totalorder %s462, %s463
      %p475 = scmp.eq.s32.totalorder %s86, 1
      %p476 = por %p474, %p475
      %p478 = scmp.ne.s32.totalorder %s463, %s477
      %p479 = scmp.eq.s32.totalorder %s86, 0
      %p480 = por %p478, %p479
      %s482 = sadd.s32 %s481, 1
      %p485 = scmp.eq.s32.totalorder %s80, 1
      %p486 = scmp.ne.s32.totalorder %s481, %s483
      %p487 = scmp.eq.s32.totalorder %s80, 0
      %p488 = por %p486, %p487
      %p489 = scmp.ne.s32.totalorder %s481, %s483
      %p490 = scmp.eq.s32.totalorder %s85, 1
      %p491 = por %p489, %p490
      %p492 = scmp.ne.s32.totalorder %s483, %s484
      %p493 = scmp.eq.s32.totalorder %s85, 0
      %p494 = por %p492, %p493
      %p495 = scmp.ne.s32.totalorder %s483, %s484
      %p496 = scmp.eq.s32.totalorder %s86, 1
      %p497 = por %p495, %p496
      %p499 = scmp.ne.s32.totalorder %s484, %s498
      %p500 = scmp.eq.s32.totalorder %s86, 0
      %p501 = por %p499, %p500
      %s503 = sadd.s32 %s502, 1
      %p506 = scmp.eq.s32.totalorder %s80, 1
      %p507 = scmp.ne.s32.totalorder %s502, %s504
      %p508 = scmp.eq.s32.totalorder %s80, 0
      %p509 = por %p507, %p508
      %p510 = scmp.ne.s32.totalorder %s502, %s504
      %p511 = scmp.eq.s32.totalorder %s85, 1
      %p512 = por %p510, %p511
      %p513 = scmp.ne.s32.totalorder %s504, %s505
      %p514 = scmp.eq.s32.totalorder %s85, 0
      %p515 = por %p513, %p514
      %p516 = scmp.ne.s32.totalorder %s504, %s505
      %p517 = scmp.eq.s32.totalorder %s86, 1
      %p518 = por %p516, %p517
      %p520 = scmp.ne.s32.totalorder %s505, %s519
      %p521 = scmp.eq.s32.totalorder %s86, 0
      %p522 = por %p520, %p521
      %s524 = sadd.s32 %s523, 1
      %p527 = scmp.eq.s32.totalorder %s80, 1
      %p528 = scmp.ne.s32.totalorder %s523, %s525
      %p529 = scmp.eq.s32.totalorder %s80, 0
      %p530 = por %p528, %p529
      %p531 = scmp.ne.s32.totalorder %s523, %s525
      %p532 = scmp.eq.s32.totalorder %s85, 1
      %p533 = por %p531, %p532
      %p534 = scmp.ne.s32.totalorder %s525, %s526
      %p535 = scmp.eq.s32.totalorder %s85, 0
      %p536 = por %p534, %p535
      %p537 = scmp.ne.s32.totalorder %s525, %s526
      %p538 = scmp.eq.s32.totalorder %s86, 1
      %p539 = por %p537, %p538
      %p541 = scmp.ne.s32.totalorder %s526, %s540
      %p542 = scmp.eq.s32.totalorder %s86, 0
      %p543 = por %p541, %p542
      %s545 = sadd.s32 %s544, 1
      %p548 = scmp.eq.s32.totalorder %s80, 1
      %p549 = scmp.ne.s32.totalorder %s544, %s546
      %p550 = scmp.eq.s32.totalorder %s80, 0
      %p551 = por %p549, %p550
      %p552 = scmp.ne.s32.totalorder %s544, %s546
      %p553 = scmp.eq.s32.totalorder %s85, 1
      %p554 = por %p552, %p553
      %p555 = scmp.ne.s32.totalorder %s546, %s547
      %p556 = scmp.eq.s32.totalorder %s85, 0
      %p557 = por %p555, %p556
      %p558 = scmp.ne.s32.totalorder %s546, %s547
      %p559 = scmp.eq.s32.totalorder %s86, 1
      %p560 = por %p558, %p559
      %p562 = scmp.ne.s32.totalorder %s547, %s561
      %p563 = scmp.eq.s32.totalorder %s86, 0
      %p564 = por %p562, %p563
      %s566 = sadd.s32 %s565, 1
      %p569 = scmp.eq.s32.totalorder %s80, 1
      %p570 = scmp.ne.s32.totalorder %s565, %s567
      %p571 = scmp.eq.s32.totalorder %s80, 0
      %p572 = por %p570, %p571
      %p573 = scmp.ne.s32.totalorder %s565, %s567
      %p574 = scmp.eq.s32.totalorder %s85, 1
      %p575 = por %p573, %p574
      %p576 = scmp.ne.s32.totalorder %s567, %s568
      %p577 = scmp.eq.s32.totalorder %s85, 0
      %p578 = por %p576, %p577
      %p579 = scmp.ne.s32.totalorder %s567, %s568
      %p580 = scmp.eq.s32.totalorder %s86, 1
      %p581 = por %p579, %p580
      %p583 = scmp.ne.s32.totalorder %s568, %s582
      %p584 = scmp.eq.s32.totalorder %s86, 0
      %p585 = por %p583, %p584
      %s587 = sadd.s32 %s586, 1
      %p590 = scmp.eq.s32.totalorder %s80, 1
      %p591 = scmp.ne.s32.totalorder %s586, %s588
      %p592 = scmp.eq.s32.totalorder %s80, 0
      %p593 = por %p591, %p592
      %p594 = scmp.ne.s32.totalorder %s586, %s588
      %p595 = scmp.eq.s32.totalorder %s85, 1
      %p596 = por %p594, %p595
      %p597 = scmp.ne.s32.totalorder %s588, %s589
      %p598 = scmp.eq.s32.totalorder %s85, 0
      %p599 = por %p597, %p598
      %p600 = scmp.ne.s32.totalorder %s588, %s589
      %p601 = scmp.eq.s32.totalorder %s86, 1
      %p602 = por %p600, %p601
      %p604 = scmp.ne.s32.totalorder %s589, %s603
      %p605 = scmp.eq.s32.totalorder %s86, 0
      %p606 = por %p604, %p605
      %s608 = sadd.s32 %s607, 1
      %p611 = scmp.eq.s32.totalorder %s80, 1
      %p612 = scmp.ne.s32.totalorder %s607, %s609
      %p613 = scmp.eq.s32.totalorder %s80, 0
      %p614 = por %p612, %p613
      %p615 = scmp.ne.s32.totalorder %s607, %s609
      %p616 = scmp.eq.s32.totalorder %s85, 1
      %p617 = por %p615, %p616
      %p618 = scmp.ne.s32.totalorder %s609, %s610
      %p619 = scmp.eq.s32.totalorder %s85, 0
      %p620 = por %p618, %p619
      %p621 = scmp.ne.s32.totalorder %s609, %s610
      %p622 = scmp.eq.s32.totalorder %s86, 1
      %p623 = por %p621, %p622
      %p625 = scmp.ne.s32.totalorder %s610, %s624
      %p626 = scmp.eq.s32.totalorder %s86, 0
      %p627 = por %p625, %p626
      %s629 = sadd.s32 %s628, 1
      %p632 = scmp.eq.s32.totalorder %s80, 1
      %p633 = scmp.ne.s32.totalorder %s628, %s630
      %p634 = scmp.eq.s32.totalorder %s80, 0
      %p635 = por %p633, %p634
      %p636 = scmp.ne.s32.totalorder %s628, %s630
      %p637 = scmp.eq.s32.totalorder %s85, 1
      %p638 = por %p636, %p637
      %p639 = scmp.ne.s32.totalorder %s630, %s631
      %p640 = scmp.eq.s32.totalorder %s85, 0
      %p641 = por %p639, %p640
      %p642 = scmp.ne.s32.totalorder %s630, %s631
      %p643 = scmp.eq.s32.totalorder %s86, 1
      %p644 = por %p642, %p643
      %p646 = scmp.ne.s32.totalorder %s631, %s645
      %p647 = scmp.eq.s32.totalorder %s86, 0
      %p648 = por %p646, %p647
      %s650 = sadd.s32 %s649, 1
      %p653 = scmp.eq.s32.totalorder %s80, 1
      %p654 = scmp.ne.s32.totalorder %s649, %s651
      %p655 = scmp.eq.s32.totalorder %s80, 0
      %p656 = por %p654, %p655
      %p657 = scmp.ne.s32.totalorder %s649, %s651
      %p658 = scmp.eq.s32.totalorder %s85, 1
      %p659 = por %p657, %p658
      %p660 = scmp.ne.s32.totalorder %s651, %s652
      %p661 = scmp.eq.s32.totalorder %s85, 0
      %p662 = por %p660, %p661
      %p663 = scmp.ne.s32.totalorder %s651, %s652
      %p664 = scmp.eq.s32.totalorder %s86, 1
      %p665 = por %p663, %p664
      %p667 = scmp.ne.s32.totalorder %s652, %s666
      %p668 = scmp.eq.s32.totalorder %s86, 0
      %p669 = por %p667, %p668
      %s671 = sadd.s32 %s670, 1
      %p674 = scmp.eq.s32.totalorder %s80, 1
      %p675 = scmp.ne.s32.totalorder %s670, %s672
      %p676 = scmp.eq.s32.totalorder %s80, 0
      %p677 = por %p675, %p676
      %p678 = scmp.ne.s32.totalorder %s670, %s672
      %p679 = scmp.eq.s32.totalorder %s85, 1
      %p680 = por %p678, %p679
      %p681 = scmp.ne.s32.totalorder %s672, %s673
      %p682 = scmp.eq.s32.totalorder %s85, 0
      %p683 = por %p681, %p682
      %p684 = scmp.ne.s32.totalorder %s672, %s673
      %p685 = scmp.eq.s32.totalorder %s86, 1
      %p686 = por %p684, %p685
      %p688 = scmp.ne.s32.totalorder %s673, %s687
      %p689 = scmp.eq.s32.totalorder %s86, 0
      %p690 = por %p688, %p689
      %s692 = sadd.s32 %s691, 1
      %p695 = scmp.eq.s32.totalorder %s80, 1
      %p696 = scmp.ne.s32.totalorder %s691, %s693
      %p697 = scmp.eq.s32.totalorder %s80, 0
      %p698 = por %p696, %p697
      %p699 = scmp.ne.s32.totalorder %s691, %s693
      %p700 = scmp.eq.s32.totalorder %s85, 1
      %p701 = por %p699, %p700
      %p702 = scmp.ne.s32.totalorder %s693, %s694
      %p703 = scmp.eq.s32.totalorder %s85, 0
      %p704 = por %p702, %p703
      %p705 = scmp.ne.s32.totalorder %s693, %s694
      %p706 = scmp.eq.s32.totalorder %s86, 1
      %p707 = por %p705, %p706
      %p709 = scmp.ne.s32.totalorder %s694, %s708
      %p710 = scmp.eq.s32.totalorder %s86, 0
      %p711 = por %p709, %p710
      %s713 = sadd.s32 %s712, 1
      %p716 = scmp.eq.s32.totalorder %s80, 1
      %p717 = scmp.ne.s32.totalorder %s712, %s714
      %p718 = scmp.eq.s32.totalorder %s80, 0
      %p719 = por %p717, %p718
      %p720 = scmp.ne.s32.totalorder %s712, %s714
      %p721 = scmp.eq.s32.totalorder %s85, 1
      %p722 = por %p720, %p721
      %p723 = scmp.ne.s32.totalorder %s714, %s715
      %p724 = scmp.eq.s32.totalorder %s85, 0
      %p725 = por %p723, %p724
      %p726 = scmp.ne.s32.totalorder %s714, %s715
      %p727 = scmp.eq.s32.totalorder %s86, 1
      %p728 = por %p726, %p727
      %p730 = scmp.ne.s32.totalorder %s715, %s729
      %p731 = scmp.eq.s32.totalorder %s86, 0
      %p732 = por %p730, %p731
      %s734 = sadd.s32 %s733, 1
      %p737 = scmp.eq.s32.totalorder %s80, 1
      %p738 = scmp.ne.s32.totalorder %s733, %s735
      %p739 = scmp.eq.s32.totalorder %s80, 0
      %p740 = por %p738, %p739
      %p741 = scmp.ne.s32.totalorder %s733, %s735
      %p742 = scmp.eq.s32.totalorder %s85, 1
      %p743 = por %p741, %p742
      %p744 = scmp.ne.s32.totalorder %s735, %s736
      %p745 = scmp.eq.s32.totalorder %s85, 0
      %p746 = por %p744, %p745
      %p747 = scmp.ne.s32.totalorder %s735, %s736
      %p748 = scmp.eq.s32.totalorder %s86, 1
      %p749 = por %p747, %p748
      %p751 = scmp.ne.s32.totalorder %s736, %s750
      %p752 = scmp.eq.s32.totalorder %s86, 0
      %p753 = por %p751, %p752
      %s755 = sadd.s32 %s754, 1
      %p758 = scmp.eq.s32.totalorder %s80, 1
      %p759 = scmp.ne.s32.totalorder %s754, %s756
      %p760 = scmp.eq.s32.totalorder %s80, 0
      %p761 = por %p759, %p760
      %p762 = scmp.ne.s32.totalorder %s754, %s756
      %p763 = scmp.eq.s32.totalorder %s85, 1
      %p764 = por %p762, %p763
      %p765 = scmp.ne.s32.totalorder %s756, %s757
      %p766 = scmp.eq.s32.totalorder %s85, 0
      %p767 = por %p765, %p766
      %p768 = scmp.ne.s32.totalorder %s756, %s757
      %p769 = scmp.eq.s32.totalorder %s86, 1
      %p770 = por %p768, %p769
      %p772 = scmp.ne.s32.totalorder %s757, %s771
      %p773 = scmp.eq.s32.totalorder %s86, 0
      %p774 = por %p772, %p773
      %s776 = sadd.s32 %s775, 1
      %p779 = scmp.eq.s32.totalorder %s80, 1
      %p780 = scmp.ne.s32.totalorder %s775, %s777
      %p781 = scmp.eq.s32.totalorder %s80, 0
      %p782 = por %p780, %p781
      %p783 = scmp.ne.s32.totalorder %s775, %s777
      %p784 = scmp.eq.s32.totalorder %s85, 1
      %p785 = por %p783, %p784
      %p786 = scmp.ne.s32.totalorder %s777, %s778
      %p787 = scmp.eq.s32.totalorder %s85, 0
      %p788 = por %p786, %p787
      %p789 = scmp.ne.s32.totalorder %s777, %s778
      %p790 = scmp.eq.s32.totalorder %s86, 1
      %p791 = por %p789, %p790
      %p793 = scmp.ne.s32.totalorder %s778, %s792
      %p794 = scmp.eq.s32.totalorder %s86, 0
      %p795 = por %p793, %p794
      %s797 = sadd.s32 %s796, 1
      %p800 = scmp.eq.s32.totalorder %s80, 1
      %p801 = scmp.ne.s32.totalorder %s796, %s798
      %p802 = scmp.eq.s32.totalorder %s80, 0
      %p803 = por %p801, %p802
      %p804 = scmp.ne.s32.totalorder %s796, %s798
      %p805 = scmp.eq.s32.totalorder %s85, 1
      %p806 = por %p804, %p805
      %p807 = scmp.ne.s32.totalorder %s798, %s799
      %p808 = scmp.eq.s32.totalorder %s85, 0
      %p809 = por %p807, %p808
      %p810 = scmp.ne.s32.totalorder %s798, %s799
      %p811 = scmp.eq.s32.totalorder %s86, 1
      %p812 = por %p810, %p811
      %p814 = scmp.ne.s32.totalorder %s799, %s813
      %p815 = scmp.eq.s32.totalorder %s86, 0
      %p816 = por %p814, %p815
      %s818 = sadd.s32 %s817, 1
      %p821 = scmp.eq.s32.totalorder %s80, 1
      %p822 = scmp.ne.s32.totalorder %s817, %s819
      %p823 = scmp.eq.s32.totalorder %s80, 0
      %p824 = por %p822, %p823
      %p825 = scmp.ne.s32.totalorder %s817, %s819
      %p826 = scmp.eq.s32.totalorder %s85, 1
      %p827 = por %p825, %p826
      %p828 = scmp.ne.s32.totalorder %s819, %s820
      %p829 = scmp.eq.s32.totalorder %s85, 0
      %p830 = por %p828, %p829
      %p831 = scmp.ne.s32.totalorder %s819, %s820
      %p832 = scmp.eq.s32.totalorder %s86, 1
      %p833 = por %p831, %p832
      %p835 = scmp.ne.s32.totalorder %s820, %s834
      %p836 = scmp.eq.s32.totalorder %s86, 0
      %p837 = por %p835, %p836
      %s838 = ssub.s32 %s80, %s87
      %p839 = scmp.eq.s32.totalorder %s838, 0
      %s841 = sadd.s32 %s840, 1
      %s842 = scalar_select %p839, %s840, %s841
      %p845 = pneg %p839
      %p846 = scmp.eq.s32.totalorder %s80, 1
      %p847 = por %p845, %p846
      %p848 = scmp.ne.s32.totalorder %s840, %s843
      %p849 = scmp.eq.s32.totalorder %s80, 0
      %p850 = por %p848, %p849
      %p851 = scmp.ne.s32.totalorder %s840, %s843
      %p852 = scmp.eq.s32.totalorder %s85, 1
      %p853 = por %p851, %p852
      %p854 = scmp.ne.s32.totalorder %s843, %s844
      %p855 = scmp.eq.s32.totalorder %s85, 0
      %p856 = por %p854, %p855
      %p857 = scmp.ne.s32.totalorder %s843, %s844
      %p858 = scmp.eq.s32.totalorder %s86, 1
      %p859 = por %p857, %p858
      %p861 = scmp.ne.s32.totalorder %s844, %s860
      %p862 = scmp.eq.s32.totalorder %s86, 0
      %p863 = por %p861, %p862
      %p864 = scmp.le.s32.totalorder 1, %s80
      %p865 = scmp.lt.s32.totalorder %s80, 3
      %p866 = pnand %p864, %p865
      %p867 = pneg %p866
      // Predicated region
      $region9: #{slowfast_forward.1} parent=5 // pred_check
        _
      $region10: #{slowfast_forward.1} parent=5 // pred_check_branch
        %869 = sbr.rel (%p866) target = $region12
      $region11: #{slowfast_forward.1} parent=5 // pred_region
        %s870 = ssub.s32 %s80, 1
        // Predicated region
        $region13: #{slowfast_forward.1} parent=11 // pred_check
          %p871 = pneg %p179
        $region14: #{slowfast_forward.1} parent=11 // pred_check_branch
          %873 = sbr.rel (%p871) target = $region16
        $region15: #{slowfast_forward.1} parent=11 // pred_region
          _
        $region16: #{slowfast_forward.1} parent=11 // pred_fallthru
          _
        // Predicated region
        $region17: #{slowfast_forward.1} parent=11 // pred_check
          %p874 = pneg %p200
        $region18: #{slowfast_forward.1} parent=11 // pred_check_branch
          %876 = sbr.rel (%p874) target = $region20
        $region19: #{slowfast_forward.1} parent=11 // pred_region
          _
        $region20: #{slowfast_forward.1} parent=11 // pred_fallthru
          _
        // Predicated region
        $region21: #{slowfast_forward.1} parent=11 // pred_check
          %p877 = pneg %p221
        $region22: #{slowfast_forward.1} parent=11 // pred_check_branch
          %879 = sbr.rel (%p877) target = $region24
        $region23: #{slowfast_forward.1} parent=11 // pred_region
          _
        $region24: #{slowfast_forward.1} parent=11 // pred_fallthru
          _
        // Predicated region
        $region25: #{slowfast_forward.1} parent=11 // pred_check
          %p880 = pneg %p242
        $region26: #{slowfast_forward.1} parent=11 // pred_check_branch
          %882 = sbr.rel (%p880) target = $region28
        $region27: #{slowfast_forward.1} parent=11 // pred_region
          _
        $region28: #{slowfast_forward.1} parent=11 // pred_fallthru
          _
        // Predicated region
        $region29: #{slowfast_forward.1} parent=11 // pred_check
          %p883 = pneg %p263
        $region30: #{slowfast_forward.1} parent=11 // pred_check_branch
          %885 = sbr.rel (%p883) target = $region32
        $region31: #{slowfast_forward.1} parent=11 // pred_region
          _
        $region32: #{slowfast_forward.1} parent=11 // pred_fallthru
          _
        // Predicated region
        $region33: #{slowfast_forward.1} parent=11 // pred_check
          %p886 = pneg %p284
        $region34: #{slowfast_forward.1} parent=11 // pred_check_branch
          %888 = sbr.rel (%p886) target = $region36
        $region35: #{slowfast_forward.1} parent=11 // pred_region
          _
        $region36: #{slowfast_forward.1} parent=11 // pred_fallthru
          _
        // Predicated region
        $region37: #{slowfast_forward.1} parent=11 // pred_check
          %p889 = pneg %p305
        $region38: #{slowfast_forward.1} parent=11 // pred_check_branch
          %891 = sbr.rel (%p889) target = $region40
        $region39: #{slowfast_forward.1} parent=11 // pred_region
          _
        $region40: #{slowfast_forward.1} parent=11 // pred_fallthru
          _
        // Predicated region
        $region41: #{slowfast_forward.1} parent=11 // pred_check
          %p892 = pneg %p326
        $region42: #{slowfast_forward.1} parent=11 // pred_check_branch
          %894 = sbr.rel (%p892) target = $region44
        $region43: #{slowfast_forward.1} parent=11 // pred_region
          _
        $region44: #{slowfast_forward.1} parent=11 // pred_fallthru
          _
        // Predicated region
        $region45: #{slowfast_forward.1} parent=11 // pred_check
          %p895 = pneg %p347
        $region46: #{slowfast_forward.1} parent=11 // pred_check_branch
          %897 = sbr.rel (%p895) target = $region48
        $region47: #{slowfast_forward.1} parent=11 // pred_region
          _
        $region48: #{slowfast_forward.1} parent=11 // pred_fallthru
          _
        // Predicated region
        $region49: #{slowfast_forward.1} parent=11 // pred_check
          %p898 = pneg %p368
        $region50: #{slowfast_forward.1} parent=11 // pred_check_branch
          %900 = sbr.rel (%p898) target = $region52
        $region51: #{slowfast_forward.1} parent=11 // pred_region
          _
        $region52: #{slowfast_forward.1} parent=11 // pred_fallthru
          _
        // Predicated region
        $region53: #{slowfast_forward.1} parent=11 // pred_check
          %p901 = pneg %p389
        $region54: #{slowfast_forward.1} parent=11 // pred_check_branch
          %903 = sbr.rel (%p901) target = $region56
        $region55: #{slowfast_forward.1} parent=11 // pred_region
          _
        $region56: #{slowfast_forward.1} parent=11 // pred_fallthru
          _
        // Predicated region
        $region57: #{slowfast_forward.1} parent=11 // pred_check
          %p904 = pneg %p410
        $region58: #{slowfast_forward.1} parent=11 // pred_check_branch
          %906 = sbr.rel (%p904) target = $region60
        $region59: #{slowfast_forward.1} parent=11 // pred_region
          _
        $region60: #{slowfast_forward.1} parent=11 // pred_fallthru
          _
        // Predicated region
        $region61: #{slowfast_forward.1} parent=11 // pred_check
          %p907 = pneg %p431
        $region62: #{slowfast_forward.1} parent=11 // pred_check_branch
          %909 = sbr.rel (%p907) target = $region64
        $region63: #{slowfast_forward.1} parent=11 // pred_region
          _
        $region64: #{slowfast_forward.1} parent=11 // pred_fallthru
          _
        // Predicated region
        $region65: #{slowfast_forward.1} parent=11 // pred_check
          %p910 = pneg %p452
        $region66: #{slowfast_forward.1} parent=11 // pred_check_branch
          %912 = sbr.rel (%p910) target = $region68
        $region67: #{slowfast_forward.1} parent=11 // pred_region
          _
        $region68: #{slowfast_forward.1} parent=11 // pred_fallthru
          _
        // Predicated region
        $region69: #{slowfast_forward.1} parent=11 // pred_check
          %p913 = pneg %p473
        $region70: #{slowfast_forward.1} parent=11 // pred_check_branch
          %915 = sbr.rel (%p913) target = $region72
        $region71: #{slowfast_forward.1} parent=11 // pred_region
          _
        $region72: #{slowfast_forward.1} parent=11 // pred_fallthru
          _
        // Predicated region
        $region73: #{slowfast_forward.1} parent=11 // pred_check
          %p916 = pneg %p494
        $region74: #{slowfast_forward.1} parent=11 // pred_check_branch
          %918 = sbr.rel (%p916) target = $region76
        $region75: #{slowfast_forward.1} parent=11 // pred_region
          _
        $region76: #{slowfast_forward.1} parent=11 // pred_fallthru
          _
        // Predicated region
        $region77: #{slowfast_forward.1} parent=11 // pred_check
          %p919 = pneg %p515
        $region78: #{slowfast_forward.1} parent=11 // pred_check_branch
          %921 = sbr.rel (%p919) target = $region80
        $region79: #{slowfast_forward.1} parent=11 // pred_region
          _
        $region80: #{slowfast_forward.1} parent=11 // pred_fallthru
          _
        // Predicated region
        $region81: #{slowfast_forward.1} parent=11 // pred_check
          %p922 = pneg %p536
        $region82: #{slowfast_forward.1} parent=11 // pred_check_branch
          %924 = sbr.rel (%p922) target = $region84
        $region83: #{slowfast_forward.1} parent=11 // pred_region
          _
        $region84: #{slowfast_forward.1} parent=11 // pred_fallthru
          _
        // Predicated region
        $region85: #{slowfast_forward.1} parent=11 // pred_check
          %p925 = pneg %p557
        $region86: #{slowfast_forward.1} parent=11 // pred_check_branch
          %927 = sbr.rel (%p925) target = $region88
        $region87: #{slowfast_forward.1} parent=11 // pred_region
          _
        $region88: #{slowfast_forward.1} parent=11 // pred_fallthru
          _
        // Predicated region
        $region89: #{slowfast_forward.1} parent=11 // pred_check
          %p928 = pneg %p578
        $region90: #{slowfast_forward.1} parent=11 // pred_check_branch
          %930 = sbr.rel (%p928) target = $region92
        $region91: #{slowfast_forward.1} parent=11 // pred_region
          _
        $region92: #{slowfast_forward.1} parent=11 // pred_fallthru
          _
        // Predicated region
        $region93: #{slowfast_forward.1} parent=11 // pred_check
          %p931 = pneg %p599
        $region94: #{slowfast_forward.1} parent=11 // pred_check_branch
          %933 = sbr.rel (%p931) target = $region96
        $region95: #{slowfast_forward.1} parent=11 // pred_region
          _
        $region96: #{slowfast_forward.1} parent=11 // pred_fallthru
          _
        // Predicated region
        $region97: #{slowfast_forward.1} parent=11 // pred_check
          %p934 = pneg %p620
        $region98: #{slowfast_forward.1} parent=11 // pred_check_branch
          %936 = sbr.rel (%p934) target = $region100
        $region99: #{slowfast_forward.1} parent=11 // pred_region
          _
        $region100: #{slowfast_forward.1} parent=11 // pred_fallthru
          _
        // Predicated region
        $region101: #{slowfast_forward.1} parent=11 // pred_check
          %p937 = pneg %p641
        $region102: #{slowfast_forward.1} parent=11 // pred_check_branch
          %939 = sbr.rel (%p937) target = $region104
        $region103: #{slowfast_forward.1} parent=11 // pred_region
          _
        $region104: #{slowfast_forward.1} parent=11 // pred_fallthru
          _
        // Predicated region
        $region105: #{slowfast_forward.1} parent=11 // pred_check
          %p940 = pneg %p662
        $region106: #{slowfast_forward.1} parent=11 // pred_check_branch
          %942 = sbr.rel (%p940) target = $region108
        $region107: #{slowfast_forward.1} parent=11 // pred_region
          _
        $region108: #{slowfast_forward.1} parent=11 // pred_fallthru
          _
        // Predicated region
        $region109: #{slowfast_forward.1} parent=11 // pred_check
          %p943 = pneg %p683
        $region110: #{slowfast_forward.1} parent=11 // pred_check_branch
          %945 = sbr.rel (%p943) target = $region112
        $region111: #{slowfast_forward.1} parent=11 // pred_region
          _
        $region112: #{slowfast_forward.1} parent=11 // pred_fallthru
          _
        // Predicated region
        $region113: #{slowfast_forward.1} parent=11 // pred_check
          %p946 = pneg %p704
        $region114: #{slowfast_forward.1} parent=11 // pred_check_branch
          %948 = sbr.rel (%p946) target = $region116
        $region115: #{slowfast_forward.1} parent=11 // pred_region
          _
        $region116: #{slowfast_forward.1} parent=11 // pred_fallthru
          _
        // Predicated region
        $region117: #{slowfast_forward.1} parent=11 // pred_check
          %p949 = pneg %p725
        $region118: #{slowfast_forward.1} parent=11 // pred_check_branch
          %951 = sbr.rel (%p949) target = $region120
        $region119: #{slowfast_forward.1} parent=11 // pred_region
          _
        $region120: #{slowfast_forward.1} parent=11 // pred_fallthru
          _
        // Predicated region
        $region121: #{slowfast_forward.1} parent=11 // pred_check
          %p952 = pneg %p746
        $region122: #{slowfast_forward.1} parent=11 // pred_check_branch
          %954 = sbr.rel (%p952) target = $region124
        $region123: #{slowfast_forward.1} parent=11 // pred_region
          _
        $region124: #{slowfast_forward.1} parent=11 // pred_fallthru
          _
        // Predicated region
        $region125: #{slowfast_forward.1} parent=11 // pred_check
          %p955 = pneg %p767
        $region126: #{slowfast_forward.1} parent=11 // pred_check_branch
          %957 = sbr.rel (%p955) target = $region128
        $region127: #{slowfast_forward.1} parent=11 // pred_region
          _
        $region128: #{slowfast_forward.1} parent=11 // pred_fallthru
          _
        // Predicated region
        $region129: #{slowfast_forward.1} parent=11 // pred_check
          %p958 = pneg %p788
        $region130: #{slowfast_forward.1} parent=11 // pred_check_branch
          %960 = sbr.rel (%p958) target = $region132
        $region131: #{slowfast_forward.1} parent=11 // pred_region
          _
        $region132: #{slowfast_forward.1} parent=11 // pred_fallthru
          _
        // Predicated region
        $region133: #{slowfast_forward.1} parent=11 // pred_check
          %p961 = pneg %p809
        $region134: #{slowfast_forward.1} parent=11 // pred_check_branch
          %963 = sbr.rel (%p961) target = $region136
        $region135: #{slowfast_forward.1} parent=11 // pred_region
          _
        $region136: #{slowfast_forward.1} parent=11 // pred_fallthru
          _
        // Predicated region
        $region137: #{slowfast_forward.1} parent=11 // pred_check
          %p964 = pneg %p830
        $region138: #{slowfast_forward.1} parent=11 // pred_check_branch
          %966 = sbr.rel (%p964) target = $region140
        $region139: #{slowfast_forward.1} parent=11 // pred_region
          _
        $region140: #{slowfast_forward.1} parent=11 // pred_fallthru
          _
      $region12: #{slowfast_forward.1} parent=5 // pred_fallthru
        _
      %p967 = scmp.lt.s32.totalorder %s80, 2
      // Predicated region
      $region141: #{slowfast_forward.1} parent=5 // pred_check
        %p968 = pneg %p967
      $region142: #{slowfast_forward.1} parent=5 // pred_check_branch
        %970 = sbr.rel (%p968) target = $region144
      $region143: #{slowfast_forward.1} parent=5 // pred_region
        // Predicated region
        $region145: #{slowfast_forward.1} parent=143 // pred_check
          %p971 = pneg %p100
        $region146: #{slowfast_forward.1} parent=143 // pred_check_branch
          %973 = sbr.rel (%p971) target = $region148
        $region147: #{slowfast_forward.1} parent=143 // pred_region
          %p974 = scmp.lt.s32.totalorder %s80, 1
          %s975 = scalar_select %p974, %s80, 1
          %s976 = smul.addr %s975, 16
          %s977 = smul.addr %s976, 4
          %s978 = scalar_lea.vmem %s1, %s977
        $region148: #{slowfast_forward.1} parent=143 // pred_fallthru
          _
        // Predicated region
        $region149: #{slowfast_forward.1} parent=143 // pred_check
          %p979 = pneg %p126
        $region150: #{slowfast_forward.1} parent=143 // pred_check_branch
          %981 = sbr.rel (%p979) target = $region152
        $region151: #{slowfast_forward.1} parent=143 // pred_region
          %p982 = scmp.lt.s32.totalorder %s80, 1
          %s983 = scalar_select %p982, %s80, 1
          %s984 = smul.addr %s983, 16
          %s985 = smul.addr %s984, 4
          %s986 = scalar_lea.vmem %s3, %s985
        $region152: #{slowfast_forward.1} parent=143 // pred_fallthru
          _
        // Predicated region
        $region153: #{slowfast_forward.1} parent=143 // pred_check
          %p987 = pneg %p152
        $region154: #{slowfast_forward.1} parent=143 // pred_check_branch
          %989 = sbr.rel (%p987) target = $region156
        $region155: #{slowfast_forward.1} parent=143 // pred_region
          %p990 = scmp.lt.s32.totalorder %s80, 1
          %s991 = scalar_select %p990, %s80, 1
          %s992 = smul.addr %s991, 48
          %s993 = smul.addr %s992, 4
          %s994 = scalar_lea.vmem %s5, %s993
        $region156: #{slowfast_forward.1} parent=143 // pred_fallthru
          _
      $region144: #{slowfast_forward.1} parent=5 // pred_fallthru
        _
      %p995 = scmp.le.s32.totalorder 1, %s80
      %p996 = scmp.lt.s32.totalorder %s80, 3
      %p997 = pnand %p995, %p996
      %p998 = pneg %p997
      // Predicated region
      $region157: #{slowfast_forward.1} parent=5 // pred_check
        _
      $region158: #{slowfast_forward.1} parent=5 // pred_check_branch
        %1000 = sbr.rel (%p997) target = $region160
      $region159: #{slowfast_forward.1} parent=5 // pred_region
        %s1001 = ssub.s32 %s80, 1
        %p1002 = scmp.lt.s32.totalorder %s85, 1
        %s1003 = scalar_select %p1002, %s85, 1
        %s1004 = smul.addr %s1003, 16
        %s1005 = smul.addr %s1004, 4
        %s1006 = scalar_lea.vmem %s1, %s1005
        %p1007 = pneg %p106
        %p1008 = pneg %p103
        %p1009 = scmp.lt.s32.totalorder %s85, 1
        %s1010 = scalar_select %p1009, %s85, 1
        %s1011 = smul.addr %s1010, 16
        %s1012 = smul.addr %s1011, 4
        %s1013 = scalar_lea.vmem %s3, %s1012
        %p1014 = pneg %p132
        %p1015 = pneg %p129
        %p1016 = scmp.lt.s32.totalorder %s85, 1
        %s1017 = scalar_select %p1016, %s85, 1
        %s1018 = smul.addr %s1017, 48
        %s1019 = smul.addr %s1018, 4
        %s1020 = scalar_lea.vmem %s5, %s1019
        %p1021 = pneg %p158
        %p1022 = pneg %p155
        %p1023 = pneg %p179
        %p1024 = pneg %p176
        %p1025 = pneg %p200
        %p1026 = pneg %p197
        %p1027 = pneg %p221
        %p1028 = pneg %p218
        %p1029 = pneg %p242
        %p1030 = pneg %p239
        %p1031 = pneg %p263
        %p1032 = pneg %p260
        %p1033 = pneg %p284
        %p1034 = pneg %p281
        %p1035 = pneg %p305
        %p1036 = pneg %p302
        %p1037 = pneg %p326
        %p1038 = pneg %p323
        %p1039 = pneg %p347
        %p1040 = pneg %p344
        %p1041 = pneg %p368
        %p1042 = pneg %p365
        %p1043 = pneg %p389
        %p1044 = pneg %p386
        %p1045 = pneg %p410
        %p1046 = pneg %p407
        %p1047 = pneg %p431
        %p1048 = pneg %p428
        %p1049 = pneg %p452
        %p1050 = pneg %p449
        %p1051 = pneg %p473
        %p1052 = pneg %p470
        %p1053 = pneg %p494
        %p1054 = pneg %p491
        %p1055 = pneg %p515
        %p1056 = pneg %p512
        %p1057 = pneg %p536
        %p1058 = pneg %p533
        %p1059 = pneg %p557
        %p1060 = pneg %p554
        %p1061 = pneg %p578
        %p1062 = pneg %p575
        %p1063 = pneg %p599
        %p1064 = pneg %p596
        %p1065 = pneg %p620
        %p1066 = pneg %p617
        %p1067 = pneg %p641
        %p1068 = pneg %p638
        %p1069 = pneg %p662
        %p1070 = pneg %p659
        %p1071 = pneg %p683
        %p1072 = pneg %p680
        %p1073 = pneg %p704
        %p1074 = pneg %p701
        %p1075 = pneg %p725
        %p1076 = pneg %p722
        %p1077 = pneg %p746
        %p1078 = pneg %p743
        %p1079 = pneg %p767
        %p1080 = pneg %p764
        %p1081 = pneg %p788
        %p1082 = pneg %p785
        %p1083 = pneg %p809
        %p1084 = pneg %p806
        %p1085 = pneg %p830
        %p1086 = pneg %p827
        %p1087 = pneg %p856
        %p1088 = pneg %p853
        %s1089 = sand.u32 %s843, 1
        %s1090 = scalar_lea.sflag [#allocation3], %s1089
        %s1091 = sand.u32 %s843, 1
        %s1092 = scalar_lea.vmem [#allocation2], %s1091
        %p1093 = scmp.lt.s32.totalorder %s85, 1
        %s1094 = scalar_select %p1093, %s85, 1
        %s1095 = smul.addr %s1094, 16
        %s1096 = smul.addr %s1095, 4
        %s1097 = scalar_lea.vmem %s1, %s1096
        %p1098 = scmp.lt.s32.totalorder %s85, 1
        %s1099 = scalar_select %p1098, %s85, 1
        %s1100 = smul.addr %s1099, 16
        %s1101 = smul.addr %s1100, 4
        %s1102 = scalar_lea.vmem %s3, %s1101
        %p1103 = scmp.lt.s32.totalorder %s85, 1
        %s1104 = scalar_select %p1103, %s85, 1
        %s1105 = smul.addr %s1104, 48
        %s1106 = smul.addr %s1105, 4
        %s1107 = scalar_lea.vmem %s5, %s1106
        %v1109 = vld [vmem:[%s1097] sm:$0xf]
        %v1110 = vld [vmem:[%s1097 + $0x4] sm:$0xf]
        %v1111 = vld [vmem:[%s1097 + $0x8] sm:$0xf]
        %v1112 = vld [vmem:[%s1097 + $0xc] sm:$0xf]
        %v1113 = vld [vmem:[%s1097 + $0x10] sm:$0xf]
        %v1114 = vld [vmem:[%s1097 + $0x14] sm:$0xf]
        %v1115 = vld [vmem:[%s1097 + $0x18] sm:$0xf]
        %v1116 = vld [vmem:[%s1097 + $0x1c] sm:$0xf]
        %v1117 = vld [vmem:[%s1097 + $0x20] sm:$0xf]
        %v1118 = vld [vmem:[%s1097 + $0x24] sm:$0xf]
        %v1119 = vld [vmem:[%s1097 + $0x28] sm:$0xf]
        %v1120 = vld [vmem:[%s1097 + $0x2c] sm:$0xf]
        %v1121 = vld [vmem:[%s1097 + $0x30] sm:$0xf]
        %v1122 = vld [vmem:[%s1097 + $0x34] sm:$0xf]
        %v1123 = vld [vmem:[%s1097 + $0x38] sm:$0xf]
        %v1124 = vld [vmem:[%s1097 + $0x3c] sm:$0xf]
        %v1125 = vld [vmem:[%s7] sm:$0xf]
        %v1126 = vld [vmem:[%s9] sm:$0x1]
        %v1128 = vperm.slane %v1126, 0
        %v1146 = vunpack.c.l.b16 %v1109
        %v1147 = vunpack.c.l.b16 %v1110
        %v1148 = vunpack.c.l.b16 %v1111
        %v1149 = vunpack.c.l.b16 %v1112
        %v1150 = vunpack.c.l.b16 %v1113
        %v1151 = vunpack.c.l.b16 %v1114
        %v1152 = vunpack.c.l.b16 %v1115
        %v1153 = vunpack.c.l.b16 %v1116
        %v1154 = vunpack.c.l.b16 %v1117
        %v1155 = vunpack.c.l.b16 %v1118
        %v1156 = vunpack.c.l.b16 %v1119
        %v1157 = vunpack.c.l.b16 %v1120
        %v1158 = vunpack.c.l.b16 %v1121
        %v1159 = vunpack.c.l.b16 %v1122
        %v1160 = vunpack.c.l.b16 %v1123
        %v1161 = vunpack.c.l.b16 %v1124
        %v1162 = vpack.c.b16 %v1147, %v1146
        %v1163 = vpack.c.b16 %v1149, %v1148
        %v1164 = vpack.c.b16 %v1151, %v1150
        %v1165 = vpack.c.b16 %v1153, %v1152
        %v1166 = vpack.c.b16 %v1155, %v1154
        %v1167 = vpack.c.b16 %v1157, %v1156
        %v1168 = vpack.c.b16 %v1159, %v1158
        %v1169 = vpack.c.b16 %v1161, %v1160
        %vm1170 = vcmask 64512
        %v1172 = vsel %vm1170, %v1162, 0
        %v1175 = vsel %vm1170, %v1163, 0
        %v1178 = vsel %vm1170, %v1164, 0
        %v1181 = vsel %vm1170, %v1165, 0
        %v1184 = vsel %vm1170, %v1166, 0
        %v1187 = vsel %vm1170, %v1167, 0
        %v1190 = vsel %vm1170, %v1168, 0
        %v1193 = vsel %vm1170, %v1169, 0
        %vm1195 = vcmask 1043456
        %v1197 = vsel %vm1195, %v1125, 0
        %1199 = vmatpush.bf16.msra.mxu0 0
        %1200 = vmatpush.bf16.msra.mxu0 0
        %1201 = vmatpush.bf16.msra.mxu0 0
        %1202 = vmatpush.bf16.msra.mxu0 0
        %1203 = vmatpush.bf16.msra.mxu0 0
        %1204 = vmatpush.bf16.msra.mxu0 0
        %1205 = vmatpush.bf16.msra.mxu0 0
        %1206 = vmatpush.bf16.msra.mxu0 %v1197
        %1207 = vmatmul.bf16.gmra.mxu0 %v1172
        %v1208 = vpop.f32.mrf.mxu0
        %v1209 = vadd.f32 %v1128, %v1208
        %v1210 = vpop.f32.mrf.mxu0
        %v1211 = vadd.f32 %v1128, %v1210
        %1212 = vmatmul.bf16.gmra.mxu0 %v1175
        %v1213 = vpop.f32.mrf.mxu0
        %v1214 = vadd.f32 %v1128, %v1213
        %v1215 = vpop.f32.mrf.mxu0
        %v1216 = vadd.f32 %v1128, %v1215
        %1217 = vmatmul.bf16.gmra.mxu0 %v1178
        %v1218 = vpop.f32.mrf.mxu0
        %v1219 = vadd.f32 %v1128, %v1218
        %v1220 = vpop.f32.mrf.mxu0
        %v1221 = vadd.f32 %v1128, %v1220
        %1222 = vmatmul.bf16.gmra.mxu0 %v1181
        %v1223 = vpop.f32.mrf.mxu0
        %v1224 = vadd.f32 %v1128, %v1223
        %v1225 = vpop.f32.mrf.mxu0
        %v1226 = vadd.f32 %v1128, %v1225
        %1227 = vmatmul.bf16.gmra.mxu0 %v1184
        %v1228 = vpop.f32.mrf.mxu0
        %v1229 = vadd.f32 %v1128, %v1228
        %v1230 = vpop.f32.mrf.mxu0
        %v1231 = vadd.f32 %v1128, %v1230
        %1232 = vmatmul.bf16.gmra.mxu0 %v1187
        %v1233 = vpop.f32.mrf.mxu0
        %v1234 = vadd.f32 %v1128, %v1233
        %v1235 = vpop.f32.mrf.mxu0
        %v1236 = vadd.f32 %v1128, %v1235
        %1237 = vmatmul.bf16.gmra.mxu0 %v1190
        %v1238 = vpop.f32.mrf.mxu0
        %v1239 = vadd.f32 %v1128, %v1238
        %v1240 = vpop.f32.mrf.mxu0
        %v1241 = vadd.f32 %v1128, %v1240
        %1242 = vmatmul.bf16.gmra.mxu0 %v1193
        %v1243 = vpop.f32.mrf.mxu0
        %v1244 = vadd.f32 %v1128, %v1243
        %v1245 = vpop.f32.mrf.mxu0
        %v1246 = vadd.f32 %v1128, %v1245
        %1247 = vdwg.mxu0
        %v1248 = vmax.f32 %v1209, 0.0
        %v1249 = vmax.f32 %v1211, 0.0
        %v1250 = vmax.f32 %v1214, 0.0
        %v1251 = vmax.f32 %v1216, 0.0
        %v1252 = vmax.f32 %v1219, 0.0
        %v1253 = vmax.f32 %v1221, 0.0
        %v1254 = vmax.f32 %v1224, 0.0
        %v1255 = vmax.f32 %v1226, 0.0
        %v1256 = vmax.f32 %v1229, 0.0
        %v1257 = vmax.f32 %v1231, 0.0
        %v1258 = vmax.f32 %v1234, 0.0
        %v1259 = vmax.f32 %v1236, 0.0
        %v1260 = vmax.f32 %v1239, 0.0
        %v1261 = vmax.f32 %v1241, 0.0
        %v1262 = vmax.f32 %v1244, 0.0
        %v1263 = vmax.f32 %v1246, 0.0
        %v1264 = vld [vmem:[%s1102] sm:$0xf]
        %v1265 = vld [vmem:[%s1102 + $0x4] sm:$0xf]
        %v1266 = vld [vmem:[%s1102 + $0x8] sm:$0xf]
        %v1267 = vld [vmem:[%s1102 + $0xc] sm:$0xf]
        %v1268 = vld [vmem:[%s1102 + $0x10] sm:$0xf]
        %v1269 = vld [vmem:[%s1102 + $0x14] sm:$0xf]
        %v1270 = vld [vmem:[%s1102 + $0x18] sm:$0xf]
        %v1271 = vld [vmem:[%s1102 + $0x1c] sm:$0xf]
        %v1272 = vld [vmem:[%s1102 + $0x20] sm:$0xf]
        %v1273 = vld [vmem:[%s1102 + $0x24] sm:$0xf]
        %v1274 = vld [vmem:[%s1102 + $0x28] sm:$0xf]
        %v1275 = vld [vmem:[%s1102 + $0x2c] sm:$0xf]
        %v1276 = vld [vmem:[%s1102 + $0x30] sm:$0xf]
        %v1277 = vld [vmem:[%s1102 + $0x34] sm:$0xf]
        %v1278 = vld [vmem:[%s1102 + $0x38] sm:$0xf]
        %v1279 = vld [vmem:[%s1102 + $0x3c] sm:$0xf]
        %v1280 = vld [vmem:[%s11] sm:$0xf]
        %v1281 = vld [vmem:[%s13] sm:$0x1]
        %v1283 = vperm.slane %v1281, 0
        %v1301 = vunpack.c.l.b16 %v1264
        %v1302 = vunpack.c.l.b16 %v1265
        %v1303 = vunpack.c.l.b16 %v1266
        %v1304 = vunpack.c.l.b16 %v1267
        %v1305 = vunpack.c.l.b16 %v1268
        %v1306 = vunpack.c.l.b16 %v1269
        %v1307 = vunpack.c.l.b16 %v1270
        %v1308 = vunpack.c.l.b16 %v1271
        %v1309 = vunpack.c.l.b16 %v1272
        %v1310 = vunpack.c.l.b16 %v1273
        %v1311 = vunpack.c.l.b16 %v1274
        %v1312 = vunpack.c.l.b16 %v1275
        %v1313 = vunpack.c.l.b16 %v1276
        %v1314 = vunpack.c.l.b16 %v1277
        %v1315 = vunpack.c.l.b16 %v1278
        %v1316 = vunpack.c.l.b16 %v1279
        %v1317 = vpack.c.b16 %v1302, %v1301
        %v1318 = vpack.c.b16 %v1304, %v1303
        %v1319 = vpack.c.b16 %v1306, %v1305
        %v1320 = vpack.c.b16 %v1308, %v1307
        %v1321 = vpack.c.b16 %v1310, %v1309
        %v1322 = vpack.c.b16 %v1312, %v1311
        %v1323 = vpack.c.b16 %v1314, %v1313
        %v1324 = vpack.c.b16 %v1316, %v1315
        %v1326 = vsel %vm1170, %v1317, 0
        %v1329 = vsel %vm1170, %v1318, 0
        %v1332 = vsel %vm1170, %v1319, 0
        %v1335 = vsel %vm1170, %v1320, 0
        %v1338 = vsel %vm1170, %v1321, 0
        %v1341 = vsel %vm1170, %v1322, 0
        %v1344 = vsel %vm1170, %v1323, 0
        %v1347 = vsel %vm1170, %v1324, 0
        %v1350 = vsel %vm1195, %v1280, 0
        %1352 = vmatpush.bf16.msra.mxu0 0
        %1353 = vmatpush.bf16.msra.mxu0 0
        %1354 = vmatpush.bf16.msra.mxu0 0
        %1355 = vmatpush.bf16.msra.mxu0 0
        %1356 = vmatpush.bf16.msra.mxu0 0
        %1357 = vmatpush.bf16.msra.mxu0 0
        %1358 = vmatpush.bf16.msra.mxu0 0
        %1359 = vmatpush.bf16.msra.mxu0 %v1350
        %1360 = vmatmul.bf16.gmra.mxu0 %v1326
        %v1361 = vpop.f32.mrf.mxu0
        %v1362 = vadd.f32 %v1283, %v1361
        %v1363 = vpop.f32.mrf.mxu0
        %v1364 = vadd.f32 %v1283, %v1363
        %1365 = vmatmul.bf16.gmra.mxu0 %v1329
        %v1366 = vpop.f32.mrf.mxu0
        %v1367 = vadd.f32 %v1283, %v1366
        %v1368 = vpop.f32.mrf.mxu0
        %v1369 = vadd.f32 %v1283, %v1368
        %1370 = vmatmul.bf16.gmra.mxu0 %v1332
        %v1371 = vpop.f32.mrf.mxu0
        %v1372 = vadd.f32 %v1283, %v1371
        %v1373 = vpop.f32.mrf.mxu0
        %v1374 = vadd.f32 %v1283, %v1373
        %1375 = vmatmul.bf16.gmra.mxu0 %v1335
        %v1376 = vpop.f32.mrf.mxu0
        %v1377 = vadd.f32 %v1283, %v1376
        %v1378 = vpop.f32.mrf.mxu0
        %v1379 = vadd.f32 %v1283, %v1378
        %1380 = vmatmul.bf16.gmra.mxu0 %v1338
        %v1381 = vpop.f32.mrf.mxu0
        %v1382 = vadd.f32 %v1283, %v1381
        %v1383 = vpop.f32.mrf.mxu0
        %v1384 = vadd.f32 %v1283, %v1383
        %1385 = vmatmul.bf16.gmra.mxu0 %v1341
        %v1386 = vpop.f32.mrf.mxu0
        %v1387 = vadd.f32 %v1283, %v1386
        %v1388 = vpop.f32.mrf.mxu0
        %v1389 = vadd.f32 %v1283, %v1388
        %1390 = vmatmul.bf16.gmra.mxu0 %v1344
        %v1391 = vpop.f32.mrf.mxu0
        %v1392 = vadd.f32 %v1283, %v1391
        %v1393 = vpop.f32.mrf.mxu0
        %v1394 = vadd.f32 %v1283, %v1393
        %1395 = vmatmul.bf16.gmra.mxu0 %v1347
        %v1396 = vpop.f32.mrf.mxu0
        %v1397 = vadd.f32 %v1283, %v1396
        %v1398 = vpop.f32.mrf.mxu0
        %v1399 = vadd.f32 %v1283, %v1398
        %1400 = vdwg.mxu0
        %v1401 = vmax.f32 %v1362, 0.0
        %v1402 = vmax.f32 %v1364, 0.0
        %v1403 = vmax.f32 %v1367, 0.0
        %v1404 = vmax.f32 %v1369, 0.0
        %v1405 = vmax.f32 %v1372, 0.0
        %v1406 = vmax.f32 %v1374, 0.0
        %v1407 = vmax.f32 %v1377, 0.0
        %v1408 = vmax.f32 %v1379, 0.0
        %v1409 = vmax.f32 %v1382, 0.0
        %v1410 = vmax.f32 %v1384, 0.0
        %v1411 = vmax.f32 %v1387, 0.0
        %v1412 = vmax.f32 %v1389, 0.0
        %v1413 = vmax.f32 %v1392, 0.0
        %v1414 = vmax.f32 %v1394, 0.0
        %v1415 = vmax.f32 %v1397, 0.0
        %v1416 = vmax.f32 %v1399, 0.0
        %v1417 = vld [vmem:[%s1107] sm:$0xf]
        %v1418 = vld [vmem:[%s1107 + $0x4] sm:$0xf]
        %v1419 = vld [vmem:[%s1107 + $0x8] sm:$0xf]
        %v1420 = vld [vmem:[%s1107 + $0xc] sm:$0xf]
        %v1421 = vld [vmem:[%s1107 + $0x10] sm:$0xf]
        %v1422 = vld [vmem:[%s1107 + $0x14] sm:$0xf]
        %v1423 = vld [vmem:[%s1107 + $0x18] sm:$0xf]
        %v1424 = vld [vmem:[%s1107 + $0x1c] sm:$0xf]
        %v1425 = vld [vmem:[%s1107 + $0x20] sm:$0xf]
        %v1426 = vld [vmem:[%s1107 + $0x24] sm:$0xf]
        %v1427 = vld [vmem:[%s1107 + $0x28] sm:$0xf]
        %v1428 = vld [vmem:[%s1107 + $0x2c] sm:$0xf]
        %v1429 = vld [vmem:[%s1107 + $0x30] sm:$0xf]
        %v1430 = vld [vmem:[%s1107 + $0x34] sm:$0xf]
        %v1431 = vld [vmem:[%s1107 + $0x38] sm:$0xf]
        %v1432 = vld [vmem:[%s1107 + $0x3c] sm:$0xf]
        %v1433 = vld [vmem:[%s1107 + $0x40] sm:$0xf]
        %v1434 = vld [vmem:[%s1107 + $0x44] sm:$0xf]
        %v1435 = vld [vmem:[%s1107 + $0x48] sm:$0xf]
        %v1436 = vld [vmem:[%s1107 + $0x4c] sm:$0xf]
        %v1437 = vld [vmem:[%s1107 + $0x50] sm:$0xf]
        %v1438 = vld [vmem:[%s1107 + $0x54] sm:$0xf]
        %v1439 = vld [vmem:[%s1107 + $0x58] sm:$0xf]
        %v1440 = vld [vmem:[%s1107 + $0x5c] sm:$0xf]
        %v1441 = vld [vmem:[%s1107 + $0x60] sm:$0xf]
        %v1442 = vld [vmem:[%s1107 + $0x64] sm:$0xf]
        %v1443 = vld [vmem:[%s1107 + $0x68] sm:$0xf]
        %v1444 = vld [vmem:[%s1107 + $0x6c] sm:$0xf]
        %v1445 = vld [vmem:[%s1107 + $0x70] sm:$0xf]
        %v1446 = vld [vmem:[%s1107 + $0x74] sm:$0xf]
        %v1447 = vld [vmem:[%s1107 + $0x78] sm:$0xf]
        %v1448 = vld [vmem:[%s1107 + $0x7c] sm:$0xf]
        %v1449 = vld [vmem:[%s1107 + $0x80] sm:$0xf]
        %v1450 = vld [vmem:[%s1107 + $0x84] sm:$0xf]
        %v1451 = vld [vmem:[%s1107 + $0x88] sm:$0xf]
        %v1452 = vld [vmem:[%s1107 + $0x8c] sm:$0xf]
        %v1453 = vld [vmem:[%s1107 + $0x90] sm:$0xf]
        %v1454 = vld [vmem:[%s1107 + $0x94] sm:$0xf]
        %v1455 = vld [vmem:[%s1107 + $0x98] sm:$0xf]
        %v1456 = vld [vmem:[%s1107 + $0x9c] sm:$0xf]
        %v1457 = vld [vmem:[%s1107 + $0xa0] sm:$0xf]
        %v1458 = vld [vmem:[%s1107 + $0xa4] sm:$0xf]
        %v1459 = vld [vmem:[%s1107 + $0xa8] sm:$0xf]
        %v1460 = vld [vmem:[%s1107 + $0xac] sm:$0xf]
        %v1461 = vld [vmem:[%s1107 + $0xb0] sm:$0xf]
        %v1462 = vld [vmem:[%s1107 + $0xb4] sm:$0xf]
        %v1463 = vld [vmem:[%s1107 + $0xb8] sm:$0xf]
        %v1464 = vld [vmem:[%s1107 + $0xbc] sm:$0xf]
        %v1513 = vunpack.c.l.b16 %v1417
        %v1514 = vunpack.c.l.b16 %v1418
        %v1515 = vunpack.c.l.b16 %v1419
        %v1516 = vunpack.c.l.b16 %v1420
        %v1517 = vunpack.c.l.b16 %v1421
        %v1518 = vunpack.c.l.b16 %v1422
        %v1519 = vunpack.c.l.b16 %v1423
        %v1520 = vunpack.c.l.b16 %v1424
        %v1521 = vunpack.c.l.b16 %v1425
        %v1522 = vunpack.c.l.b16 %v1426
        %v1523 = vunpack.c.l.b16 %v1427
        %v1524 = vunpack.c.l.b16 %v1428
        %v1525 = vunpack.c.l.b16 %v1429
        %v1526 = vunpack.c.l.b16 %v1430
        %v1527 = vunpack.c.l.b16 %v1431
        %v1528 = vunpack.c.l.b16 %v1432
        %v1529 = vunpack.c.l.b16 %v1433
        %v1530 = vunpack.c.l.b16 %v1434
        %v1531 = vunpack.c.l.b16 %v1435
        %v1532 = vunpack.c.l.b16 %v1436
        %v1533 = vunpack.c.l.b16 %v1437
        %v1534 = vunpack.c.l.b16 %v1438
        %v1535 = vunpack.c.l.b16 %v1439
        %v1536 = vunpack.c.l.b16 %v1440
        %v1537 = vunpack.c.l.b16 %v1441
        %v1538 = vunpack.c.l.b16 %v1442
        %v1539 = vunpack.c.l.b16 %v1443
        %v1540 = vunpack.c.l.b16 %v1444
        %v1541 = vunpack.c.l.b16 %v1445
        %v1542 = vunpack.c.l.b16 %v1446
        %v1543 = vunpack.c.l.b16 %v1447
        %v1544 = vunpack.c.l.b16 %v1448
        %v1545 = vunpack.c.l.b16 %v1449
        %v1546 = vunpack.c.l.b16 %v1450
        %v1547 = vunpack.c.l.b16 %v1451
        %v1548 = vunpack.c.l.b16 %v1452
        %v1549 = vunpack.c.l.b16 %v1453
        %v1550 = vunpack.c.l.b16 %v1454
        %v1551 = vunpack.c.l.b16 %v1455
        %v1552 = vunpack.c.l.b16 %v1456
        %v1553 = vunpack.c.l.b16 %v1457
        %v1554 = vunpack.c.l.b16 %v1458
        %v1555 = vunpack.c.l.b16 %v1459
        %v1556 = vunpack.c.l.b16 %v1460
        %v1557 = vunpack.c.l.b16 %v1461
        %v1558 = vunpack.c.l.b16 %v1462
        %v1559 = vunpack.c.l.b16 %v1463
        %v1560 = vunpack.c.l.b16 %v1464
        %v1561 = vpack.c.b16 %v1514, %v1513
        %v1562 = vpack.c.b16 %v1516, %v1515
        %v1563 = vpack.c.b16 %v1518, %v1517
        %v1564 = vpack.c.b16 %v1520, %v1519
        %v1565 = vpack.c.b16 %v1522, %v1521
        %v1566 = vpack.c.b16 %v1524, %v1523
        %v1567 = vpack.c.b16 %v1526, %v1525
        %v1568 = vpack.c.b16 %v1528, %v1527
        %v1569 = vpack.c.b16 %v1530, %v1529
        %v1570 = vpack.c.b16 %v1532, %v1531
        %v1571 = vpack.c.b16 %v1534, %v1533
        %v1572 = vpack.c.b16 %v1536, %v1535
        %v1573 = vpack.c.b16 %v1538, %v1537
        %v1574 = vpack.c.b16 %v1540, %v1539
        %v1575 = vpack.c.b16 %v1542, %v1541
        %v1576 = vpack.c.b16 %v1544, %v1543
        %v1577 = vpack.c.b16 %v1546, %v1545
        %v1578 = vpack.c.b16 %v1548, %v1547
        %v1579 = vpack.c.b16 %v1550, %v1549
        %v1580 = vpack.c.b16 %v1552, %v1551
        %v1581 = vpack.c.b16 %v1554, %v1553
        %v1582 = vpack.c.b16 %v1556, %v1555
        %v1583 = vpack.c.b16 %v1558, %v1557
        %v1584 = vpack.c.b16 %v1560, %v1559
        %v1586 = vsel %vm1170, %v1561, 0
        %v1589 = vsel %vm1170, %v1562, 0
        %v1592 = vsel %vm1170, %v1563, 0
        %v1595 = vsel %vm1170, %v1564, 0
        %v1598 = vsel %vm1170, %v1565, 0
        %v1601 = vsel %vm1170, %v1566, 0
        %v1604 = vsel %vm1170, %v1567, 0
        %v1607 = vsel %vm1170, %v1568, 0
        %v1610 = vsel %vm1170, %v1569, 0
        %v1613 = vsel %vm1170, %v1570, 0
        %v1616 = vsel %vm1170, %v1571, 0
        %v1619 = vsel %vm1170, %v1572, 0
        %v1622 = vsel %vm1170, %v1573, 0
        %v1625 = vsel %vm1170, %v1574, 0
        %v1628 = vsel %vm1170, %v1575, 0
        %v1631 = vsel %vm1170, %v1576, 0
        %v1634 = vsel %vm1170, %v1577, 0
        %v1637 = vsel %vm1170, %v1578, 0
        %v1640 = vsel %vm1170, %v1579, 0
        %v1643 = vsel %vm1170, %v1580, 0
        %v1646 = vsel %vm1170, %v1581, 0
        %v1649 = vsel %vm1170, %v1582, 0
        %v1652 = vsel %vm1170, %v1583, 0
        %v1655 = vsel %vm1170, %v1584, 0
        %1657 = vmatpush.bf16.msra.mxu0 0
        %1658 = vmatpush.bf16.msra.mxu0 0
        %1659 = vmatpush.bf16.msra.mxu0 0
        %1660 = vmatpush.bf16.msra.mxu0 0
        %1661 = vmatpush.bf16.msra.mxu0 0
        %1662 = vmatpush.bf16.msra.mxu0 0
        %1663 = vmatpush.bf16.msra.mxu0 0
        %1664 = vmatpush.bf16.msra.mxu0 %v1350
        %1665 = vmatmul.bf16.gmra.mxu0 %v1586
        %v1666 = vpop.f32.mrf.mxu0
        %v1667 = vadd.f32 %v1283, %v1666
        %v1668 = vpop.f32.mrf.mxu0
        %v1669 = vadd.f32 %v1283, %v1668
        %1670 = vmatmul.bf16.gmra.mxu0 %v1589
        %v1671 = vpop.f32.mrf.mxu0
        %v1672 = vadd.f32 %v1283, %v1671
        %v1673 = vpop.f32.mrf.mxu0
        %v1674 = vadd.f32 %v1283, %v1673
        %1675 = vmatmul.bf16.gmra.mxu0 %v1592
        %v1676 = vpop.f32.mrf.mxu0
        %v1677 = vadd.f32 %v1283, %v1676
        %v1678 = vpop.f32.mrf.mxu0
        %v1679 = vadd.f32 %v1283, %v1678
        %1680 = vmatmul.bf16.gmra.mxu0 %v1595
        %v1681 = vpop.f32.mrf.mxu0
        %v1682 = vadd.f32 %v1283, %v1681
        %v1683 = vpop.f32.mrf.mxu0
        %v1684 = vadd.f32 %v1283, %v1683
        %1685 = vmatmul.bf16.gmra.mxu0 %v1598
        %v1686 = vpop.f32.mrf.mxu0
        %v1687 = vadd.f32 %v1283, %v1686
        %v1688 = vpop.f32.mrf.mxu0
        %v1689 = vadd.f32 %v1283, %v1688
        %1690 = vmatmul.bf16.gmra.mxu0 %v1601
        %v1691 = vpop.f32.mrf.mxu0
        %v1692 = vadd.f32 %v1283, %v1691
        %v1693 = vpop.f32.mrf.mxu0
        %v1694 = vadd.f32 %v1283, %v1693
        %1695 = vmatmul.bf16.gmra.mxu0 %v1604
        %v1696 = vpop.f32.mrf.mxu0
        %v1697 = vadd.f32 %v1283, %v1696
        %v1698 = vpop.f32.mrf.mxu0
        %v1699 = vadd.f32 %v1283, %v1698
        %1700 = vmatmul.bf16.gmra.mxu0 %v1607
        %v1701 = vpop.f32.mrf.mxu0
        %v1702 = vadd.f32 %v1283, %v1701
        %v1703 = vpop.f32.mrf.mxu0
        %v1704 = vadd.f32 %v1283, %v1703
        %1705 = vmatmul.bf16.gmra.mxu0 %v1610
        %v1706 = vpop.f32.mrf.mxu0
        %v1707 = vadd.f32 %v1283, %v1706
        %v1708 = vpop.f32.mrf.mxu0
        %v1709 = vadd.f32 %v1283, %v1708
        %1710 = vmatmul.bf16.gmra.mxu0 %v1613
        %v1711 = vpop.f32.mrf.mxu0
        %v1712 = vadd.f32 %v1283, %v1711
        %v1713 = vpop.f32.mrf.mxu0
        %v1714 = vadd.f32 %v1283, %v1713
        %1715 = vmatmul.bf16.gmra.mxu0 %v1616
        %v1716 = vpop.f32.mrf.mxu0
        %v1717 = vadd.f32 %v1283, %v1716
        %v1718 = vpop.f32.mrf.mxu0
        %v1719 = vadd.f32 %v1283, %v1718
        %1720 = vmatmul.bf16.gmra.mxu0 %v1619
        %v1721 = vpop.f32.mrf.mxu0
        %v1722 = vadd.f32 %v1283, %v1721
        %v1723 = vpop.f32.mrf.mxu0
        %v1724 = vadd.f32 %v1283, %v1723
        %1725 = vmatmul.bf16.gmra.mxu0 %v1622
        %v1726 = vpop.f32.mrf.mxu0
        %v1727 = vadd.f32 %v1283, %v1726
        %v1728 = vpop.f32.mrf.mxu0
        %v1729 = vadd.f32 %v1283, %v1728
        %1730 = vmatmul.bf16.gmra.mxu0 %v1625
        %v1731 = vpop.f32.mrf.mxu0
        %v1732 = vadd.f32 %v1283, %v1731
        %v1733 = vpop.f32.mrf.mxu0
        %v1734 = vadd.f32 %v1283, %v1733
        %1735 = vmatmul.bf16.gmra.mxu0 %v1628
        %v1736 = vpop.f32.mrf.mxu0
        %v1737 = vadd.f32 %v1283, %v1736
        %v1738 = vpop.f32.mrf.mxu0
        %v1739 = vadd.f32 %v1283, %v1738
        %1740 = vmatmul.bf16.gmra.mxu0 %v1631
        %v1741 = vpop.f32.mrf.mxu0
        %v1742 = vadd.f32 %v1283, %v1741
        %v1743 = vpop.f32.mrf.mxu0
        %v1744 = vadd.f32 %v1283, %v1743
        %1745 = vmatmul.bf16.gmra.mxu0 %v1634
        %v1746 = vpop.f32.mrf.mxu0
        %v1747 = vadd.f32 %v1283, %v1746
        %v1748 = vpop.f32.mrf.mxu0
        %v1749 = vadd.f32 %v1283, %v1748
        %1750 = vmatmul.bf16.gmra.mxu0 %v1637
        %v1751 = vpop.f32.mrf.mxu0
        %v1752 = vadd.f32 %v1283, %v1751
        %v1753 = vpop.f32.mrf.mxu0
        %v1754 = vadd.f32 %v1283, %v1753
        %1755 = vmatmul.bf16.gmra.mxu0 %v1640
        %v1756 = vpop.f32.mrf.mxu0
        %v1757 = vadd.f32 %v1283, %v1756
        %v1758 = vpop.f32.mrf.mxu0
        %v1759 = vadd.f32 %v1283, %v1758
        %1760 = vmatmul.bf16.gmra.mxu0 %v1643
        %v1761 = vpop.f32.mrf.mxu0
        %v1762 = vadd.f32 %v1283, %v1761
        %v1763 = vpop.f32.mrf.mxu0
        %v1764 = vadd.f32 %v1283, %v1763
        %1765 = vmatmul.bf16.gmra.mxu0 %v1646
        %v1766 = vpop.f32.mrf.mxu0
        %v1767 = vadd.f32 %v1283, %v1766
        %v1768 = vpop.f32.mrf.mxu0
        %v1769 = vadd.f32 %v1283, %v1768
        %1770 = vmatmul.bf16.gmra.mxu0 %v1649
        %v1771 = vpop.f32.mrf.mxu0
        %v1772 = vadd.f32 %v1283, %v1771
        %v1773 = vpop.f32.mrf.mxu0
        %v1774 = vadd.f32 %v1283, %v1773
        %1775 = vmatmul.bf16.gmra.mxu0 %v1652
        %v1776 = vpop.f32.mrf.mxu0
        %v1777 = vadd.f32 %v1283, %v1776
        %v1778 = vpop.f32.mrf.mxu0
        %v1779 = vadd.f32 %v1283, %v1778
        %1780 = vmatmul.bf16.gmra.mxu0 %v1655
        %v1781 = vpop.f32.mrf.mxu0
        %v1782 = vadd.f32 %v1283, %v1781
        %v1783 = vpop.f32.mrf.mxu0
        %v1784 = vadd.f32 %v1283, %v1783
        %1785 = vdwg.mxu0
        %v1786 = vmax.f32 %v1667, 0.0
        %v1787 = vmax.f32 %v1669, 0.0
        %v1788 = vmax.f32 %v1672, 0.0
        %v1789 = vmax.f32 %v1674, 0.0
        %v1790 = vmax.f32 %v1677, 0.0
        %v1791 = vmax.f32 %v1679, 0.0
        %v1792 = vmax.f32 %v1682, 0.0
        %v1793 = vmax.f32 %v1684, 0.0
        %v1794 = vmax.f32 %v1687, 0.0
        %v1795 = vmax.f32 %v1689, 0.0
        %v1796 = vmax.f32 %v1692, 0.0
        %v1797 = vmax.f32 %v1694, 0.0
        %v1798 = vmax.f32 %v1697, 0.0
        %v1799 = vmax.f32 %v1699, 0.0
        %v1800 = vmax.f32 %v1702, 0.0
        %v1801 = vmax.f32 %v1704, 0.0
        %v1802 = vmax.f32 %v1707, 0.0
        %v1803 = vmax.f32 %v1709, 0.0
        %v1804 = vmax.f32 %v1712, 0.0
        %v1805 = vmax.f32 %v1714, 0.0
        %v1806 = vmax.f32 %v1717, 0.0
        %v1807 = vmax.f32 %v1719, 0.0
        %v1808 = vmax.f32 %v1722, 0.0
        %v1809 = vmax.f32 %v1724, 0.0
        %v1810 = vmax.f32 %v1727, 0.0
        %v1811 = vmax.f32 %v1729, 0.0
        %v1812 = vmax.f32 %v1732, 0.0
        %v1813 = vmax.f32 %v1734, 0.0
        %v1814 = vmax.f32 %v1737, 0.0
        %v1815 = vmax.f32 %v1739, 0.0
        %v1816 = vmax.f32 %v1742, 0.0
        %v1817 = vmax.f32 %v1744, 0.0
        %v1818 = vmax.f32 %v1747, 0.0
        %v1819 = vmax.f32 %v1749, 0.0
        %v1820 = vmax.f32 %v1752, 0.0
        %v1821 = vmax.f32 %v1754, 0.0
        %v1822 = vmax.f32 %v1757, 0.0
        %v1823 = vmax.f32 %v1759, 0.0
        %v1824 = vmax.f32 %v1762, 0.0
        %v1825 = vmax.f32 %v1764, 0.0
        %v1826 = vmax.f32 %v1767, 0.0
        %v1827 = vmax.f32 %v1769, 0.0
        %v1828 = vmax.f32 %v1772, 0.0
        %v1829 = vmax.f32 %v1774, 0.0
        %v1830 = vmax.f32 %v1777, 0.0
        %v1831 = vmax.f32 %v1779, 0.0
        %v1832 = vmax.f32 %v1782, 0.0
        %v1833 = vmax.f32 %v1784, 0.0
        %v1834 = vpack.c.bf16 %v1402, %v1401
        %v1835 = vpack.c.bf16 %v1404, %v1403
        %v1836 = vpack.c.bf16 %v1406, %v1405
        %v1837 = vpack.c.bf16 %v1408, %v1407
        %v1838 = vpack.c.bf16 %v1410, %v1409
        %v1839 = vpack.c.bf16 %v1412, %v1411
        %v1840 = vpack.c.bf16 %v1414, %v1413
        %v1841 = vpack.c.bf16 %v1416, %v1415
        %v1842 = vld [vmem:[%s15] sm:$0x3]
        %v1843 = vld [vmem:[%s17] sm:$0x1]
        %v1845 = vperm.slane %v1843, 0
        %vm1847 = vcmask 31744
        %v1849 = vsel %vm1847, %v1834, 0
        %v1852 = vsel %vm1847, %v1835, 0
        %v1855 = vsel %vm1847, %v1836, 0
        %v1858 = vsel %vm1847, %v1837, 0
        %v1861 = vsel %vm1847, %v1838, 0
        %v1864 = vsel %vm1847, %v1839, 0
        %v1867 = vsel %vm1847, %v1840, 0
        %v1870 = vsel %vm1847, %v1841, 0
        %vm1872 = vcmask 1041408
        %v1874 = vsel %vm1872, %v1842, 0
        %1876 = vmatpush.bf16.msra.mxu0 0
        %1877 = vmatpush.bf16.msra.mxu0 0
        %1878 = vmatpush.bf16.msra.mxu0 0
        %1879 = vmatpush.bf16.msra.mxu0 0
        %1880 = vmatpush.bf16.msra.mxu0 0
        %1881 = vmatpush.bf16.msra.mxu0 0
        %1882 = vmatpush.bf16.msra.mxu0 0
        %1883 = vmatpush.bf16.msra.mxu0 %v1874
        %1884 = vmatmul.bf16.gmra.mxu0 %v1849
        %v1885 = vpop.f32.mrf.mxu0
        %v1886 = vadd.f32 %v1845, %v1885
        %v1887 = vpop.f32.mrf.mxu0
        %v1888 = vadd.f32 %v1845, %v1887
        %1889 = vmatmul.bf16.gmra.mxu0 %v1852
        %v1890 = vpop.f32.mrf.mxu0
        %v1891 = vadd.f32 %v1845, %v1890
        %v1892 = vpop.f32.mrf.mxu0
        %v1893 = vadd.f32 %v1845, %v1892
        %1894 = vmatmul.bf16.gmra.mxu0 %v1855
        %v1895 = vpop.f32.mrf.mxu0
        %v1896 = vadd.f32 %v1845, %v1895
        %v1897 = vpop.f32.mrf.mxu0
        %v1898 = vadd.f32 %v1845, %v1897
        %1899 = vmatmul.bf16.gmra.mxu0 %v1858
        %v1900 = vpop.f32.mrf.mxu0
        %v1901 = vadd.f32 %v1845, %v1900
        %v1902 = vpop.f32.mrf.mxu0
        %v1903 = vadd.f32 %v1845, %v1902
        %1904 = vmatmul.bf16.gmra.mxu0 %v1861
        %v1905 = vpop.f32.mrf.mxu0
        %v1906 = vadd.f32 %v1845, %v1905
        %v1907 = vpop.f32.mrf.mxu0
        %v1908 = vadd.f32 %v1845, %v1907
        %1909 = vmatmul.bf16.gmra.mxu0 %v1864
        %v1910 = vpop.f32.mrf.mxu0
        %v1911 = vadd.f32 %v1845, %v1910
        %v1912 = vpop.f32.mrf.mxu0
        %v1913 = vadd.f32 %v1845, %v1912
        %1914 = vmatmul.bf16.gmra.mxu0 %v1867
        %v1915 = vpop.f32.mrf.mxu0
        %v1916 = vadd.f32 %v1845, %v1915
        %v1917 = vpop.f32.mrf.mxu0
        %v1918 = vadd.f32 %v1845, %v1917
        %1919 = vmatmul.bf16.gmra.mxu0 %v1870
        %v1920 = vpop.f32.mrf.mxu0
        %v1921 = vadd.f32 %v1845, %v1920
        %v1922 = vpop.f32.mrf.mxu0
        %v1923 = vadd.f32 %v1845, %v1922
        %1924 = vdwg.mxu0
        %v1925 = vmax.f32 %v1886, 0.0
        %v1926 = vmax.f32 %v1888, 0.0
        %v1927 = vmax.f32 %v1891, 0.0
        %v1928 = vmax.f32 %v1893, 0.0
        %v1929 = vmax.f32 %v1896, 0.0
        %v1930 = vmax.f32 %v1898, 0.0
        %v1931 = vmax.f32 %v1901, 0.0
        %v1932 = vmax.f32 %v1903, 0.0
        %v1933 = vmax.f32 %v1906, 0.0
        %v1934 = vmax.f32 %v1908, 0.0
        %v1935 = vmax.f32 %v1911, 0.0
        %v1936 = vmax.f32 %v1913, 0.0
        %v1937 = vmax.f32 %v1916, 0.0
        %v1938 = vmax.f32 %v1918, 0.0
        %v1939 = vmax.f32 %v1921, 0.0
        %v1940 = vmax.f32 %v1923, 0.0
        %v1941 = vpack.c.bf16 %v1249, %v1248
        %v1942 = vpack.c.bf16 %v1251, %v1250
        %v1943 = vpack.c.bf16 %v1253, %v1252
        %v1944 = vpack.c.bf16 %v1255, %v1254
        %v1945 = vpack.c.bf16 %v1257, %v1256
        %v1946 = vpack.c.bf16 %v1259, %v1258
        %v1947 = vpack.c.bf16 %v1261, %v1260
        %v1948 = vpack.c.bf16 %v1263, %v1262
        %v1949 = vld [vmem:[%s19] sm:$0xf]
        %v1950 = vld [vmem:[%s19 + $0x4] sm:$0xf]
        %v1951 = vpack.c.bf16 %v1926, %v1925
        %v1952 = vpack.c.bf16 %v1928, %v1927
        %v1953 = vpack.c.bf16 %v1930, %v1929
        %v1954 = vpack.c.bf16 %v1932, %v1931
        %v1955 = vpack.c.bf16 %v1934, %v1933
        %v1956 = vpack.c.bf16 %v1936, %v1935
        %v1957 = vpack.c.bf16 %v1938, %v1937
        %v1958 = vpack.c.bf16 %v1940, %v1939
        %v1959 = vld [vmem:[%s21] sm:$0xf]
        %v1961 = vsel %vm1170, %v1951, 0
        %v1964 = vsel %vm1170, %v1952, 0
        %v1967 = vsel %vm1170, %v1953, 0
        %v1970 = vsel %vm1170, %v1954, 0
        %v1973 = vsel %vm1170, %v1955, 0
        %v1976 = vsel %vm1170, %v1956, 0
        %v1979 = vsel %vm1170, %v1957, 0
        %v1982 = vsel %vm1170, %v1958, 0
        %v1985 = vsel %vm1195, %v1959, 0
        %1987 = vmatpush.bf16.msra.mxu0 0
        %1988 = vmatpush.bf16.msra.mxu0 0
        %1989 = vmatpush.bf16.msra.mxu0 0
        %1990 = vmatpush.bf16.msra.mxu0 0
        %1991 = vmatpush.bf16.msra.mxu0 0
        %1992 = vmatpush.bf16.msra.mxu0 0
        %1993 = vmatpush.bf16.msra.mxu0 0
        %1994 = vmatpush.bf16.msra.mxu0 %v1985
        %1995 = vmatmul.bf16.gmra.mxu0 %v1961
        %v1996 = vpop.f32.mrf.mxu0
        %v1997 = vadd.f32 0.0, %v1996
        %v1998 = vpop.f32.mrf.mxu0
        %v1999 = vadd.f32 0.0, %v1998
        %2000 = vmatmul.bf16.gmra.mxu0 %v1964
        %v2001 = vpop.f32.mrf.mxu0
        %v2002 = vadd.f32 0.0, %v2001
        %v2003 = vpop.f32.mrf.mxu0
        %v2004 = vadd.f32 0.0, %v2003
        %2005 = vmatmul.bf16.gmra.mxu0 %v1967
        %v2006 = vpop.f32.mrf.mxu0
        %v2007 = vpop.f32.mrf.mxu0
        %2008 = vmatmul.bf16.gmra.mxu0 %v1970
        %v2009 = vpop.f32.mrf.mxu0
        %v2010 = vpop.f32.mrf.mxu0
        %2011 = vmatmul.bf16.gmra.mxu0 %v1973
        %v2012 = vpop.f32.mrf.mxu0
        %v2013 = vpop.f32.mrf.mxu0
        %2014 = vmatmul.bf16.gmra.mxu0 %v1976
        %v2015 = vpop.f32.mrf.mxu0
        %v2016 = vpop.f32.mrf.mxu0
        %2017 = vmatmul.bf16.gmra.mxu0 %v1979
        %v2018 = vpop.f32.mrf.mxu0
        %v2019 = vpop.f32.mrf.mxu0
        %2020 = vmatmul.bf16.gmra.mxu0 %v1982
        %v2021 = vpop.f32.mrf.mxu0
        %v2022 = vpop.f32.mrf.mxu0
        %2023 = vdwg.mxu0
        %v2026 = vunpack.c.l.b16 %v1949
        %v2027 = vunpack.c.l.b16 %v1950
        %v2028 = vpack.c.b16 %v2027, %v2026
        %vm2030 = vcmask 130048
        %v2032 = vsel %vm2030, %v1941, 0
        %v2035 = vsel %vm2030, %v1942, 0
        %v2038 = vsel %vm2030, %v1943, 0
        %v2041 = vsel %vm2030, %v1944, 0
        %v2044 = vsel %vm2030, %v1945, 0
        %v2047 = vsel %vm2030, %v1946, 0
        %v2050 = vsel %vm2030, %v1947, 0
        %v2053 = vsel %vm2030, %v1948, 0
        %2055 = vmatpush.bf16.msra.mxu0 0
        %2056 = vmatpush.bf16.msra.mxu0 0
        %2057 = vmatpush.bf16.msra.mxu0 0
        %2058 = vmatpush.bf16.msra.mxu0 0
        %2059 = vmatpush.bf16.msra.mxu0 0
        %2060 = vmatpush.bf16.msra.mxu0 0
        %2061 = vmatpush.bf16.msra.mxu0 0
        %2062 = vmatpush.bf16.msra.mxu0 %v2028
        %2063 = vmatmul.bf16.gmra.mxu0 %v2032
        %v2064 = vpop.f32.mrf.mxu0
        %v2065 = vadd.f32 %v1997, %v2064
        %v2066 = vpop.f32.mrf.mxu0
        %v2067 = vadd.f32 %v1999, %v2066
        %2068 = vmatmul.bf16.gmra.mxu0 %v2035
        %v2069 = vpop.f32.mrf.mxu0
        %v2070 = vadd.f32 %v2002, %v2069
        %v2071 = vpop.f32.mrf.mxu0
        %v2072 = vadd.f32 %v2004, %v2071
        %2073 = vmatmul.bf16.gmra.mxu0 %v2038
        %v2074 = vpop.f32.mrf.mxu0
        %v2075 = vpop.f32.mrf.mxu0
        %2076 = vmatmul.bf16.gmra.mxu0 %v2041
        %v2077 = vpop.f32.mrf.mxu0
        %v2078 = vpop.f32.mrf.mxu0
        %2079 = vmatmul.bf16.gmra.mxu0 %v2044
        %v2080 = vpop.f32.mrf.mxu0
        %v2081 = vpop.f32.mrf.mxu0
        %2082 = vmatmul.bf16.gmra.mxu0 %v2047
        %v2083 = vpop.f32.mrf.mxu0
        %v2084 = vpop.f32.mrf.mxu0
        %2085 = vmatmul.bf16.gmra.mxu0 %v2050
        %v2086 = vpop.f32.mrf.mxu0
        %v2087 = vpop.f32.mrf.mxu0
        %2088 = vmatmul.bf16.gmra.mxu0 %v2053
        %v2089 = vpop.f32.mrf.mxu0
        %v2090 = vpop.f32.mrf.mxu0
        %2091 = vdwg.mxu0
        %v2092 = vld [vmem:[%s23] sm:$0x1]
        %v2094 = vperm.slane %v2092, 0
        %v2096 = vadd.f32 %v2065, %v2094
        %v2097 = vadd.f32 %v2067, %v2094
        %v2098 = vadd.f32 %v2070, %v2094
        %v2099 = vadd.f32 %v2072, %v2094
        %v2100 = vmax.f32 %v2096, 0.0
        %v2101 = vmax.f32 %v2097, 0.0
        %v2102 = vmax.f32 %v2098, 0.0
        %v2103 = vmax.f32 %v2099, 0.0
        %v2104 = vld [vmem:[%s25] sm:$0x3]
        %v2105 = vld [vmem:[%s27] sm:$0x1]
        %v2107 = vperm.slane %v2105, 0
        %v2110 = vsel %vm1872, %v2104, 0
        %2112 = vmatpush.bf16.msra.mxu0 0
        %2113 = vmatpush.bf16.msra.mxu0 0
        %2114 = vmatpush.bf16.msra.mxu0 0
        %2115 = vmatpush.bf16.msra.mxu0 0
        %2116 = vmatpush.bf16.msra.mxu0 0
        %2117 = vmatpush.bf16.msra.mxu0 0
        %2118 = vmatpush.bf16.msra.mxu0 0
        %2119 = vmatpush.bf16.msra.mxu0 %v2110
        %2120 = vmatmul.bf16.gmra.mxu0 %v1849
        %v2121 = vpop.f32.mrf.mxu0
        %v2122 = vadd.f32 %v2107, %v2121
        %v2123 = vpop.f32.mrf.mxu0
        %v2124 = vadd.f32 %v2107, %v2123
        %2125 = vmatmul.bf16.gmra.mxu0 %v1852
        %v2126 = vpop.f32.mrf.mxu0
        %v2127 = vadd.f32 %v2107, %v2126
        %v2128 = vpop.f32.mrf.mxu0
        %v2129 = vadd.f32 %v2107, %v2128
        %2130 = vmatmul.bf16.gmra.mxu0 %v1855
        %v2131 = vpop.f32.mrf.mxu0
        %v2132 = vpop.f32.mrf.mxu0
        %2133 = vmatmul.bf16.gmra.mxu0 %v1858
        %v2134 = vpop.f32.mrf.mxu0
        %v2135 = vpop.f32.mrf.mxu0
        %2136 = vmatmul.bf16.gmra.mxu0 %v1861
        %v2137 = vpop.f32.mrf.mxu0
        %v2138 = vpop.f32.mrf.mxu0
        %2139 = vmatmul.bf16.gmra.mxu0 %v1864
        %v2140 = vpop.f32.mrf.mxu0
        %v2141 = vpop.f32.mrf.mxu0
        %2142 = vmatmul.bf16.gmra.mxu0 %v1867
        %v2143 = vpop.f32.mrf.mxu0
        %v2144 = vpop.f32.mrf.mxu0
        %2145 = vmatmul.bf16.gmra.mxu0 %v1870
        %v2146 = vpop.f32.mrf.mxu0
        %v2147 = vpop.f32.mrf.mxu0
        %2148 = vdwg.mxu0
        %v2149 = vmax.f32 %v2122, 0.0
        %v2150 = vmax.f32 %v2124, 0.0
        %v2151 = vmax.f32 %v2127, 0.0
        %v2152 = vmax.f32 %v2129, 0.0
        %v2153 = vpack.c.bf16 %v1787, %v1786
        %v2154 = vpack.c.bf16 %v1789, %v1788
        %v2155 = vpack.c.bf16 %v1791, %v1790
        %v2156 = vpack.c.bf16 %v1793, %v1792
        %v2157 = vpack.c.bf16 %v1795, %v1794
        %v2158 = vpack.c.bf16 %v1797, %v1796
        %v2159 = vpack.c.bf16 %v1799, %v1798
        %v2160 = vpack.c.bf16 %v1801, %v1800
        %v2161 = vpack.c.bf16 %v1803, %v1802
        %v2162 = vpack.c.bf16 %v1805, %v1804
        %v2163 = vpack.c.bf16 %v1807, %v1806
        %v2164 = vpack.c.bf16 %v1809, %v1808
        %v2165 = vpack.c.bf16 %v1811, %v1810
        %v2166 = vpack.c.bf16 %v1813, %v1812
        %v2167 = vpack.c.bf16 %v1815, %v1814
        %v2168 = vpack.c.bf16 %v1817, %v1816
        %v2169 = vpack.c.bf16 %v1819, %v1818
        %v2170 = vpack.c.bf16 %v1821, %v1820
        %v2171 = vpack.c.bf16 %v1823, %v1822
        %v2172 = vpack.c.bf16 %v1825, %v1824
        %v2173 = vpack.c.bf16 %v1827, %v1826
        %v2174 = vpack.c.bf16 %v1829, %v1828
        %v2175 = vpack.c.bf16 %v1831, %v1830
        %v2176 = vpack.c.bf16 %v1833, %v1832
        %v2178 = vsel %vm1847, %v2153, 0
        %v2181 = vsel %vm1847, %v2154, 0
        %v2184 = vsel %vm1847, %v2155, 0
        %v2187 = vsel %vm1847, %v2156, 0
        %v2190 = vsel %vm1847, %v2157, 0
        %v2193 = vsel %vm1847, %v2158, 0
        %v2196 = vsel %vm1847, %v2159, 0
        %v2199 = vsel %vm1847, %v2160, 0
        %v2202 = vsel %vm1847, %v2161, 0
        %v2205 = vsel %vm1847, %v2162, 0
        %v2208 = vsel %vm1847, %v2163, 0
        %v2211 = vsel %vm1847, %v2164, 0
        %v2214 = vsel %vm1847, %v2165, 0
        %v2217 = vsel %vm1847, %v2166, 0
        %v2220 = vsel %vm1847, %v2167, 0
        %v2223 = vsel %vm1847, %v2168, 0
        %v2226 = vsel %vm1847, %v2169, 0
        %v2229 = vsel %vm1847, %v2170, 0
        %v2232 = vsel %vm1847, %v2171, 0
        %v2235 = vsel %vm1847, %v2172, 0
        %v2238 = vsel %vm1847, %v2173, 0
        %v2241 = vsel %vm1847, %v2174, 0
        %v2244 = vsel %vm1847, %v2175, 0
        %v2247 = vsel %vm1847, %v2176, 0
        %2249 = vmatpush.bf16.msra.mxu0 0
        %2250 = vmatpush.bf16.msra.mxu0 0
        %2251 = vmatpush.bf16.msra.mxu0 0
        %2252 = vmatpush.bf16.msra.mxu0 0
        %2253 = vmatpush.bf16.msra.mxu0 0
        %2254 = vmatpush.bf16.msra.mxu0 0
        %2255 = vmatpush.bf16.msra.mxu0 0
        %2256 = vmatpush.bf16.msra.mxu0 %v2110
        %2257 = vmatmul.bf16.gmra.mxu0 %v2178
        %v2258 = vpop.f32.mrf.mxu0
        %v2259 = vadd.f32 %v2107, %v2258
        %v2260 = vpop.f32.mrf.mxu0
        %v2261 = vadd.f32 %v2107, %v2260
        %2262 = vmatmul.bf16.gmra.mxu0 %v2181
        %v2263 = vpop.f32.mrf.mxu0
        %v2264 = vadd.f32 %v2107, %v2263
        %v2265 = vpop.f32.mrf.mxu0
        %v2266 = vadd.f32 %v2107, %v2265
        %2267 = vmatmul.bf16.gmra.mxu0 %v2184
        %v2268 = vpop.f32.mrf.mxu0
        %v2269 = vadd.f32 %v2107, %v2268
        %v2270 = vpop.f32.mrf.mxu0
        %v2271 = vadd.f32 %v2107, %v2270
        %2272 = vmatmul.bf16.gmra.mxu0 %v2187
        %v2273 = vpop.f32.mrf.mxu0
        %v2274 = vadd.f32 %v2107, %v2273
        %v2275 = vpop.f32.mrf.mxu0
        %v2276 = vadd.f32 %v2107, %v2275
        %2277 = vmatmul.bf16.gmra.mxu0 %v2190
        %v2278 = vpop.f32.mrf.mxu0
        %v2279 = vadd.f32 %v2107, %v2278
        %v2280 = vpop.f32.mrf.mxu0
        %v2281 = vadd.f32 %v2107, %v2280
        %2282 = vmatmul.bf16.gmra.mxu0 %v2193
        %v2283 = vpop.f32.mrf.mxu0
        %v2284 = vadd.f32 %v2107, %v2283
        %v2285 = vpop.f32.mrf.mxu0
        %v2286 = vadd.f32 %v2107, %v2285
        %2287 = vmatmul.bf16.gmra.mxu0 %v2196
        %v2288 = vpop.f32.mrf.mxu0
        %v2289 = vpop.f32.mrf.mxu0
        %2290 = vmatmul.bf16.gmra.mxu0 %v2199
        %v2291 = vpop.f32.mrf.mxu0
        %v2292 = vpop.f32.mrf.mxu0
        %2293 = vmatmul.bf16.gmra.mxu0 %v2202
        %v2294 = vpop.f32.mrf.mxu0
        %v2295 = vpop.f32.mrf.mxu0
        %2296 = vmatmul.bf16.gmra.mxu0 %v2205
        %v2297 = vpop.f32.mrf.mxu0
        %v2298 = vpop.f32.mrf.mxu0
        %2299 = vmatmul.bf16.gmra.mxu0 %v2208
        %v2300 = vpop.f32.mrf.mxu0
        %v2301 = vpop.f32.mrf.mxu0
        %2302 = vmatmul.bf16.gmra.mxu0 %v2211
        %v2303 = vpop.f32.mrf.mxu0
        %v2304 = vpop.f32.mrf.mxu0
        %2305 = vmatmul.bf16.gmra.mxu0 %v2214
        %v2306 = vpop.f32.mrf.mxu0
        %v2307 = vpop.f32.mrf.mxu0
        %2308 = vmatmul.bf16.gmra.mxu0 %v2217
        %v2309 = vpop.f32.mrf.mxu0
        %v2310 = vpop.f32.mrf.mxu0
        %2311 = vmatmul.bf16.gmra.mxu0 %v2220
        %v2312 = vpop.f32.mrf.mxu0
        %v2313 = vpop.f32.mrf.mxu0
        %2314 = vmatmul.bf16.gmra.mxu0 %v2223
        %v2315 = vpop.f32.mrf.mxu0
        %v2316 = vpop.f32.mrf.mxu0
        %2317 = vmatmul.bf16.gmra.mxu0 %v2226
        %v2318 = vpop.f32.mrf.mxu0
        %v2319 = vpop.f32.mrf.mxu0
        %2320 = vmatmul.bf16.gmra.mxu0 %v2229
        %v2321 = vpop.f32.mrf.mxu0
        %v2322 = vpop.f32.mrf.mxu0
        %2323 = vmatmul.bf16.gmra.mxu0 %v2232
        %v2324 = vpop.f32.mrf.mxu0
        %v2325 = vpop.f32.mrf.mxu0
        %2326 = vmatmul.bf16.gmra.mxu0 %v2235
        %v2327 = vpop.f32.mrf.mxu0
        %v2328 = vpop.f32.mrf.mxu0
        %2329 = vmatmul.bf16.gmra.mxu0 %v2238
        %v2330 = vpop.f32.mrf.mxu0
        %v2331 = vpop.f32.mrf.mxu0
        %2332 = vmatmul.bf16.gmra.mxu0 %v2241
        %v2333 = vpop.f32.mrf.mxu0
        %v2334 = vpop.f32.mrf.mxu0
        %2335 = vmatmul.bf16.gmra.mxu0 %v2244
        %v2336 = vpop.f32.mrf.mxu0
        %v2337 = vpop.f32.mrf.mxu0
        %2338 = vmatmul.bf16.gmra.mxu0 %v2247
        %v2339 = vpop.f32.mrf.mxu0
        %v2340 = vpop.f32.mrf.mxu0
        %2341 = vdwg.mxu0
        %v2342 = vmax.f32 %v2259, 0.0
        %v2343 = vmax.f32 %v2261, 0.0
        %v2344 = vmax.f32 %v2264, 0.0
        %v2345 = vmax.f32 %v2266, 0.0
        %v2346 = vmax.f32 %v2269, 0.0
        %v2347 = vmax.f32 %v2271, 0.0
        %v2348 = vmax.f32 %v2274, 0.0
        %v2349 = vmax.f32 %v2276, 0.0
        %v2350 = vmax.f32 %v2279, 0.0
        %v2351 = vmax.f32 %v2281, 0.0
        %v2352 = vmax.f32 %v2284, 0.0
        %v2353 = vmax.f32 %v2286, 0.0
        %v2354 = vpack.c.bf16 %v2150, %v2149
        %v2355 = vpack.c.bf16 %v2152, %v2151
        %v2356 = vld [vmem:[%s29] sm:$0xf]
        %v2357 = vld [vmem:[%s31] sm:$0x1]
        %v2359 = vperm.slane %v2357, 0
        %v2362 = vsel %vm1170, %v2354, 0
        %v2365 = vsel %vm1170, %v2355, 0
        %v2368 = vsel %vm1195, %v2356, 0
        %2370 = vmatpush.bf16.msra.mxu0 0
        %2371 = vmatpush.bf16.msra.mxu0 0
        %2372 = vmatpush.bf16.msra.mxu0 0
        %2373 = vmatpush.bf16.msra.mxu0 0
        %2374 = vmatpush.bf16.msra.mxu0 0
        %2375 = vmatpush.bf16.msra.mxu0 0
        %2376 = vmatpush.bf16.msra.mxu0 0
        %2377 = vmatpush.bf16.msra.mxu0 %v2368
        %2378 = vmatmul.bf16.gmra.mxu0 %v2362
        %v2379 = vpop.f32.mrf.mxu0
        %v2380 = vadd.f32 %v2359, %v2379
        %v2381 = vpop.f32.mrf.mxu0
        %v2382 = vadd.f32 %v2359, %v2381
        %2383 = vmatmul.bf16.gmra.mxu0 %v2365
        %v2384 = vpop.f32.mrf.mxu0
        %v2385 = vadd.f32 %v2359, %v2384
        %v2386 = vpop.f32.mrf.mxu0
        %v2387 = vadd.f32 %v2359, %v2386
        %2388 = vdwg.mxu0
        %v2389 = vmax.f32 %v2380, 0.0
        %v2390 = vmax.f32 %v2382, 0.0
        %v2391 = vmax.f32 %v2385, 0.0
        %v2392 = vmax.f32 %v2387, 0.0
        %v2393 = vpack.c.bf16 %v2101, %v2100
        %v2394 = vpack.c.bf16 %v2103, %v2102
        %v2395 = vld [vmem:[%s33] sm:$0xf]
        %v2396 = vld [vmem:[%s33 + $0x4] sm:$0xf]
        %v2397 = vld [vmem:[%s33 + $0x8] sm:$0xf]
        %v2398 = vld [vmem:[%s33 + $0xc] sm:$0xf]
        %v2399 = vpack.c.bf16 %v2390, %v2389
        %v2400 = vpack.c.bf16 %v2392, %v2391
        %v2401 = vld [vmem:[%s35] sm:$0xf]
        %v2402 = vld [vmem:[%s35 + $0x4] sm:$0xf]
        %v2405 = vunpack.c.l.b16 %v2401
        %v2406 = vunpack.c.l.b16 %v2402
        %v2407 = vpack.c.b16 %v2406, %v2405
        %v2410 = vsel %vm2030, %v2399, 0
        %v2413 = vsel %vm2030, %v2400, 0
        %2415 = vmatpush.bf16.msra.mxu0 0
        %2416 = vmatpush.bf16.msra.mxu0 0
        %2417 = vmatpush.bf16.msra.mxu0 0
        %2418 = vmatpush.bf16.msra.mxu0 0
        %2419 = vmatpush.bf16.msra.mxu0 0
        %2420 = vmatpush.bf16.msra.mxu0 0
        %2421 = vmatpush.bf16.msra.mxu0 0
        %2422 = vmatpush.bf16.msra.mxu0 %v2407
        %2423 = vmatmul.bf16.gmra.mxu0 %v2410
        %v2424 = vpop.f32.mrf.mxu0
        %v2425 = vadd.f32 0.0, %v2424
        %v2426 = vpop.f32.mrf.mxu0
        %2427 = vmatmul.bf16.gmra.mxu0 %v2413
        %v2428 = vpop.f32.mrf.mxu0
        %v2429 = vpop.f32.mrf.mxu0
        %2430 = vdwg.mxu0
        %v2435 = vunpack.c.l.b16 %v2395
        %v2436 = vunpack.c.l.b16 %v2396
        %v2437 = vunpack.c.l.b16 %v2397
        %v2438 = vunpack.c.l.b16 %v2398
        %v2439 = vpack.c.b16 %v2436, %v2435
        %v2440 = vpack.c.b16 %v2438, %v2437
        %vm2443 = vcmask 261120
        %v2445 = vsel %vm2443, %v2393, 0
        %v2448 = vsel %vm2443, %v2394, 0
        %2450 = vmatpush.bf16.msra.mxu0 0
        %2451 = vmatpush.bf16.msra.mxu0 0
        %2452 = vmatpush.bf16.msra.mxu0 0
        %2453 = vmatpush.bf16.msra.mxu0 0
        %2454 = vmatpush.bf16.msra.mxu0 0
        %2455 = vmatpush.bf16.msra.mxu0 0
        %2456 = vmatpush.bf16.msra.mxu0 %v2440
        %2457 = vmatpush.bf16.msra.mxu0 %v2439
        %2458 = vmatmul.bf16.gmra.mxu0 %v2445
        %v2459 = vpop.f32.mrf.mxu0
        %v2460 = vadd.f32 %v2425, %v2459
        %v2461 = vpop.f32.mrf.mxu0
        %2462 = vmatmul.bf16.gmra.mxu0 %v2448
        %v2463 = vpop.f32.mrf.mxu0
        %v2464 = vpop.f32.mrf.mxu0
        %2465 = vdwg.mxu0
        %v2466 = vld [vmem:[%s37] sm:$0x1]
        %v2468 = vperm.slane %v2466, 0
        %v2470 = vadd.f32 %v2460, %v2468
        %v2471 = vmax.f32 %v2470, 0.0
        %v2472 = vld [vmem:[%s39] sm:$0xf]
        %v2473 = vld [vmem:[%s41] sm:$0x1]
        %v2475 = vperm.slane %v2473, 0
        %v2478 = vsel %vm1195, %v2472, 0
        %2480 = vmatpush.bf16.msra.mxu0 0
        %2481 = vmatpush.bf16.msra.mxu0 0
        %2482 = vmatpush.bf16.msra.mxu0 0
        %2483 = vmatpush.bf16.msra.mxu0 0
        %2484 = vmatpush.bf16.msra.mxu0 0
        %2485 = vmatpush.bf16.msra.mxu0 0
        %2486 = vmatpush.bf16.msra.mxu0 0
        %2487 = vmatpush.bf16.msra.mxu0 %v2478
        %2488 = vmatmul.bf16.gmra.mxu0 %v2362
        %v2489 = vpop.f32.mrf.mxu0
        %v2490 = vadd.f32 %v2475, %v2489
        %v2491 = vpop.f32.mrf.mxu0
        %2492 = vmatmul.bf16.gmra.mxu0 %v2365
        %v2493 = vpop.f32.mrf.mxu0
        %v2494 = vpop.f32.mrf.mxu0
        %2495 = vdwg.mxu0
        %v2496 = vmax.f32 %v2490, 0.0
        %v2497 = vpack.c.bf16 %v2343, %v2342
        %v2498 = vpack.c.bf16 %v2345, %v2344
        %v2499 = vpack.c.bf16 %v2347, %v2346
        %v2500 = vpack.c.bf16 %v2349, %v2348
        %v2501 = vpack.c.bf16 %v2351, %v2350
        %v2502 = vpack.c.bf16 %v2353, %v2352
        %v2504 = vsel %vm1170, %v2497, 0
        %v2507 = vsel %vm1170, %v2498, 0
        %v2510 = vsel %vm1170, %v2499, 0
        %v2513 = vsel %vm1170, %v2500, 0
        %v2516 = vsel %vm1170, %v2501, 0
        %v2519 = vsel %vm1170, %v2502, 0
        %2521 = vmatpush.bf16.msra.mxu0 0
        %2522 = vmatpush.bf16.msra.mxu0 0
        %2523 = vmatpush.bf16.msra.mxu0 0
        %2524 = vmatpush.bf16.msra.mxu0 0
        %2525 = vmatpush.bf16.msra.mxu0 0
        %2526 = vmatpush.bf16.msra.mxu0 0
        %2527 = vmatpush.bf16.msra.mxu0 0
        %2528 = vmatpush.bf16.msra.mxu0 %v2478
        %2529 = vmatmul.bf16.gmra.mxu0 %v2504
        %v2530 = vpop.f32.mrf.mxu0
        %v2531 = vadd.f32 %v2475, %v2530
        %v2532 = vpop.f32.mrf.mxu0
        %v2533 = vadd.f32 %v2475, %v2532
        %2534 = vmatmul.bf16.gmra.mxu0 %v2507
        %v2535 = vpop.f32.mrf.mxu0
        %v2536 = vadd.f32 %v2475, %v2535
        %v2537 = vpop.f32.mrf.mxu0
        %2538 = vmatmul.bf16.gmra.mxu0 %v2510
        %v2539 = vpop.f32.mrf.mxu0
        %v2540 = vpop.f32.mrf.mxu0
        %2541 = vmatmul.bf16.gmra.mxu0 %v2513
        %v2542 = vpop.f32.mrf.mxu0
        %v2543 = vpop.f32.mrf.mxu0
        %2544 = vmatmul.bf16.gmra.mxu0 %v2516
        %v2545 = vpop.f32.mrf.mxu0
        %v2546 = vpop.f32.mrf.mxu0
        %2547 = vmatmul.bf16.gmra.mxu0 %v2519
        %v2548 = vpop.f32.mrf.mxu0
        %v2549 = vpop.f32.mrf.mxu0
        %2550 = vdwg.mxu0
        %v2551 = vmax.f32 %v2531, 0.0
        %v2552 = vmax.f32 %v2533, 0.0
        %v2553 = vmax.f32 %v2536, 0.0
        %v2554 = vpack.c.bf16 %v2496, %v2496
        %v2555 = vld [vmem:[%s43] sm:$0xf]
        %v2556 = vld [vmem:[%s43 + $0x4] sm:$0xf]
        %v2557 = vld [vmem:[%s45] sm:$0x1]
        %v2559 = vperm.slane %v2557, 0
        %v2563 = vunpack.c.l.b16 %v2555
        %v2564 = vunpack.c.l.b16 %v2556
        %v2565 = vpack.c.b16 %v2564, %v2563
        %v2568 = vsel %vm2030, %v2554, 0
        %2570 = vmatpush.bf16.msra.mxu0 0
        %2571 = vmatpush.bf16.msra.mxu0 0
        %2572 = vmatpush.bf16.msra.mxu0 0
        %2573 = vmatpush.bf16.msra.mxu0 0
        %2574 = vmatpush.bf16.msra.mxu0 0
        %2575 = vmatpush.bf16.msra.mxu0 0
        %2576 = vmatpush.bf16.msra.mxu0 0
        %2577 = vmatpush.bf16.msra.mxu0 %v2565
        %2578 = vmatmul.bf16.gmra.mxu0 %v2568
        %v2579 = vpop.f32.mrf.mxu0
        %v2580 = vadd.f32 %v2559, %v2579
        %v2581 = vpop.f32.mrf.mxu0
        %2582 = vdwg.mxu0
        %v2583 = vmax.f32 %v2580, 0.0
        %v2584 = vpack.c.bf16 %v2471, %v2471
        %v2585 = vld [vmem:[%s47] sm:$0xf]
        %v2586 = vld [vmem:[%s47 + $0x4] sm:$0xf]
        %v2587 = vld [vmem:[%s47 + $0x8] sm:$0xf]
        %v2588 = vld [vmem:[%s47 + $0xc] sm:$0xf]
        %v2589 = vld [vmem:[%s47 + $0x10] sm:$0xf]
        %v2590 = vld [vmem:[%s47 + $0x14] sm:$0xf]
        %v2591 = vld [vmem:[%s47 + $0x18] sm:$0xf]
        %v2592 = vld [vmem:[%s47 + $0x1c] sm:$0xf]
        %v2593 = vpack.c.bf16 %v2583, %v2583
        %v2594 = vld [vmem:[%s49] sm:$0xf]
        %v2595 = vld [vmem:[%s49 + $0x4] sm:$0xf]
        %v2596 = vld [vmem:[%s49 + $0x8] sm:$0xf]
        %v2597 = vld [vmem:[%s49 + $0xc] sm:$0xf]
        %v2602 = vunpack.c.l.b16 %v2594
        %v2603 = vunpack.c.l.b16 %v2595
        %v2604 = vunpack.c.l.b16 %v2596
        %v2605 = vunpack.c.l.b16 %v2597
        %v2606 = vpack.c.b16 %v2603, %v2602
        %v2607 = vpack.c.b16 %v2605, %v2604
        %v2611 = vsel %vm2443, %v2593, 0
        %2613 = vmatpush.bf16.msra.mxu0 0
        %2614 = vmatpush.bf16.msra.mxu0 0
        %2615 = vmatpush.bf16.msra.mxu0 0
        %2616 = vmatpush.bf16.msra.mxu0 0
        %2617 = vmatpush.bf16.msra.mxu0 0
        %2618 = vmatpush.bf16.msra.mxu0 0
        %2619 = vmatpush.bf16.msra.mxu0 %v2607
        %2620 = vmatpush.bf16.msra.mxu0 %v2606
        %2621 = vmatmul.bf16.gmra.mxu0 %v2611
        %v2622 = vpop.f32.mrf.mxu0
        %v2623 = vadd.f32 0.0, %v2622
        %v2624 = vpop.f32.mrf.mxu0
        %2625 = vdwg.mxu0
        %v2634 = vunpack.c.l.b16 %v2585
        %v2635 = vunpack.c.l.b16 %v2586
        %v2636 = vunpack.c.l.b16 %v2587
        %v2637 = vunpack.c.l.b16 %v2588
        %v2638 = vunpack.c.l.b16 %v2589
        %v2639 = vunpack.c.l.b16 %v2590
        %v2640 = vunpack.c.l.b16 %v2591
        %v2641 = vunpack.c.l.b16 %v2592
        %v2642 = vpack.c.b16 %v2635, %v2634
        %v2643 = vpack.c.b16 %v2637, %v2636
        %v2644 = vpack.c.b16 %v2639, %v2638
        %v2645 = vpack.c.b16 %v2641, %v2640
        %vm2650 = vcmask 523264
        %v2652 = vsel %vm2650, %v2584, 0
        %2654 = vmatpush.bf16.msra.mxu0 0
        %2655 = vmatpush.bf16.msra.mxu0 0
        %2656 = vmatpush.bf16.msra.mxu0 0
        %2657 = vmatpush.bf16.msra.mxu0 0
        %2658 = vmatpush.bf16.msra.mxu0 %v2645
        %2659 = vmatpush.bf16.msra.mxu0 %v2644
        %2660 = vmatpush.bf16.msra.mxu0 %v2643
        %2661 = vmatpush.bf16.msra.mxu0 %v2642
        %2662 = vmatmul.bf16.gmra.mxu0 %v2652
        %v2663 = vpop.f32.mrf.mxu0
        %v2664 = vadd.f32 %v2623, %v2663
        %v2665 = vpop.f32.mrf.mxu0
        %2666 = vdwg.mxu0
        %v2667 = vld [vmem:[%s51] sm:$0x1]
        %v2669 = vperm.slane %v2667, 0
        %v2671 = vadd.f32 %v2664, %v2669
        %v2672 = vmax.f32 %v2671, 0.0
        %v2673 = vld [vmem:[%s53] sm:$0xf]
        %v2674 = vld [vmem:[%s53 + $0x4] sm:$0xf]
        %v2675 = vld [vmem:[%s55] sm:$0x1]
        %v2677 = vperm.slane %v2675, 0
        %v2681 = vunpack.c.l.b16 %v2673
        %v2682 = vunpack.c.l.b16 %v2674
        %v2683 = vpack.c.b16 %v2682, %v2681
        %2685 = vmatpush.bf16.msra.mxu0 0
        %2686 = vmatpush.bf16.msra.mxu0 0
        %2687 = vmatpush.bf16.msra.mxu0 0
        %2688 = vmatpush.bf16.msra.mxu0 0
        %2689 = vmatpush.bf16.msra.mxu0 0
        %2690 = vmatpush.bf16.msra.mxu0 0
        %2691 = vmatpush.bf16.msra.mxu0 0
        %2692 = vmatpush.bf16.msra.mxu0 %v2683
        %2693 = vmatmul.bf16.gmra.mxu0 %v2568
        %v2694 = vpop.f32.mrf.mxu0
        %v2695 = vadd.f32 %v2677, %v2694
        %v2696 = vpop.f32.mrf.mxu0
        %2697 = vdwg.mxu0
        %v2698 = vmax.f32 %v2695, 0.0
        %v2699 = vpack.c.bf16 %v2552, %v2551
        %v2700 = vpack.c.bf16 %v2553, %v2553
        %v2702 = vsel %vm2030, %v2699, 0
        %v2705 = vsel %vm2030, %v2700, 0
        %2707 = vmatpush.bf16.msra.mxu0 0
        %2708 = vmatpush.bf16.msra.mxu0 0
        %2709 = vmatpush.bf16.msra.mxu0 0
        %2710 = vmatpush.bf16.msra.mxu0 0
        %2711 = vmatpush.bf16.msra.mxu0 0
        %2712 = vmatpush.bf16.msra.mxu0 0
        %2713 = vmatpush.bf16.msra.mxu0 0
        %2714 = vmatpush.bf16.msra.mxu0 %v2683
        %2715 = vmatmul.bf16.gmra.mxu0 %v2702
        %v2716 = vpop.f32.mrf.mxu0
        %v2717 = vadd.f32 %v2677, %v2716
        %v2718 = vpop.f32.mrf.mxu0
        %2719 = vmatmul.bf16.gmra.mxu0 %v2705
        %v2720 = vpop.f32.mrf.mxu0
        %v2721 = vpop.f32.mrf.mxu0
        %2722 = vdwg.mxu0
        %v2723 = vmax.f32 %v2717, 0.0
        %v2724 = vpack.c.bf16 %v2698, %v2698
        %v2725 = vld [vmem:[%s57] sm:$0xf]
        %v2726 = vld [vmem:[%s57 + $0x4] sm:$0xf]
        %v2727 = vld [vmem:[%s59] sm:$0x1]
        %v2729 = vperm.slane %v2727, 0
        %v2733 = vunpack.c.l.b16 %v2725
        %v2734 = vunpack.c.l.b16 %v2726
        %v2735 = vpack.c.b16 %v2734, %v2733
        %v2738 = vsel %vm2030, %v2724, 0
        %2740 = vmatpush.bf16.msra.mxu0 0
        %2741 = vmatpush.bf16.msra.mxu0 0
        %2742 = vmatpush.bf16.msra.mxu0 0
        %2743 = vmatpush.bf16.msra.mxu0 0
        %2744 = vmatpush.bf16.msra.mxu0 0
        %2745 = vmatpush.bf16.msra.mxu0 0
        %2746 = vmatpush.bf16.msra.mxu0 0
        %2747 = vmatpush.bf16.msra.mxu0 %v2735
        %2748 = vmatmul.bf16.gmra.mxu0 %v2738
        %v2749 = vpop.f32.mrf.mxu0
        %v2750 = vadd.f32 %v2729, %v2749
        %v2751 = vpop.f32.mrf.mxu0
        %2752 = vdwg.mxu0
        %v2753 = vmax.f32 %v2750, 0.0
        %v2754 = vpack.c.bf16 %v2672, %v2672
        %v2755 = vld [vmem:[%s61] sm:$0xf]
        %v2756 = vld [vmem:[%s61 + $0x4] sm:$0xf]
        %v2757 = vld [vmem:[%s61 + $0x8] sm:$0xf]
        %v2758 = vld [vmem:[%s61 + $0xc] sm:$0xf]
        %v2759 = vld [vmem:[%s61 + $0x10] sm:$0xf]
        %v2760 = vld [vmem:[%s61 + $0x14] sm:$0xf]
        %v2761 = vld [vmem:[%s61 + $0x18] sm:$0xf]
        %v2762 = vld [vmem:[%s61 + $0x1c] sm:$0xf]
        %v2763 = vpack.c.bf16 %v2753, %v2753
        %v2764 = vld [vmem:[%s63] sm:$0xf]
        %v2765 = vld [vmem:[%s63 + $0x4] sm:$0xf]
        %v2766 = vld [vmem:[%s63 + $0x8] sm:$0xf]
        %v2767 = vld [vmem:[%s63 + $0xc] sm:$0xf]
        %v2772 = vunpack.c.l.b16 %v2764
        %v2773 = vunpack.c.l.b16 %v2765
        %v2774 = vunpack.c.l.b16 %v2766
        %v2775 = vunpack.c.l.b16 %v2767
        %v2776 = vpack.c.b16 %v2773, %v2772
        %v2777 = vpack.c.b16 %v2775, %v2774
        %v2781 = vsel %vm2443, %v2763, 0
        %2783 = vmatpush.bf16.msra.mxu0 0
        %2784 = vmatpush.bf16.msra.mxu0 0
        %2785 = vmatpush.bf16.msra.mxu0 0
        %2786 = vmatpush.bf16.msra.mxu0 0
        %2787 = vmatpush.bf16.msra.mxu0 0
        %2788 = vmatpush.bf16.msra.mxu0 0
        %2789 = vmatpush.bf16.msra.mxu0 %v2777
        %2790 = vmatpush.bf16.msra.mxu0 %v2776
        %2791 = vmatmul.bf16.gmra.mxu0 %v2781
        %v2792 = vpop.f32.mrf.mxu0
        %v2793 = vadd.f32 0.0, %v2792
        %v2794 = vpop.f32.mrf.mxu0
        %2795 = vdwg.mxu0
        %v2804 = vunpack.c.l.b16 %v2755
        %v2805 = vunpack.c.l.b16 %v2756
        %v2806 = vunpack.c.l.b16 %v2757
        %v2807 = vunpack.c.l.b16 %v2758
        %v2808 = vunpack.c.l.b16 %v2759
        %v2809 = vunpack.c.l.b16 %v2760
        %v2810 = vunpack.c.l.b16 %v2761
        %v2811 = vunpack.c.l.b16 %v2762
        %v2812 = vpack.c.b16 %v2805, %v2804
        %v2813 = vpack.c.b16 %v2807, %v2806
        %v2814 = vpack.c.b16 %v2809, %v2808
        %v2815 = vpack.c.b16 %v2811, %v2810
        %v2821 = vsel %vm2650, %v2754, 0
        %2823 = vmatpush.bf16.msra.mxu0 0
        %2824 = vmatpush.bf16.msra.mxu0 0
        %2825 = vmatpush.bf16.msra.mxu0 0
        %2826 = vmatpush.bf16.msra.mxu0 0
        %2827 = vmatpush.bf16.msra.mxu0 %v2815
        %2828 = vmatpush.bf16.msra.mxu0 %v2814
        %2829 = vmatpush.bf16.msra.mxu0 %v2813
        %2830 = vmatpush.bf16.msra.mxu0 %v2812
        %2831 = vmatmul.bf16.gmra.mxu0 %v2821
        %v2832 = vpop.f32.mrf.mxu0
        %v2833 = vadd.f32 %v2793, %v2832
        %v2834 = vpop.f32.mrf.mxu0
        %2835 = vdwg.mxu0
        %v2836 = vld [vmem:[%s65] sm:$0x1]
        %v2838 = vperm.slane %v2836, 0
        %v2840 = vadd.f32 %v2833, %v2838
        %v2841 = vmax.f32 %v2840, 0.0
        %v2842 = vld [vmem:[%s67] sm:$0xf]
        %v2843 = vld [vmem:[%s67 + $0x4] sm:$0xf]
        %v2844 = vld [vmem:[%s69] sm:$0x1]
        %v2846 = vperm.slane %v2844, 0
        %v2850 = vunpack.c.l.b16 %v2842
        %v2851 = vunpack.c.l.b16 %v2843
        %v2852 = vpack.c.b16 %v2851, %v2850
        %2854 = vmatpush.bf16.msra.mxu0 0
        %2855 = vmatpush.bf16.msra.mxu0 0
        %2856 = vmatpush.bf16.msra.mxu0 0
        %2857 = vmatpush.bf16.msra.mxu0 0
        %2858 = vmatpush.bf16.msra.mxu0 0
        %2859 = vmatpush.bf16.msra.mxu0 0
        %2860 = vmatpush.bf16.msra.mxu0 0
        %2861 = vmatpush.bf16.msra.mxu0 %v2852
        %2862 = vmatmul.bf16.gmra.mxu0 %v2738
        %v2863 = vpop.f32.mrf.mxu0
        %v2864 = vadd.f32 %v2846, %v2863
        %v2865 = vpop.f32.mrf.mxu0
        %2866 = vdwg.mxu0
        %v2867 = vmax.f32 %v2864, 0.0
        %v2868 = vpack.c.bf16 %v2723, %v2723
        %v2870 = vsel %vm2030, %v2868, 0
        %2872 = vmatpush.bf16.msra.mxu0 0
        %2873 = vmatpush.bf16.msra.mxu0 0
        %2874 = vmatpush.bf16.msra.mxu0 0
        %2875 = vmatpush.bf16.msra.mxu0 0
        %2876 = vmatpush.bf16.msra.mxu0 0
        %2877 = vmatpush.bf16.msra.mxu0 0
        %2878 = vmatpush.bf16.msra.mxu0 0
        %2879 = vmatpush.bf16.msra.mxu0 %v2852
        %2880 = vmatmul.bf16.gmra.mxu0 %v2870
        %v2881 = vpop.f32.mrf.mxu0
        %v2882 = vadd.f32 %v2846, %v2881
        %v2883 = vpop.f32.mrf.mxu0
        %2884 = vdwg.mxu0
        %v2885 = vmax.f32 %v2882, 0.0
        %vm2886 = vcmask 517120
        %v2887 = vsel %vm2886, %v2841, 0.0
        %v2888 = vrot.slane %v2887, 4
        %v2889 = vadd.f32 %v2887, %v2888
        %v2890 = vrot.slane %v2889, 2
        %v2891 = vadd.f32 %v2889, %v2890
        %v2892 = vrot.slane %v2891, 1
        %v2893 = vadd.f32 %v2891, %v2892
        %v2894 = vmul.f32 %v2893, 0.5
        %vm2895 = vcmask 123904
        %v2896 = vsel %vm2895, %v2867, 0.0
        %v2897 = vrot.slane %v2896, 4
        %v2898 = vadd.f32 %v2896, %v2897
        %v2899 = vrot.slane %v2898, 2
        %v2900 = vadd.f32 %v2898, %v2899
        %v2901 = vrot.slane %v2900, 1
        %v2902 = vadd.f32 %v2900, %v2901
        %vm2903 = vcmask 128000
        %v2904 = vsel %vm2903, %v2885, 0.0
        %v2905 = vrot.slane %v2904, 4
        %v2906 = vadd.f32 %v2904, %v2905
        %v2907 = vrot.slane %v2906, 2
        %v2908 = vadd.f32 %v2906, %v2907
        %v2909 = vrot.slane %v2908, 1
        %v2910 = vadd.f32 %v2908, %v2909
        %v2911 = vadd.f32 %v2902, %v2910
        %v2912 = vmul.f32 %v2911, 0.125
        %vm2913 = vcmask 516096
        %2914 = vst.msk [vmem:[%s1092] sm:$0x1] %vm2913, %v2894
        %2916 = vrot.lane.b32.xlu0 %v2912, 64
        %v2917 = vpop.permute.xlu0 %2916
        %vm2919 = vcmask 647680
        %2920 = vst.msk [vmem:[%s1092] sm:$0x1] %vm2919, %v2917
        %s2921 = sand.u32 %s843, 1
        %s2922 = scalar_lea.sflag [#allocation3], %s2921
        %s2923 = sand.u32 %s843, 1
        %s2924 = scalar_lea.vmem [#allocation2], %s2923
        // Predicated region
        $region161: #{slowfast_forward.1} parent=159 // pred_check
          %p2925 = pneg %p853
        $region162: #{slowfast_forward.1} parent=159 // pred_check_branch
          %2927 = sbr.rel (%p2925) target = $region164
        $region163: #{slowfast_forward.1} parent=159 // pred_region
          %2929 = vsyncadd %s2922, 0
          %s2930 = scalar_lea.hbm %s71, %s85
          %s2932 = sshll.u32 %s2924, 4
          %s2933 = int_to_ptr.vmem [resolvable:$true] %s2932
          %s2934 = sshll.u32 %s2930, 4
          %s2935 = int_to_ptr.hbm [resolvable:$true] %s2934
          %2937 = dma.vmem_to_hbm [thread:$0]  %s2933, 16, %s2935, %s2922
        $region164: #{slowfast_forward.1} parent=159 // pred_fallthru
          _
      $region160: #{slowfast_forward.1} parent=5 // pred_fallthru
        _
      %p2938 = scmp.le.s32.totalorder 2, %s80
      // Predicated region
      $region165: #{slowfast_forward.1} parent=5 // pred_check
        %p2939 = pneg %p2938
      $region166: #{slowfast_forward.1} parent=5 // pred_check_branch
        %2941 = sbr.rel (%p2939) target = $region168
      $region167: #{slowfast_forward.1} parent=5 // pred_region
        %s2942 = ssub.s32 %s80, 2
        // Predicated region
        $region169: #{slowfast_forward.1} parent=167 // pred_check
          %p2943 = pneg %p859
        $region170: #{slowfast_forward.1} parent=167 // pred_check_branch
          %2945 = sbr.rel (%p2943) target = $region172
        $region171: #{slowfast_forward.1} parent=167 // pred_region
          %s2946 = sand.u32 %s844, 1
          %s2947 = scalar_lea.sflag [#allocation3], %s2946
          %s2948 = sand.u32 %s844, 1
          %s2949 = scalar_lea.vmem [#allocation2], %s2948
          %2951 = dma.done %s2947, 16
        $region172: #{slowfast_forward.1} parent=167 // pred_fallthru
          _
      $region168: #{slowfast_forward.1} parent=5 // pred_fallthru
        _
    $region6: #{slowfast_forward.1} parent=1 // loop_footer
      %s84 = sadd.s32 1, %s80
    $region7: #{slowfast_forward.1} parent=1 // loop_footer_branch
      %79 = sbr.rel target = $region3
    $region8: #{slowfast_forward.1} parent=1 // loop_exit
      _
    %2952 = vsyncpa [#allocation3], 1
    %s2953 = scalar_lea.sflag [#allocation3], 1
    %2954 = vsyncpa %s2953, 1

</llo_original>
